<compile_context>
chip_gen: v7x
topology: tpu7x:2x2x1
jax: 0.10.0
libtpu: 0.0.40
codegen_flags: <defaults>
</compile_context>

<pallas_src>
import jax
import jax.numpy as jnp
import numpy as np
from jax import lax
from jax.experimental import pallas as pl
from jax.experimental.pallas import tpu as pltpu

# Keep the pure-JAX reference and the in-kernel MXU dots at full f32 precision.
jax.config.update("jax_default_matmul_precision", "highest")

# ---- synthetic hyperparameters (small, consistent with the module) ----
N_VOCAB = 100
EMBED = 32
NUM_CLASSES = 4
NUM_FILTERS = 16
FILTER_SIZES = (2, 3, 4)
HIDDEN = NUM_FILTERS * len(FILTER_SIZES)   # 48
BATCH = 2
SEQ = 16

KMAX = max(FILTER_SIZES)                   # 4
L_MAX = SEQ - min(FILTER_SIZES) + 1        # 15 conv positions per example
L_PAD = 16                                 # padded to a sublane multiple
VOCAB_PAD = 128                            # vocab rows padded to one lane tile
LANES = 128                                # uniform lane width for all operands
KV = KMAX * VOCAB_PAD                      # 512: stacked one-hot width

# Row offsets inside the packed constant slab (all multi-row slices 8-aligned).
R_CW = 0                                   # (KV, 128)  conv weights, embedding folded in
R_BC = R_CW + KV                           # (1, 128)   conv bias
R_MASK = 520                               # (L_PAD,128) masked mean-pooling weights
R_FC1W = R_MASK + L_PAD                    # (128, 128) = 536
R_FC1B = R_FC1W + LANES                    # (1, 128)   = 664
R_FC2W = 672                               # (128, 128)
R_FC2B = R_FC2W + LANES                    # (1, 128)   = 800
CONST_ROWS = 808                           # 801 used rows, padded to a multiple of 8


def textcnn_kernel(lab_ref,                # SMEM (BATCH,) int32 labels (scalar prefetch)
                   gid_ref,                # (1, L_PAD, KV) int32 shifted-token comparand
                   const_ref,              # (CONST_ROWS, 128) f32 packed constants
                   out_ref):               # (1, 1, 128) f32 logits + NLL slab row
    """One grid step = one example.  All heavy ops are MXU matmuls."""
    f32 = jnp.float32
    e = pl.program_id(0)

    # 1) Stacked shifted one-hot (L_PAD, KMAX*VOCAB_PAD): gid already holds
    #    ids[t + j] + j*VOCAB_PAD broadcast across each 128-lane block.
    lane = lax.broadcasted_iota(jnp.int32, (L_PAD, KV), 1)
    onehot = (gid_ref[0] == lane).astype(f32)                          # (16, 512)

    # 2) Embedding lookup + all three conv widths fused into ONE matmul
    #    (embedding table pre-multiplied into the conv weights), bias + ReLU.
    conv = jnp.dot(onehot, const_ref[R_CW:R_CW + KV, :],
                   preferred_element_type=f32)
    conv = jnp.maximum(conv + const_ref[R_BC:R_BC + 1, :], 0.0)       # (16, 128)

    # 3) Masked mean pooling with a precomputed static weight matrix.
    pooled = jnp.sum(conv * const_ref[R_MASK:R_MASK + L_PAD, :],
                     axis=0, keepdims=True)                           # (1, 128)

    # 4) fc1 -> ReLU -> fc2 (padded to 128x128 so K is exactly one MXU tile).
    # TODO(synk): dropout (p=0.2) modeled as identity (inference mode).
    h1 = jnp.maximum(
        jnp.dot(pooled, const_ref[R_FC1W:R_FC1W + LANES, :],
                preferred_element_type=f32)
        + const_ref[R_FC1B:R_FC1B + 1, :], 0.0)                       # (1, 128)
    logits = (jnp.dot(h1, const_ref[R_FC2W:R_FC2W + LANES, :],
                      preferred_element_type=f32)
              + const_ref[R_FC2B:R_FC2B + 1, :])                      # (1, 128)

    # 5) Per-example cross-entropy (log-sum-exp over the real classes only).
    cls = lax.broadcasted_iota(jnp.int32, (1, LANES), 1)
    lm = jnp.where(cls < NUM_CLASSES, logits, -1e30)
    m = jnp.max(lm, axis=1, keepdims=True)
    lse = m + jnp.log(jnp.sum(jnp.exp(lm - m), axis=1, keepdims=True))
    picked = jnp.sum(jnp.where(cls == lab_ref[e], logits, 0.0),
                     axis=1, keepdims=True)
    nll = lse - picked                                                # (1, 1)

    # 6) Single lane-dense store: logits in cols [0, C), this example's NLL at C.
    out_ref[0] = jnp.where(cls == NUM_CLASSES,
                           jnp.broadcast_to(nll, (1, LANES)), logits)


def _pooling_mask():
    """(L_PAD, 128) static masked-mean weights: 1/(S-k+1) on valid positions."""
    mask = np.zeros((L_PAD, LANES), np.float32)
    for gi, k in enumerate(FILTER_SIZES):
        valid = SEQ - k + 1
        mask[:valid, gi * NUM_FILTERS:(gi + 1) * NUM_FILTERS] = 1.0 / valid
    return jnp.asarray(mask)


def _pack_const_slab(params):
    """Pack all weights (embedding folded into the conv weights) plus the static
    pooling mask into ONE lane-dense (CONST_ROWS, 128) f32 slab (one DMA)."""
    f32 = jnp.float32
    table = jnp.zeros((VOCAB_PAD, EMBED), f32).at[:N_VOCAB].set(params["embedding"])
    slab = jnp.zeros((CONST_ROWS, LANES), f32)
    for gi, ((w, b), k) in enumerate(zip(params["convs"], FILTER_SIZES)):
        c0 = gi * NUM_FILTERS
        for j in range(k):                       # fold embedding table into conv weights
            slab = slab.at[R_CW + j * VOCAB_PAD:R_CW + (j + 1) * VOCAB_PAD,
                           c0:c0 + NUM_FILTERS].set(table @ w[j])
        slab = slab.at[R_BC, c0:c0 + NUM_FILTERS].set(b[0])
    slab = slab.at[R_MASK:R_MASK + L_PAD, :].set(_pooling_mask())
    slab = slab.at[R_FC1W:R_FC1W + HIDDEN, :HIDDEN].set(params["fc1_w"])
    slab = slab.at[R_FC1B, :HIDDEN].set(params["fc1_b"][0])
    slab = slab.at[R_FC2W:R_FC2W + HIDDEN, :NUM_CLASSES].set(params["fc2_w"])
    slab = slab.at[R_FC2B, :NUM_CLASSES].set(params["fc2_b"][0])
    return slab


# Static (L_PAD, KMAX) window index: conv position t, shift j -> token index t + j.
_WINDOW_IDX = np.arange(L_PAD)[:, None] + np.arange(KMAX)[None, :]      # max 18
_SEQ_PAD = L_PAD + KMAX - 1                                             # 19
_BLOCK_OFF = (np.arange(KMAX, dtype=np.int32) * VOCAB_PAD)[None, None, :]


def _pack_gid_slab(input_ids):
    """(B, L_PAD, KV) int32 comparand: ids[t+j] + j*128, broadcast over each
    128-lane block; out-of-range window slots use padding token 0 (they only feed
    conv rows that the pooling mask zeroes out)."""
    ids = input_ids.astype(jnp.int32)
    ids_pad = jnp.pad(ids, ((0, 0), (0, _SEQ_PAD - SEQ)))               # pad with token 0
    shifted = ids_pad[:, _WINDOW_IDX]                                   # (B, L_PAD, KMAX)
    gid = shifted + jnp.asarray(_BLOCK_OFF)                             # + j*VOCAB_PAD
    return jnp.repeat(gid, VOCAB_PAD, axis=2)                           # (B, L_PAD, 512)


@jax.jit
def cnn_forward(input_ids, attention_mask, token_type_ids, labels, lengths, params):
    # attention_mask / token_type_ids / lengths are unused by the reference forward.
    del attention_mask, token_type_ids, lengths
    gid_slab = _pack_gid_slab(input_ids)
    const_slab = _pack_const_slab(params)
    labels_i32 = labels.astype(jnp.int32).reshape(BATCH)

    out = pl.pallas_call(
        textcnn_kernel,
        out_shape=jax.ShapeDtypeStruct((BATCH, 1, LANES), jnp.float32),
        grid_spec=pltpu.PrefetchScalarGridSpec(
            num_scalar_prefetch=1,
            grid=(BATCH,),
            in_specs=[
                pl.BlockSpec((1, L_PAD, KV), lambda e, lab: (e, 0, 0)),
                pl.BlockSpec((CONST_ROWS, LANES), lambda e, lab: (0, 0)),
            ],
            out_specs=pl.BlockSpec((1, 1, LANES), lambda e, lab: (e, 0, 0)),
        ),
        compiler_params=pltpu.CompilerParams(
            dimension_semantics=("parallel",)),
    )(labels_i32, gid_slab, const_slab)

    logits = out[:, 0, :NUM_CLASSES]
    loss = jnp.mean(out[:, 0, NUM_CLASSES])
    return loss, logits


def init_params(key):
    ks = jax.random.split(key, 9)
    emb_table = 0.1 * jax.random.normal(ks[0], (N_VOCAB, EMBED), jnp.float32)
    emb_table = emb_table.at[0].set(0.0)                     # padding_idx=0
    convs = []
    for j, k in enumerate(FILTER_SIZES):
        w = 0.1 * jax.random.normal(ks[1 + j], (k, EMBED, NUM_FILTERS), jnp.float32)
        bias = 0.05 * jax.random.normal(ks[4 + j], (1, NUM_FILTERS), jnp.float32)
        convs.append((w, bias))
    return {
        "embedding": emb_table,
        "convs": convs,
        "fc1_w": 0.1 * jax.random.normal(ks[7], (HIDDEN, HIDDEN), jnp.float32),
        "fc1_b": jnp.zeros((1, HIDDEN), jnp.float32),
        "fc2_w": 0.1 * jax.random.normal(ks[8], (HIDDEN, NUM_CLASSES), jnp.float32),
        "fc2_b": jnp.zeros((1, NUM_CLASSES), jnp.float32),
    }


def reference_forward(input_ids, labels, params):
    """Pure-JAX reference for correctness checking."""
    emb = jnp.take(params["embedding"], input_ids, axis=0)
    feats = []
    for (w, bias), k in zip(params["convs"], FILTER_SIZES):
        L = SEQ - k + 1
        acc = jnp.zeros((BATCH, L, NUM_FILTERS), jnp.float32)
        for i in range(k):
            acc = acc + jnp.einsum("ble,ef->blf", emb[:, i:i + L, :], w[i])
        acc = jax.nn.relu(acc + bias)
        feats.append(acc.mean(axis=1))
    h = jnp.concatenate(feats, axis=1)
    h1 = jax.nn.relu(h @ params["fc1_w"] + params["fc1_b"])
    logits = h1 @ params["fc2_w"] + params["fc2_b"]
    lse = jax.scipy.special.logsumexp(logits, axis=1)
    picked = jnp.take_along_axis(logits, labels[:, None], axis=1)[:, 0]
    return jnp.mean(lse - picked), logits


if __name__ == "__main__":
    key = jax.random.PRNGKey(0)
    k_ids, k_lab, k_par = jax.random.split(key, 3)
    input_ids = jax.random.randint(k_ids, (BATCH, SEQ), 0, N_VOCAB, dtype=jnp.int32)
    labels = jax.random.randint(k_lab, (BATCH,), 0, NUM_CLASSES, dtype=jnp.int32)
    params = init_params(k_par)

    loss, logits = cnn_forward(input_ids, None, None, labels, None, params)
    jax.block_until_ready((loss, logits))

    ref_loss, ref_logits = reference_forward(input_ids, labels, params)
    np.testing.assert_allclose(np.asarray(logits), np.asarray(ref_logits),
                               rtol=2e-3, atol=2e-3)
    np.testing.assert_allclose(float(loss), float(ref_loss), rtol=2e-3, atol=2e-3)

    print("KERNEL_OK")
</pallas_src>

<mosaic_0001>
module attributes {stable_mosaic.version = 11 : i64} {
  func.func @textcnn_kernel(%arg0: i32, %arg1: memref<2xi32, #tpu.memory_space<smem>>, %arg2: memref<1x16x512xi32, #tpu.memory_space<vmem>>, %arg3: memref<808x128xf32, #tpu.memory_space<vmem>>, %arg4: memref<1x1x128xf32, #tpu.memory_space<vmem>>) attributes {dimension_semantics = [#tpu.dimension_semantics<parallel>], iteration_bounds = array<i64: 2>, scalar_prefetch = 1 : i64, scratch_operands = 0 : i64, tpu.core_type = #tpu.core_type<tc>, window_params = [{transform_indices = @transform_0, window_bounds = array<i64: 1, 16, 512>}, {pipeline_mode = #tpu.pipeline_mode<synchronous>, transform_indices = @transform_1, window_bounds = array<i64: 808, 128>}, {transform_indices = @transform_2, window_bounds = array<i64: 1, 1, 128>}]} {
    %0 = tpu.iota {dimensions = array<i32: 1>} : vector<16x512xi32>
    %c0 = arith.constant 0 : index
    %c0_0 = arith.constant 0 : index
    %c0_1 = arith.constant 0 : index
    %1 = vector.load %arg2[%c0, %c0_0, %c0_1] : memref<1x16x512xi32, #tpu.memory_space<vmem>>, vector<1x16x512xi32>
    %2 = vector.shape_cast %1 : vector<1x16x512xi32> to vector<16x512xi32>
    %3 = arith.cmpi eq, %2, %0 : vector<16x512xi32>
    %4 = arith.extui %3 : vector<16x512xi1> to vector<16x512xi32>
    %5 = arith.sitofp %4 : vector<16x512xi32> to vector<16x512xf32>
    %c0_2 = arith.constant 0 : index
    %c0_3 = arith.constant 0 : index
    %6 = vector.load %arg3[%c0_2, %c0_3] : memref<808x128xf32, #tpu.memory_space<vmem>>, vector<512x128xf32>
    %cst = arith.constant dense<0.000000e+00> : vector<16x128xf32>
    %7 = tpu.matmul %5, %6, %cst {dimension_numbers = #tpu.dot_dimension_numbers<[1], [0], [0], [1], [0, 0, 1, 1], [], []>, precision = #tpu.contract_precision<fp32>} : vector<16x512xf32>, vector<512x128xf32>, vector<16x128xf32> -> vector<16x128xf32>
    %c512 = arith.constant 512 : index
    %c0_4 = arith.constant 0 : index
    %8 = vector.load %arg3[%c512, %c0_4] : memref<808x128xf32, #tpu.memory_space<vmem>>, vector<1x128xf32>
    %9 = vector.broadcast %8 : vector<1x128xf32> to vector<16x128xf32>
    %10 = arith.addf %7, %9 : vector<16x128xf32>
    %cst_5 = arith.constant 0.000000e+00 : f32
    %11 = vector.broadcast %cst_5 : f32 to vector<16x128xf32>
    %12 = arith.maximumf %10, %11 : vector<16x128xf32>
    %c520 = arith.constant 520 : index
    %c0_6 = arith.constant 0 : index
    %13 = vector.load %arg3[%c520, %c0_6] : memref<808x128xf32, #tpu.memory_space<vmem>>, vector<16x128xf32>
    %14 = arith.mulf %12, %13 : vector<16x128xf32>
    %cst_7 = arith.constant dense<0.000000e+00> : vector<128xf32>
    %15 = vector.multi_reduction <add>, %14, %cst_7 [0] : vector<16x128xf32> to vector<128xf32>
    %16 = vector.shape_cast %15 : vector<128xf32> to vector<1x128xf32>
    %c536 = arith.constant 536 : index
    %c0_8 = arith.constant 0 : index
    %17 = vector.load %arg3[%c536, %c0_8] : memref<808x128xf32, #tpu.memory_space<vmem>>, vector<128x128xf32>
    %cst_9 = arith.constant dense<0.000000e+00> : vector<1x128xf32>
    %18 = tpu.matmul %16, %17, %cst_9 {dimension_numbers = #tpu.dot_dimension_numbers<[1], [0], [0], [1], [0, 0, 1, 1], [], []>, precision = #tpu.contract_precision<fp32>} : vector<1x128xf32>, vector<128x128xf32>, vector<1x128xf32> -> vector<1x128xf32>
    %c664 = arith.constant 664 : index
    %c0_10 = arith.constant 0 : index
    %19 = vector.load %arg3[%c664, %c0_10] : memref<808x128xf32, #tpu.memory_space<vmem>>, vector<1x128xf32>
    %20 = arith.addf %18, %19 : vector<1x128xf32>
    %cst_11 = arith.constant 0.000000e+00 : f32
    %21 = vector.broadcast %cst_11 : f32 to vector<1x128xf32>
    %22 = arith.maximumf %20, %21 : vector<1x128xf32>
    %c672 = arith.constant 672 : index
    %c0_12 = arith.constant 0 : index
    %23 = vector.load %arg3[%c672, %c0_12] : memref<808x128xf32, #tpu.memory_space<vmem>>, vector<128x128xf32>
    %cst_13 = arith.constant dense<0.000000e+00> : vector<1x128xf32>
    %24 = tpu.matmul %22, %23, %cst_13 {dimension_numbers = #tpu.dot_dimension_numbers<[1], [0], [0], [1], [0, 0, 1, 1], [], []>, precision = #tpu.contract_precision<fp32>} : vector<1x128xf32>, vector<128x128xf32>, vector<1x128xf32> -> vector<1x128xf32>
    %c800 = arith.constant 800 : index
    %c0_14 = arith.constant 0 : index
    %25 = vector.load %arg3[%c800, %c0_14] : memref<808x128xf32, #tpu.memory_space<vmem>>, vector<1x128xf32>
    %26 = arith.addf %24, %25 : vector<1x128xf32>
    %27 = tpu.iota {dimensions = array<i32: 1>} : vector<1x128xi32>
    %c4_i32 = arith.constant 4 : i32
    %28 = vector.broadcast %c4_i32 : i32 to vector<1x128xi32>
    %29 = arith.cmpi slt, %27, %28 : vector<1x128xi32>
    %cst_15 = arith.constant -1.000000e+30 : f32
    %30 = vector.broadcast %cst_15 : f32 to vector<1x128xf32>
    %31 = arith.select %29, %26, %30 : vector<1x128xi1>, vector<1x128xf32>
    %cst_16 = arith.constant dense<0xFF800000> : vector<1xf32>
    %32 = vector.multi_reduction <maximumf>, %31, %cst_16 [1] : vector<1x128xf32> to vector<1xf32>
    %33 = vector.shape_cast %32 : vector<1xf32> to vector<1x1xf32>
    %34 = vector.broadcast %33 : vector<1x1xf32> to vector<1x128xf32>
    %35 = arith.subf %31, %34 : vector<1x128xf32>
    %36 = math.exp %35 : vector<1x128xf32>
    %cst_17 = arith.constant dense<0.000000e+00> : vector<1xf32>
    %37 = vector.multi_reduction <add>, %36, %cst_17 [1] : vector<1x128xf32> to vector<1xf32>
    %38 = vector.shape_cast %37 : vector<1xf32> to vector<1x1xf32>
    %39 = math.log %38 : vector<1x1xf32>
    %40 = arith.addf %33, %39 : vector<1x1xf32>
    %41 = arith.index_cast %arg0 : i32 to index
    %42 = memref.load %arg1[%41] : memref<2xi32, #tpu.memory_space<smem>>
    %43 = vector.broadcast %42 : i32 to vector<1x128xi32>
    %44 = arith.cmpi eq, %27, %43 : vector<1x128xi32>
    %cst_18 = arith.constant 0.000000e+00 : f32
    %45 = vector.broadcast %cst_18 : f32 to vector<1x128xf32>
    %46 = arith.select %44, %26, %45 : vector<1x128xi1>, vector<1x128xf32>
    %cst_19 = arith.constant dense<0.000000e+00> : vector<1xf32>
    %47 = vector.multi_reduction <add>, %46, %cst_19 [1] : vector<1x128xf32> to vector<1xf32>
    %48 = vector.shape_cast %47 : vector<1xf32> to vector<1x1xf32>
    %49 = arith.subf %40, %48 : vector<1x1xf32>
    %c4_i32_20 = arith.constant 4 : i32
    %50 = vector.broadcast %c4_i32_20 : i32 to vector<1x128xi32>
    %51 = arith.cmpi eq, %27, %50 : vector<1x128xi32>
    %52 = vector.shape_cast %49 : vector<1x1xf32> to vector<1x1xf32>
    %53 = vector.broadcast %52 : vector<1x1xf32> to vector<1x128xf32>
    %54 = arith.select %51, %53, %26 : vector<1x128xi1>, vector<1x128xf32>
    %c0_21 = arith.constant 0 : index
    %c0_22 = arith.constant 0 : index
    %c0_23 = arith.constant 0 : index
    %55 = vector.load %arg4[%c0_21, %c0_22, %c0_23] : memref<1x1x128xf32, #tpu.memory_space<vmem>>, vector<1x1x128xf32>
    %56 = vector.shape_cast %55 : vector<1x1x128xf32> to vector<1x128xf32>
    %57 = vector.shape_cast %54 : vector<1x128xf32> to vector<1x1x128xf32>
    tpu.vector_store %arg4[%c0_21, %c0_22, %c0_23], %57 {strides = array<i32>} : memref<1x1x128xf32, #tpu.memory_space<vmem>>, vector<1x1x128xf32>,
    return
  }
  func.func @transform_0(%arg0: i32, %arg1: memref<2xi32, #tpu.memory_space<smem>>) -> (i32, i32, i32) {
    %c0_i32 = arith.constant 0 : i32
    %c0_i32_0 = arith.constant 0 : i32
    %c0_i32_1 = arith.constant 0 : i32
    return %arg0, %c0_i32, %c0_i32_0 : i32, i32, i32
  }
  func.func @transform_1(%arg0: i32, %arg1: memref<2xi32, #tpu.memory_space<smem>>) -> (i32, i32) {
    %c0_i32 = arith.constant 0 : i32
    %c0_i32_0 = arith.constant 0 : i32
    %c0_i32_1 = arith.constant 0 : i32
    return %c0_i32, %c0_i32_0 : i32, i32
  }
  func.func @transform_2(%arg0: i32, %arg1: memref<2xi32, #tpu.memory_space<smem>>) -> (i32, i32, i32) {
    %c0_i32 = arith.constant 0 : i32
    %c0_i32_0 = arith.constant 0 : i32
    %c0_i32_1 = arith.constant 0 : i32
    return %arg0, %c0_i32, %c0_i32_0 : i32, i32, i32
  }
}

</mosaic_0001>

<llo_original>
// kernel: cnn_forward.1
$region0: #{cnn_forward.1}
  #allocation0 [shape = 'u32[]', space=smem, size = 0x4, offset = 0x4, fixed_abs, tag = 'smem constant byte address 0x4 - core index']
  #allocation1 [shape = 'u32[144,128]{1,0:T(1,128)}', space=vmem, size = 0x12000, scoped, tag = 'internal scratch']
  #allocation2 [shape = 's32[1]{0}', space=sflag, size = 0x4, scoped, tag = 'scoped memory for cnn_forward.1']
  #allocation3 [shape = 'u8[512]{0}', space=smem, size = 0x200, scoped, tag = 'prefetched SMEM operand 0']
  %s0 = inlined_call_operand.vmem [shape: s32[2], index: 0, kind: input, shape index: {}]
  %s1 = inlined_call_operand.vmem [shape: s32[2,16,512], index: 1, kind: input, shape index: {}]
  %s2 = inlined_call_operand.vmem [shape: f32[808,128], index: 2, kind: input, shape index: {}]
  %s3 = inlined_call_operand.vmem [shape: f32[2,1,128], index: 3, kind: output, shape index: {}]
  %s4 = sld [smem:[#allocation0]]
  $region41: #{cnn_forward.1} parent=0
    _
  %s6 = ssub.s32 1, %s4
  %s7 = scalar_select 0, %s6, %s4
  %s8 = sshll.u32 %s0, 4
  %s9 = int_to_ptr.vmem [resolvable:$true] %s8
  %11 = dma.vmem_to_smem %s9, 16, [#allocation3], [#allocation2]
  %12 = dma.done [#allocation2], 16
  %13 = sfence
  loop: start=0, step=1, limit=4
  $region2: #{cnn_forward.1} parent=0 // loop_pre_header
    _
  $region3: #{cnn_forward.1} parent=0 // loop_header
    %s15 = sphi 0, %s19
    %p16 = scmp.ge.s32.totalorder %s15, 4
    %s25 = sphi 0, %s27
    %s28 = sphi 0, %s25
    %s29 = sphi 0, %s28
    %s45 = sphi 0, %s29
    %s49 = sphi 0, %s49
    %s51 = sphi 0, %s49
    %s52 = sphi 0, %s51
    %s66 = sphi 0, %s52
    %s72 = sphi 0, %s74
    %s75 = sphi 0, %s72
    %s76 = sphi 0, %s75
    %s92 = sphi 0, %s76
  $region4: #{cnn_forward.1} parent=0 // loop_header_branch
    %18 = sbr.rel (%p16) target = $region8
  $region5: #{cnn_forward.1} parent=0 // loop_body
    %s20 = ssub.s32 %s15, 1
    %s21 = ssub.s32 %s15, 2
    %s22 = sadd.s32 %s15, 1
    %s23 = ssub.s32 %s15, %s22
    %p24 = scmp.eq.s32.totalorder %s23, 0
    %s26 = sadd.s32 %s25, 1
    %s27 = scalar_select %p24, %s25, %s26
    %p30 = pneg %p24
    %p31 = scmp.eq.s32.totalorder %s15, 1
    %p32 = por %p30, %p31
    %p33 = scmp.ne.s32.totalorder %s25, %s28
    %p34 = scmp.eq.s32.totalorder %s15, 0
    %p35 = por %p33, %p34
    %p36 = scmp.ne.s32.totalorder %s25, %s28
    %p37 = scmp.eq.s32.totalorder %s20, 1
    %p38 = por %p36, %p37
    %p39 = scmp.ne.s32.totalorder %s28, %s29
    %p40 = scmp.eq.s32.totalorder %s20, 0
    %p41 = por %p39, %p40
    %p42 = scmp.ne.s32.totalorder %s28, %s29
    %p43 = scmp.eq.s32.totalorder %s21, 1
    %p44 = por %p42, %p43
    %p46 = scmp.ne.s32.totalorder %s29, %s45
    %p47 = scmp.eq.s32.totalorder %s21, 0
    %p48 = por %p46, %p47
    %s50 = sadd.s32 %s49, 1
    %p53 = scmp.eq.s32.totalorder %s15, 1
    %p54 = scmp.ne.s32.totalorder %s49, %s51
    %p55 = scmp.eq.s32.totalorder %s15, 0
    %p56 = por %p54, %p55
    %p57 = scmp.ne.s32.totalorder %s49, %s51
    %p58 = scmp.eq.s32.totalorder %s20, 1
    %p59 = por %p57, %p58
    %p60 = scmp.ne.s32.totalorder %s51, %s52
    %p61 = scmp.eq.s32.totalorder %s20, 0
    %p62 = por %p60, %p61
    %p63 = scmp.ne.s32.totalorder %s51, %s52
    %p64 = scmp.eq.s32.totalorder %s21, 1
    %p65 = por %p63, %p64
    %p67 = scmp.ne.s32.totalorder %s52, %s66
    %p68 = scmp.eq.s32.totalorder %s21, 0
    %p69 = por %p67, %p68
    %s70 = ssub.s32 %s15, %s22
    %p71 = scmp.eq.s32.totalorder %s70, 0
    %s73 = sadd.s32 %s72, 1
    %s74 = scalar_select %p71, %s72, %s73
    %p77 = pneg %p71
    %p78 = scmp.eq.s32.totalorder %s15, 1
    %p79 = por %p77, %p78
    %p80 = scmp.ne.s32.totalorder %s72, %s75
    %p81 = scmp.eq.s32.totalorder %s15, 0
    %p82 = por %p80, %p81
    %p83 = scmp.ne.s32.totalorder %s72, %s75
    %p84 = scmp.eq.s32.totalorder %s20, 1
    %p85 = por %p83, %p84
    %p86 = scmp.ne.s32.totalorder %s75, %s76
    %p87 = scmp.eq.s32.totalorder %s20, 0
    %p88 = por %p86, %p87
    %p89 = scmp.ne.s32.totalorder %s75, %s76
    %p90 = scmp.eq.s32.totalorder %s21, 1
    %p91 = por %p89, %p90
    %p93 = scmp.ne.s32.totalorder %s76, %s92
    %p94 = scmp.eq.s32.totalorder %s21, 0
    %p95 = por %p93, %p94
    %p96 = scmp.le.s32.totalorder 1, %s15
    %p97 = scmp.lt.s32.totalorder %s15, 3
    %p98 = pnand %p96, %p97
    %p99 = pneg %p98
    // Predicated region
    $region9: #{cnn_forward.1} parent=5 // pred_check
      _
    $region10: #{cnn_forward.1} parent=5 // pred_check_branch
      %101 = sbr.rel (%p98) target = $region12
    $region11: #{cnn_forward.1} parent=5 // pred_region
      %s102 = ssub.s32 %s15, 1
      // Predicated region
      $region13: #{cnn_forward.1} parent=11 // pred_check
        %p103 = pneg %p62
      $region14: #{cnn_forward.1} parent=11 // pred_check_branch
        %105 = sbr.rel (%p103) target = $region16
      $region15: #{cnn_forward.1} parent=11 // pred_region
        _
      $region16: #{cnn_forward.1} parent=11 // pred_fallthru
        _
    $region12: #{cnn_forward.1} parent=5 // pred_fallthru
      _
    %p106 = scmp.lt.s32.totalorder %s15, 2
    // Predicated region
    $region17: #{cnn_forward.1} parent=5 // pred_check
      %p107 = pneg %p106
    $region18: #{cnn_forward.1} parent=5 // pred_check_branch
      %109 = sbr.rel (%p107) target = $region20
    $region19: #{cnn_forward.1} parent=5 // pred_region
      // Predicated region
      $region21: #{cnn_forward.1} parent=19 // pred_check
        %p110 = pneg %p35
      $region22: #{cnn_forward.1} parent=19 // pred_check_branch
        %112 = sbr.rel (%p110) target = $region24
      $region23: #{cnn_forward.1} parent=19 // pred_region
        %p113 = scmp.lt.s32.totalorder %s15, 1
        %s114 = scalar_select %p113, %s15, 1
        %s115 = smul.addr %s114, 8
        %s116 = smul.addr %s115, 8
        %s117 = scalar_lea.vmem %s1, %s116
      $region24: #{cnn_forward.1} parent=19 // pred_fallthru
        _
    $region20: #{cnn_forward.1} parent=5 // pred_fallthru
      _
    %p118 = scmp.le.s32.totalorder 1, %s15
    %p119 = scmp.lt.s32.totalorder %s15, 3
    %p120 = pnand %p118, %p119
    %p121 = pneg %p120
    // Predicated region
    $region25: #{cnn_forward.1} parent=5 // pred_check
      _
    $region26: #{cnn_forward.1} parent=5 // pred_check_branch
      %123 = sbr.rel (%p120) target = $region28
    $region27: #{cnn_forward.1} parent=5 // pred_region
      %s124 = ssub.s32 %s15, 1
      %p125 = scmp.lt.s32.totalorder %s20, 1
      %s126 = scalar_select %p125, %s20, 1
      %s127 = smul.addr %s126, 8
      %s128 = smul.addr %s127, 8
      %s129 = scalar_lea.vmem %s1, %s128
      %p130 = pneg %p41
      %p131 = pneg %p38
      %p132 = pneg %p62
      %p133 = pneg %p59
      %p134 = pneg %p88
      %p135 = pneg %p85
      %p136 = scmp.lt.s32.totalorder %s20, 1
      %s137 = scalar_select %p136, %s20, 1
      %s138 = scalar_lea.vmem %s3, %s137
      %p139 = scmp.lt.s32.totalorder %s20, 1
      %s140 = scalar_select %p139, %s20, 1
      %s141 = smul.addr %s140, 8
      %s142 = smul.addr %s141, 8
      %s143 = scalar_lea.vmem %s1, %s142
      %p144 = scmp.lt.s32.totalorder %s20, 1
      %s145 = scalar_select %p144, %s20, 1
      %s146 = scalar_lea.vmem %s3, %s145
      %v147 = vlaneseq
      %v148 = vand.u32 %v147, 127
      %v149 = vadd.s32 %v148, 128
      %v150 = vadd.s32 %v148, 256
      %v151 = vadd.s32 %v148, 384
      %v152 = vld [vmem:[%s143] sm:$0xff]
      %v153 = vld [vmem:[%s143 + $0x8] sm:$0xff]
      %v154 = vld [vmem:[%s143 + $0x10] sm:$0xff]
      %v155 = vld [vmem:[%s143 + $0x18] sm:$0xff]
      %v156 = vld [vmem:[%s143 + $0x20] sm:$0xff]
      %v157 = vld [vmem:[%s143 + $0x28] sm:$0xff]
      %v158 = vld [vmem:[%s143 + $0x30] sm:$0xff]
      %v159 = vld [vmem:[%s143 + $0x38] sm:$0xff]
      %vm160 = vcmp.eq.s32.totalorder %v152, %v148
      %vm161 = vcmp.eq.s32.totalorder %v153, %v149
      %vm162 = vcmp.eq.s32.totalorder %v154, %v150
      %vm163 = vcmp.eq.s32.totalorder %v155, %v151
      %vm164 = vcmp.eq.s32.totalorder %v156, %v148
      %vm165 = vcmp.eq.s32.totalorder %v157, %v149
      %vm166 = vcmp.eq.s32.totalorder %v158, %v150
      %vm167 = vcmp.eq.s32.totalorder %v159, %v151
      %v168 = vsel %vm160, 1, 0
      %v169 = vsel %vm161, 1, 0
      %v170 = vsel %vm162, 1, 0
      %v171 = vsel %vm163, 1, 0
      %v172 = vsel %vm164, 1, 0
      %v173 = vsel %vm165, 1, 0
      %v174 = vsel %vm166, 1, 0
      %v175 = vsel %vm167, 1, 0
      %v176 = vcvt.s32.f32 %v168
      %v177 = vcvt.s32.f32 %v169
      %v178 = vcvt.s32.f32 %v170
      %v179 = vcvt.s32.f32 %v171
      %v180 = vcvt.s32.f32 %v172
      %v181 = vcvt.s32.f32 %v173
      %v182 = vcvt.s32.f32 %v174
      %v183 = vcvt.s32.f32 %v175
      %v184 = vld [vmem:[%s2] sm:$0xff]
      %v185 = vld [vmem:[%s2 + $0x8] sm:$0xff]
      %v186 = vld [vmem:[%s2 + $0x10] sm:$0xff]
      %v187 = vld [vmem:[%s2 + $0x18] sm:$0xff]
      %v188 = vld [vmem:[%s2 + $0x20] sm:$0xff]
      %v189 = vld [vmem:[%s2 + $0x28] sm:$0xff]
      %v190 = vld [vmem:[%s2 + $0x30] sm:$0xff]
      %v191 = vld [vmem:[%s2 + $0x38] sm:$0xff]
      %v192 = vld [vmem:[%s2 + $0x40] sm:$0xff]
      %v193 = vld [vmem:[%s2 + $0x48] sm:$0xff]
      %v194 = vld [vmem:[%s2 + $0x50] sm:$0xff]
      %v195 = vld [vmem:[%s2 + $0x58] sm:$0xff]
      %v196 = vld [vmem:[%s2 + $0x60] sm:$0xff]
      %v197 = vld [vmem:[%s2 + $0x68] sm:$0xff]
      %v198 = vld [vmem:[%s2 + $0x70] sm:$0xff]
      %v199 = vld [vmem:[%s2 + $0x78] sm:$0xff]
      %v200 = vld [vmem:[%s2 + $0x80] sm:$0xff]
      %v201 = vld [vmem:[%s2 + $0x88] sm:$0xff]
      %v202 = vld [vmem:[%s2 + $0x90] sm:$0xff]
      %v203 = vld [vmem:[%s2 + $0x98] sm:$0xff]
      %v204 = vld [vmem:[%s2 + $0xa0] sm:$0xff]
      %v205 = vld [vmem:[%s2 + $0xa8] sm:$0xff]
      %v206 = vld [vmem:[%s2 + $0xb0] sm:$0xff]
      %v207 = vld [vmem:[%s2 + $0xb8] sm:$0xff]
      %v208 = vld [vmem:[%s2 + $0xc0] sm:$0xff]
      %v209 = vld [vmem:[%s2 + $0xc8] sm:$0xff]
      %v210 = vld [vmem:[%s2 + $0xd0] sm:$0xff]
      %v211 = vld [vmem:[%s2 + $0xd8] sm:$0xff]
      %v212 = vld [vmem:[%s2 + $0xe0] sm:$0xff]
      %v213 = vld [vmem:[%s2 + $0xe8] sm:$0xff]
      %v214 = vld [vmem:[%s2 + $0xf0] sm:$0xff]
      %v215 = vld [vmem:[%s2 + $0xf8] sm:$0xff]
      %v216 = vld [vmem:[%s2 + $0x100] sm:$0xff]
      %v217 = vld [vmem:[%s2 + $0x108] sm:$0xff]
      %v218 = vld [vmem:[%s2 + $0x110] sm:$0xff]
      %v219 = vld [vmem:[%s2 + $0x118] sm:$0xff]
      %v220 = vld [vmem:[%s2 + $0x120] sm:$0xff]
      %v221 = vld [vmem:[%s2 + $0x128] sm:$0xff]
      %v222 = vld [vmem:[%s2 + $0x130] sm:$0xff]
      %v223 = vld [vmem:[%s2 + $0x138] sm:$0xff]
      %v224 = vld [vmem:[%s2 + $0x140] sm:$0xff]
      %v225 = vld [vmem:[%s2 + $0x148] sm:$0xff]
      %v226 = vld [vmem:[%s2 + $0x150] sm:$0xff]
      %v227 = vld [vmem:[%s2 + $0x158] sm:$0xff]
      %v228 = vld [vmem:[%s2 + $0x160] sm:$0xff]
      %v229 = vld [vmem:[%s2 + $0x168] sm:$0xff]
      %v230 = vld [vmem:[%s2 + $0x170] sm:$0xff]
      %v231 = vld [vmem:[%s2 + $0x178] sm:$0xff]
      %v232 = vld [vmem:[%s2 + $0x180] sm:$0xff]
      %v233 = vld [vmem:[%s2 + $0x188] sm:$0xff]
      %v234 = vld [vmem:[%s2 + $0x190] sm:$0xff]
      %v235 = vld [vmem:[%s2 + $0x198] sm:$0xff]
      %v236 = vld [vmem:[%s2 + $0x1a0] sm:$0xff]
      %v237 = vld [vmem:[%s2 + $0x1a8] sm:$0xff]
      %v238 = vld [vmem:[%s2 + $0x1b0] sm:$0xff]
      %v239 = vld [vmem:[%s2 + $0x1b8] sm:$0xff]
      %v240 = vld [vmem:[%s2 + $0x1c0] sm:$0xff]
      %v241 = vld [vmem:[%s2 + $0x1c8] sm:$0xff]
      %v242 = vld [vmem:[%s2 + $0x1d0] sm:$0xff]
      %v243 = vld [vmem:[%s2 + $0x1d8] sm:$0xff]
      %v244 = vld [vmem:[%s2 + $0x1e0] sm:$0xff]
      %v245 = vld [vmem:[%s2 + $0x1e8] sm:$0xff]
      %v246 = vld [vmem:[%s2 + $0x1f0] sm:$0xff]
      %v247 = vld [vmem:[%s2 + $0x1f8] sm:$0xff]
      %v248 = vld [vmem:[%s2 + $0x200] sm:$0x1]
      %v249 = vlaneseq
      %v250 = vshrl.u32 %v249, 7
      %v251 = vsub.s32 0, %v250
      %v252 = vrot.slane %v248, %v251
      %253 = vmatprep.subr.mxu0 0.0
      %v254 = vand.u32 %v184, 4294901760
      %255 = vmatpush1.msra.mxu0 %v254
      %256 = vmatprep.subr.mxu0 0.0
      %v257 = vand.u32 %v185, 4294901760
      %258 = vmatpush1.msra.mxu0 %v257
      %259 = vmatprep.subr.mxu0 0.0
      %v260 = vand.u32 %v186, 4294901760
      %261 = vmatpush1.msra.mxu0 %v260
      %262 = vmatprep.subr.mxu0 0.0
      %v263 = vand.u32 %v187, 4294901760
      %264 = vmatpush1.msra.mxu0 %v263
      %265 = vmatprep.subr.mxu0 0.0
      %v266 = vand.u32 %v188, 4294901760
      %267 = vmatpush1.msra.mxu0 %v266
      %268 = vmatprep.subr.mxu0 0.0
      %v269 = vand.u32 %v189, 4294901760
      %270 = vmatpush1.msra.mxu0 %v269
      %271 = vmatprep.subr.mxu0 0.0
      %v272 = vand.u32 %v190, 4294901760
      %273 = vmatpush1.msra.mxu0 %v272
      %274 = vmatprep.subr.mxu0 0.0
      %v275 = vand.u32 %v191, 4294901760
      %276 = vmatpush1.msra.mxu0 %v275
      %277 = vmatprep.subr.mxu0 0.0
      %v278 = vand.u32 %v192, 4294901760
      %279 = vmatpush1.msra.mxu0 %v278
      %280 = vmatprep.subr.mxu0 0.0
      %v281 = vand.u32 %v193, 4294901760
      %282 = vmatpush1.msra.mxu0 %v281
      %283 = vmatprep.subr.mxu0 0.0
      %v284 = vand.u32 %v194, 4294901760
      %285 = vmatpush1.msra.mxu0 %v284
      %286 = vmatprep.subr.mxu0 0.0
      %v287 = vand.u32 %v195, 4294901760
      %288 = vmatpush1.msra.mxu0 %v287
      %289 = vmatprep.subr.mxu0 0.0
      %v290 = vand.u32 %v196, 4294901760
      %291 = vmatpush1.msra.mxu0 %v290
      %292 = vmatprep.subr.mxu0 0.0
      %v293 = vand.u32 %v197, 4294901760
      %294 = vmatpush1.msra.mxu0 %v293
      %295 = vmatprep.subr.mxu0 0.0
      %v296 = vand.u32 %v198, 4294901760
      %297 = vmatpush1.msra.mxu0 %v296
      %298 = vmatprep.subr.mxu0 0.0
      %v299 = vand.u32 %v199, 4294901760
      %300 = vmatpush1.msra.mxu0 %v299
      %301 = vmatprep.subr.mxu0 0.0
      %v302 = vand.u32 %v200, 4294901760
      %303 = vmatpush1.msra.mxu0 %v302
      %304 = vmatprep.subr.mxu0 0.0
      %v305 = vand.u32 %v201, 4294901760
      %306 = vmatpush1.msra.mxu0 %v305
      %307 = vmatprep.subr.mxu0 0.0
      %v308 = vand.u32 %v202, 4294901760
      %309 = vmatpush1.msra.mxu0 %v308
      %310 = vmatprep.subr.mxu0 0.0
      %v311 = vand.u32 %v203, 4294901760
      %312 = vmatpush1.msra.mxu0 %v311
      %313 = vmatprep.subr.mxu0 0.0
      %v314 = vand.u32 %v204, 4294901760
      %315 = vmatpush1.msra.mxu0 %v314
      %316 = vmatprep.subr.mxu0 0.0
      %v317 = vand.u32 %v205, 4294901760
      %318 = vmatpush1.msra.mxu0 %v317
      %319 = vmatprep.subr.mxu0 0.0
      %v320 = vand.u32 %v206, 4294901760
      %321 = vmatpush1.msra.mxu0 %v320
      %322 = vmatprep.subr.mxu0 0.0
      %v323 = vand.u32 %v207, 4294901760
      %324 = vmatpush1.msra.mxu0 %v323
      %325 = vmatprep.subr.mxu0 0.0
      %v326 = vand.u32 %v208, 4294901760
      %327 = vmatpush1.msra.mxu0 %v326
      %328 = vmatprep.subr.mxu0 0.0
      %v329 = vand.u32 %v209, 4294901760
      %330 = vmatpush1.msra.mxu0 %v329
      %331 = vmatprep.subr.mxu0 0.0
      %v332 = vand.u32 %v210, 4294901760
      %333 = vmatpush1.msra.mxu0 %v332
      %334 = vmatprep.subr.mxu0 0.0
      %v335 = vand.u32 %v211, 4294901760
      %336 = vmatpush1.msra.mxu0 %v335
      %337 = vmatprep.subr.mxu0 0.0
      %v338 = vand.u32 %v212, 4294901760
      %339 = vmatpush1.msra.mxu0 %v338
      %340 = vmatprep.subr.mxu0 0.0
      %v341 = vand.u32 %v213, 4294901760
      %342 = vmatpush1.msra.mxu0 %v341
      %343 = vmatprep.subr.mxu0 0.0
      %v344 = vand.u32 %v214, 4294901760
      %345 = vmatpush1.msra.mxu0 %v344
      %346 = vmatprep.subr.mxu0 0.0
      %v347 = vand.u32 %v215, 4294901760
      %348 = vmatpush1.msra.mxu0 %v347
      %v349 = vand.u32 %v177, 4294901760
      %v350 = vsub.f32 %v177, %v349
      %v351 = vand.u32 %v350, 4294901760
      %v352 = vsub.f32 %v350, %v351
      %v353 = vand.u32 %v352, 4294901760
      %354 = vmatprep.mubr.f32.mxu0 %v353
      %v355 = vand.u32 %v176, 4294901760
      %v356 = vsub.f32 %v176, %v355
      %v357 = vand.u32 %v356, 4294901760
      %v358 = vsub.f32 %v356, %v357
      %v359 = vand.u32 %v358, 4294901760
      %360 = vmatmul.mubr.f32.gmra.mrb[0].mxu0 %v359
      %v361 = vpop.f32.mrb[0].mxu0
      %v362 = vadd.f32 %v252, %v361
      %v363 = vpop.f32.mrb[0].mxu0
      %v364 = vand.u32 %v181, 4294901760
      %v365 = vsub.f32 %v181, %v364
      %v366 = vand.u32 %v365, 4294901760
      %v367 = vsub.f32 %v365, %v366
      %v368 = vand.u32 %v367, 4294901760
      %369 = vmatprep.mubr.f32.mxu0 %v368
      %v370 = vand.u32 %v180, 4294901760
      %v371 = vsub.f32 %v180, %v370
      %v372 = vand.u32 %v371, 4294901760
      %v373 = vsub.f32 %v371, %v372
      %v374 = vand.u32 %v373, 4294901760
      %375 = vmatmul.mubr.f32.gmra.mrb[0].mxu0 %v374
      %v376 = vpop.f32.mrb[0].mxu0
      %v377 = vadd.f32 %v252, %v376
      %v378 = vpop.f32.mrb[0].mxu0
      %379 = vdwg.mxu0
      %380 = vmatprep.subr.mxu0 0.0
      %v381 = vand.u32 %v184, 4294901760
      %v382 = vsub.f32 %v184, %v381
      %v383 = vand.u32 %v382, 4294901760
      %v384 = vsub.f32 %v382, %v383
      %v385 = vand.u32 %v384, 4294901760
      %386 = vmatpush1.msra.mxu0 %v385
      %387 = vmatprep.subr.mxu0 0.0
      %v388 = vand.u32 %v185, 4294901760
      %v389 = vsub.f32 %v185, %v388
      %v390 = vand.u32 %v389, 4294901760
      %v391 = vsub.f32 %v389, %v390
      %v392 = vand.u32 %v391, 4294901760
      %393 = vmatpush1.msra.mxu0 %v392
      %394 = vmatprep.subr.mxu0 0.0
      %v395 = vand.u32 %v186, 4294901760
      %v396 = vsub.f32 %v186, %v395
      %v397 = vand.u32 %v396, 4294901760
      %v398 = vsub.f32 %v396, %v397
      %v399 = vand.u32 %v398, 4294901760
      %400 = vmatpush1.msra.mxu0 %v399
      %401 = vmatprep.subr.mxu0 0.0
      %v402 = vand.u32 %v187, 4294901760
      %v403 = vsub.f32 %v187, %v402
      %v404 = vand.u32 %v403, 4294901760
      %v405 = vsub.f32 %v403, %v404
      %v406 = vand.u32 %v405, 4294901760
      %407 = vmatpush1.msra.mxu0 %v406
      %408 = vmatprep.subr.mxu0 0.0
      %v409 = vand.u32 %v188, 4294901760
      %v410 = vsub.f32 %v188, %v409
      %v411 = vand.u32 %v410, 4294901760
      %v412 = vsub.f32 %v410, %v411
      %v413 = vand.u32 %v412, 4294901760
      %414 = vmatpush1.msra.mxu0 %v413
      %415 = vmatprep.subr.mxu0 0.0
      %v416 = vand.u32 %v189, 4294901760
      %v417 = vsub.f32 %v189, %v416
      %v418 = vand.u32 %v417, 4294901760
      %v419 = vsub.f32 %v417, %v418
      %v420 = vand.u32 %v419, 4294901760
      %421 = vmatpush1.msra.mxu0 %v420
      %422 = vmatprep.subr.mxu0 0.0
      %v423 = vand.u32 %v190, 4294901760
      %v424 = vsub.f32 %v190, %v423
      %v425 = vand.u32 %v424, 4294901760
      %v426 = vsub.f32 %v424, %v425
      %v427 = vand.u32 %v426, 4294901760
      %428 = vmatpush1.msra.mxu0 %v427
      %429 = vmatprep.subr.mxu0 0.0
      %v430 = vand.u32 %v191, 4294901760
      %v431 = vsub.f32 %v191, %v430
      %v432 = vand.u32 %v431, 4294901760
      %v433 = vsub.f32 %v431, %v432
      %v434 = vand.u32 %v433, 4294901760
      %435 = vmatpush1.msra.mxu0 %v434
      %436 = vmatprep.subr.mxu0 0.0
      %v437 = vand.u32 %v192, 4294901760
      %v438 = vsub.f32 %v192, %v437
      %v439 = vand.u32 %v438, 4294901760
      %v440 = vsub.f32 %v438, %v439
      %v441 = vand.u32 %v440, 4294901760
      %442 = vmatpush1.msra.mxu0 %v441
      %443 = vmatprep.subr.mxu0 0.0
      %v444 = vand.u32 %v193, 4294901760
      %v445 = vsub.f32 %v193, %v444
      %v446 = vand.u32 %v445, 4294901760
      %v447 = vsub.f32 %v445, %v446
      %v448 = vand.u32 %v447, 4294901760
      %449 = vmatpush1.msra.mxu0 %v448
      %450 = vmatprep.subr.mxu0 0.0
      %v451 = vand.u32 %v194, 4294901760
      %v452 = vsub.f32 %v194, %v451
      %v453 = vand.u32 %v452, 4294901760
      %v454 = vsub.f32 %v452, %v453
      %v455 = vand.u32 %v454, 4294901760
      %456 = vmatpush1.msra.mxu0 %v455
      %457 = vmatprep.subr.mxu0 0.0
      %v458 = vand.u32 %v195, 4294901760
      %v459 = vsub.f32 %v195, %v458
      %v460 = vand.u32 %v459, 4294901760
      %v461 = vsub.f32 %v459, %v460
      %v462 = vand.u32 %v461, 4294901760
      %463 = vmatpush1.msra.mxu0 %v462
      %464 = vmatprep.subr.mxu0 0.0
      %v465 = vand.u32 %v196, 4294901760
      %v466 = vsub.f32 %v196, %v465
      %v467 = vand.u32 %v466, 4294901760
      %v468 = vsub.f32 %v466, %v467
      %v469 = vand.u32 %v468, 4294901760
      %470 = vmatpush1.msra.mxu0 %v469
      %471 = vmatprep.subr.mxu0 0.0
      %v472 = vand.u32 %v197, 4294901760
      %v473 = vsub.f32 %v197, %v472
      %v474 = vand.u32 %v473, 4294901760
      %v475 = vsub.f32 %v473, %v474
      %v476 = vand.u32 %v475, 4294901760
      %477 = vmatpush1.msra.mxu0 %v476
      %478 = vmatprep.subr.mxu0 0.0
      %v479 = vand.u32 %v198, 4294901760
      %v480 = vsub.f32 %v198, %v479
      %v481 = vand.u32 %v480, 4294901760
      %v482 = vsub.f32 %v480, %v481
      %v483 = vand.u32 %v482, 4294901760
      %484 = vmatpush1.msra.mxu0 %v483
      %485 = vmatprep.subr.mxu0 0.0
      %v486 = vand.u32 %v199, 4294901760
      %v487 = vsub.f32 %v199, %v486
      %v488 = vand.u32 %v487, 4294901760
      %v489 = vsub.f32 %v487, %v488
      %v490 = vand.u32 %v489, 4294901760
      %491 = vmatpush1.msra.mxu0 %v490
      %492 = vmatprep.subr.mxu0 0.0
      %v493 = vand.u32 %v200, 4294901760
      %v494 = vsub.f32 %v200, %v493
      %v495 = vand.u32 %v494, 4294901760
      %v496 = vsub.f32 %v494, %v495
      %v497 = vand.u32 %v496, 4294901760
      %498 = vmatpush1.msra.mxu0 %v497
      %499 = vmatprep.subr.mxu0 0.0
      %v500 = vand.u32 %v201, 4294901760
      %v501 = vsub.f32 %v201, %v500
      %v502 = vand.u32 %v501, 4294901760
      %v503 = vsub.f32 %v501, %v502
      %v504 = vand.u32 %v503, 4294901760
      %505 = vmatpush1.msra.mxu0 %v504
      %506 = vmatprep.subr.mxu0 0.0
      %v507 = vand.u32 %v202, 4294901760
      %v508 = vsub.f32 %v202, %v507
      %v509 = vand.u32 %v508, 4294901760
      %v510 = vsub.f32 %v508, %v509
      %v511 = vand.u32 %v510, 4294901760
      %512 = vmatpush1.msra.mxu0 %v511
      %513 = vmatprep.subr.mxu0 0.0
      %v514 = vand.u32 %v203, 4294901760
      %v515 = vsub.f32 %v203, %v514
      %v516 = vand.u32 %v515, 4294901760
      %v517 = vsub.f32 %v515, %v516
      %v518 = vand.u32 %v517, 4294901760
      %519 = vmatpush1.msra.mxu0 %v518
      %520 = vmatprep.subr.mxu0 0.0
      %v521 = vand.u32 %v204, 4294901760
      %v522 = vsub.f32 %v204, %v521
      %v523 = vand.u32 %v522, 4294901760
      %v524 = vsub.f32 %v522, %v523
      %v525 = vand.u32 %v524, 4294901760
      %526 = vmatpush1.msra.mxu0 %v525
      %527 = vmatprep.subr.mxu0 0.0
      %v528 = vand.u32 %v205, 4294901760
      %v529 = vsub.f32 %v205, %v528
      %v530 = vand.u32 %v529, 4294901760
      %v531 = vsub.f32 %v529, %v530
      %v532 = vand.u32 %v531, 4294901760
      %533 = vmatpush1.msra.mxu0 %v532
      %534 = vmatprep.subr.mxu0 0.0
      %v535 = vand.u32 %v206, 4294901760
      %v536 = vsub.f32 %v206, %v535
      %v537 = vand.u32 %v536, 4294901760
      %v538 = vsub.f32 %v536, %v537
      %v539 = vand.u32 %v538, 4294901760
      %540 = vmatpush1.msra.mxu0 %v539
      %541 = vmatprep.subr.mxu0 0.0
      %v542 = vand.u32 %v207, 4294901760
      %v543 = vsub.f32 %v207, %v542
      %v544 = vand.u32 %v543, 4294901760
      %v545 = vsub.f32 %v543, %v544
      %v546 = vand.u32 %v545, 4294901760
      %547 = vmatpush1.msra.mxu0 %v546
      %548 = vmatprep.subr.mxu0 0.0
      %v549 = vand.u32 %v208, 4294901760
      %v550 = vsub.f32 %v208, %v549
      %v551 = vand.u32 %v550, 4294901760
      %v552 = vsub.f32 %v550, %v551
      %v553 = vand.u32 %v552, 4294901760
      %554 = vmatpush1.msra.mxu0 %v553
      %555 = vmatprep.subr.mxu0 0.0
      %v556 = vand.u32 %v209, 4294901760
      %v557 = vsub.f32 %v209, %v556
      %v558 = vand.u32 %v557, 4294901760
      %v559 = vsub.f32 %v557, %v558
      %v560 = vand.u32 %v559, 4294901760
      %561 = vmatpush1.msra.mxu0 %v560
      %562 = vmatprep.subr.mxu0 0.0
      %v563 = vand.u32 %v210, 4294901760
      %v564 = vsub.f32 %v210, %v563
      %v565 = vand.u32 %v564, 4294901760
      %v566 = vsub.f32 %v564, %v565
      %v567 = vand.u32 %v566, 4294901760
      %568 = vmatpush1.msra.mxu0 %v567
      %569 = vmatprep.subr.mxu0 0.0
      %v570 = vand.u32 %v211, 4294901760
      %v571 = vsub.f32 %v211, %v570
      %v572 = vand.u32 %v571, 4294901760
      %v573 = vsub.f32 %v571, %v572
      %v574 = vand.u32 %v573, 4294901760
      %575 = vmatpush1.msra.mxu0 %v574
      %576 = vmatprep.subr.mxu0 0.0
      %v577 = vand.u32 %v212, 4294901760
      %v578 = vsub.f32 %v212, %v577
      %v579 = vand.u32 %v578, 4294901760
      %v580 = vsub.f32 %v578, %v579
      %v581 = vand.u32 %v580, 4294901760
      %582 = vmatpush1.msra.mxu0 %v581
      %583 = vmatprep.subr.mxu0 0.0
      %v584 = vand.u32 %v213, 4294901760
      %v585 = vsub.f32 %v213, %v584
      %v586 = vand.u32 %v585, 4294901760
      %v587 = vsub.f32 %v585, %v586
      %v588 = vand.u32 %v587, 4294901760
      %589 = vmatpush1.msra.mxu0 %v588
      %590 = vmatprep.subr.mxu0 0.0
      %v591 = vand.u32 %v214, 4294901760
      %v592 = vsub.f32 %v214, %v591
      %v593 = vand.u32 %v592, 4294901760
      %v594 = vsub.f32 %v592, %v593
      %v595 = vand.u32 %v594, 4294901760
      %596 = vmatpush1.msra.mxu0 %v595
      %597 = vmatprep.subr.mxu0 0.0
      %v598 = vand.u32 %v215, 4294901760
      %v599 = vsub.f32 %v215, %v598
      %v600 = vand.u32 %v599, 4294901760
      %v601 = vsub.f32 %v599, %v600
      %v602 = vand.u32 %v601, 4294901760
      %603 = vmatpush1.msra.mxu0 %v602
      %v604 = vand.u32 %v177, 4294901760
      %605 = vmatprep.mubr.f32.mxu0 %v604
      %v606 = vand.u32 %v176, 4294901760
      %607 = vmatmul.mubr.f32.gmra.mrb[0].mxu0 %v606
      %v608 = vpop.f32.mrb[0].mxu0
      %v609 = vadd.f32 %v362, %v608
      %v610 = vpop.f32.mrb[0].mxu0
      %v611 = vand.u32 %v181, 4294901760
      %612 = vmatprep.mubr.f32.mxu0 %v611
      %v613 = vand.u32 %v180, 4294901760
      %614 = vmatmul.mubr.f32.gmra.mrb[0].mxu0 %v613
      %v615 = vpop.f32.mrb[0].mxu0
      %v616 = vadd.f32 %v377, %v615
      %v617 = vpop.f32.mrb[0].mxu0
      %618 = vdwg.mxu0
      %619 = vmatprep.subr.mxu0 0.0
      %v620 = vand.u32 %v184, 4294901760
      %v621 = vsub.f32 %v184, %v620
      %622 = vmatpush1.msra.mxu0 %v621
      %623 = vmatprep.subr.mxu0 0.0
      %v624 = vand.u32 %v185, 4294901760
      %v625 = vsub.f32 %v185, %v624
      %626 = vmatpush1.msra.mxu0 %v625
      %627 = vmatprep.subr.mxu0 0.0
      %v628 = vand.u32 %v186, 4294901760
      %v629 = vsub.f32 %v186, %v628
      %630 = vmatpush1.msra.mxu0 %v629
      %631 = vmatprep.subr.mxu0 0.0
      %v632 = vand.u32 %v187, 4294901760
      %v633 = vsub.f32 %v187, %v632
      %634 = vmatpush1.msra.mxu0 %v633
      %635 = vmatprep.subr.mxu0 0.0
      %v636 = vand.u32 %v188, 4294901760
      %v637 = vsub.f32 %v188, %v636
      %638 = vmatpush1.msra.mxu0 %v637
      %639 = vmatprep.subr.mxu0 0.0
      %v640 = vand.u32 %v189, 4294901760
      %v641 = vsub.f32 %v189, %v640
      %642 = vmatpush1.msra.mxu0 %v641
      %643 = vmatprep.subr.mxu0 0.0
      %v644 = vand.u32 %v190, 4294901760
      %v645 = vsub.f32 %v190, %v644
      %646 = vmatpush1.msra.mxu0 %v645
      %647 = vmatprep.subr.mxu0 0.0
      %v648 = vand.u32 %v191, 4294901760
      %v649 = vsub.f32 %v191, %v648
      %650 = vmatpush1.msra.mxu0 %v649
      %651 = vmatprep.subr.mxu0 0.0
      %v652 = vand.u32 %v192, 4294901760
      %v653 = vsub.f32 %v192, %v652
      %654 = vmatpush1.msra.mxu0 %v653
      %655 = vmatprep.subr.mxu0 0.0
      %v656 = vand.u32 %v193, 4294901760
      %v657 = vsub.f32 %v193, %v656
      %658 = vmatpush1.msra.mxu0 %v657
      %659 = vmatprep.subr.mxu0 0.0
      %v660 = vand.u32 %v194, 4294901760
      %v661 = vsub.f32 %v194, %v660
      %662 = vmatpush1.msra.mxu0 %v661
      %663 = vmatprep.subr.mxu0 0.0
      %v664 = vand.u32 %v195, 4294901760
      %v665 = vsub.f32 %v195, %v664
      %666 = vmatpush1.msra.mxu0 %v665
      %667 = vmatprep.subr.mxu0 0.0
      %v668 = vand.u32 %v196, 4294901760
      %v669 = vsub.f32 %v196, %v668
      %670 = vmatpush1.msra.mxu0 %v669
      %671 = vmatprep.subr.mxu0 0.0
      %v672 = vand.u32 %v197, 4294901760
      %v673 = vsub.f32 %v197, %v672
      %674 = vmatpush1.msra.mxu0 %v673
      %675 = vmatprep.subr.mxu0 0.0
      %v676 = vand.u32 %v198, 4294901760
      %v677 = vsub.f32 %v198, %v676
      %678 = vmatpush1.msra.mxu0 %v677
      %679 = vmatprep.subr.mxu0 0.0
      %v680 = vand.u32 %v199, 4294901760
      %v681 = vsub.f32 %v199, %v680
      %682 = vmatpush1.msra.mxu0 %v681
      %683 = vmatprep.subr.mxu0 0.0
      %v684 = vand.u32 %v200, 4294901760
      %v685 = vsub.f32 %v200, %v684
      %686 = vmatpush1.msra.mxu0 %v685
      %687 = vmatprep.subr.mxu0 0.0
      %v688 = vand.u32 %v201, 4294901760
      %v689 = vsub.f32 %v201, %v688
      %690 = vmatpush1.msra.mxu0 %v689
      %691 = vmatprep.subr.mxu0 0.0
      %v692 = vand.u32 %v202, 4294901760
      %v693 = vsub.f32 %v202, %v692
      %694 = vmatpush1.msra.mxu0 %v693
      %695 = vmatprep.subr.mxu0 0.0
      %v696 = vand.u32 %v203, 4294901760
      %v697 = vsub.f32 %v203, %v696
      %698 = vmatpush1.msra.mxu0 %v697
      %699 = vmatprep.subr.mxu0 0.0
      %v700 = vand.u32 %v204, 4294901760
      %v701 = vsub.f32 %v204, %v700
      %702 = vmatpush1.msra.mxu0 %v701
      %703 = vmatprep.subr.mxu0 0.0
      %v704 = vand.u32 %v205, 4294901760
      %v705 = vsub.f32 %v205, %v704
      %706 = vmatpush1.msra.mxu0 %v705
      %707 = vmatprep.subr.mxu0 0.0
      %v708 = vand.u32 %v206, 4294901760
      %v709 = vsub.f32 %v206, %v708
      %710 = vmatpush1.msra.mxu0 %v709
      %711 = vmatprep.subr.mxu0 0.0
      %v712 = vand.u32 %v207, 4294901760
      %v713 = vsub.f32 %v207, %v712
      %714 = vmatpush1.msra.mxu0 %v713
      %715 = vmatprep.subr.mxu0 0.0
      %v716 = vand.u32 %v208, 4294901760
      %v717 = vsub.f32 %v208, %v716
      %718 = vmatpush1.msra.mxu0 %v717
      %719 = vmatprep.subr.mxu0 0.0
      %v720 = vand.u32 %v209, 4294901760
      %v721 = vsub.f32 %v209, %v720
      %722 = vmatpush1.msra.mxu0 %v721
      %723 = vmatprep.subr.mxu0 0.0
      %v724 = vand.u32 %v210, 4294901760
      %v725 = vsub.f32 %v210, %v724
      %726 = vmatpush1.msra.mxu0 %v725
      %727 = vmatprep.subr.mxu0 0.0
      %v728 = vand.u32 %v211, 4294901760
      %v729 = vsub.f32 %v211, %v728
      %730 = vmatpush1.msra.mxu0 %v729
      %731 = vmatprep.subr.mxu0 0.0
      %v732 = vand.u32 %v212, 4294901760
      %v733 = vsub.f32 %v212, %v732
      %734 = vmatpush1.msra.mxu0 %v733
      %735 = vmatprep.subr.mxu0 0.0
      %v736 = vand.u32 %v213, 4294901760
      %v737 = vsub.f32 %v213, %v736
      %738 = vmatpush1.msra.mxu0 %v737
      %739 = vmatprep.subr.mxu0 0.0
      %v740 = vand.u32 %v214, 4294901760
      %v741 = vsub.f32 %v214, %v740
      %742 = vmatpush1.msra.mxu0 %v741
      %743 = vmatprep.subr.mxu0 0.0
      %v744 = vand.u32 %v215, 4294901760
      %v745 = vsub.f32 %v215, %v744
      %746 = vmatpush1.msra.mxu0 %v745
      %v747 = vand.u32 %v177, 4294901760
      %v748 = vsub.f32 %v177, %v747
      %749 = vmatprep.mubr.f32.mxu0 %v748
      %v750 = vand.u32 %v176, 4294901760
      %v751 = vsub.f32 %v176, %v750
      %752 = vmatmul.mubr.f32.gmra.mrb[0].mxu0 %v751
      %v753 = vpop.f32.mrb[0].mxu0
      %v754 = vadd.f32 %v609, %v753
      %v755 = vpop.f32.mrb[0].mxu0
      %v756 = vand.u32 %v181, 4294901760
      %v757 = vsub.f32 %v181, %v756
      %758 = vmatprep.mubr.f32.mxu0 %v757
      %v759 = vand.u32 %v180, 4294901760
      %v760 = vsub.f32 %v180, %v759
      %761 = vmatmul.mubr.f32.gmra.mrb[0].mxu0 %v760
      %v762 = vpop.f32.mrb[0].mxu0
      %v763 = vadd.f32 %v616, %v762
      %v764 = vpop.f32.mrb[0].mxu0
      %765 = vdwg.mxu0
      %766 = vmatprep.subr.mxu0 0.0
      %v767 = vand.u32 %v184, 4294901760
      %768 = vmatpush1.msra.mxu0 %v767
      %769 = vmatprep.subr.mxu0 0.0
      %v770 = vand.u32 %v185, 4294901760
      %771 = vmatpush1.msra.mxu0 %v770
      %772 = vmatprep.subr.mxu0 0.0
      %v773 = vand.u32 %v186, 4294901760
      %774 = vmatpush1.msra.mxu0 %v773
      %775 = vmatprep.subr.mxu0 0.0
      %v776 = vand.u32 %v187, 4294901760
      %777 = vmatpush1.msra.mxu0 %v776
      %778 = vmatprep.subr.mxu0 0.0
      %v779 = vand.u32 %v188, 4294901760
      %780 = vmatpush1.msra.mxu0 %v779
      %781 = vmatprep.subr.mxu0 0.0
      %v782 = vand.u32 %v189, 4294901760
      %783 = vmatpush1.msra.mxu0 %v782
      %784 = vmatprep.subr.mxu0 0.0
      %v785 = vand.u32 %v190, 4294901760
      %786 = vmatpush1.msra.mxu0 %v785
      %787 = vmatprep.subr.mxu0 0.0
      %v788 = vand.u32 %v191, 4294901760
      %789 = vmatpush1.msra.mxu0 %v788
      %790 = vmatprep.subr.mxu0 0.0
      %v791 = vand.u32 %v192, 4294901760
      %792 = vmatpush1.msra.mxu0 %v791
      %793 = vmatprep.subr.mxu0 0.0
      %v794 = vand.u32 %v193, 4294901760
      %795 = vmatpush1.msra.mxu0 %v794
      %796 = vmatprep.subr.mxu0 0.0
      %v797 = vand.u32 %v194, 4294901760
      %798 = vmatpush1.msra.mxu0 %v797
      %799 = vmatprep.subr.mxu0 0.0
      %v800 = vand.u32 %v195, 4294901760
      %801 = vmatpush1.msra.mxu0 %v800
      %802 = vmatprep.subr.mxu0 0.0
      %v803 = vand.u32 %v196, 4294901760
      %804 = vmatpush1.msra.mxu0 %v803
      %805 = vmatprep.subr.mxu0 0.0
      %v806 = vand.u32 %v197, 4294901760
      %807 = vmatpush1.msra.mxu0 %v806
      %808 = vmatprep.subr.mxu0 0.0
      %v809 = vand.u32 %v198, 4294901760
      %810 = vmatpush1.msra.mxu0 %v809
      %811 = vmatprep.subr.mxu0 0.0
      %v812 = vand.u32 %v199, 4294901760
      %813 = vmatpush1.msra.mxu0 %v812
      %814 = vmatprep.subr.mxu0 0.0
      %v815 = vand.u32 %v200, 4294901760
      %816 = vmatpush1.msra.mxu0 %v815
      %817 = vmatprep.subr.mxu0 0.0
      %v818 = vand.u32 %v201, 4294901760
      %819 = vmatpush1.msra.mxu0 %v818
      %820 = vmatprep.subr.mxu0 0.0
      %v821 = vand.u32 %v202, 4294901760
      %822 = vmatpush1.msra.mxu0 %v821
      %823 = vmatprep.subr.mxu0 0.0
      %v824 = vand.u32 %v203, 4294901760
      %825 = vmatpush1.msra.mxu0 %v824
      %826 = vmatprep.subr.mxu0 0.0
      %v827 = vand.u32 %v204, 4294901760
      %828 = vmatpush1.msra.mxu0 %v827
      %829 = vmatprep.subr.mxu0 0.0
      %v830 = vand.u32 %v205, 4294901760
      %831 = vmatpush1.msra.mxu0 %v830
      %832 = vmatprep.subr.mxu0 0.0
      %v833 = vand.u32 %v206, 4294901760
      %834 = vmatpush1.msra.mxu0 %v833
      %835 = vmatprep.subr.mxu0 0.0
      %v836 = vand.u32 %v207, 4294901760
      %837 = vmatpush1.msra.mxu0 %v836
      %838 = vmatprep.subr.mxu0 0.0
      %v839 = vand.u32 %v208, 4294901760
      %840 = vmatpush1.msra.mxu0 %v839
      %841 = vmatprep.subr.mxu0 0.0
      %v842 = vand.u32 %v209, 4294901760
      %843 = vmatpush1.msra.mxu0 %v842
      %844 = vmatprep.subr.mxu0 0.0
      %v845 = vand.u32 %v210, 4294901760
      %846 = vmatpush1.msra.mxu0 %v845
      %847 = vmatprep.subr.mxu0 0.0
      %v848 = vand.u32 %v211, 4294901760
      %849 = vmatpush1.msra.mxu0 %v848
      %850 = vmatprep.subr.mxu0 0.0
      %v851 = vand.u32 %v212, 4294901760
      %852 = vmatpush1.msra.mxu0 %v851
      %853 = vmatprep.subr.mxu0 0.0
      %v854 = vand.u32 %v213, 4294901760
      %855 = vmatpush1.msra.mxu0 %v854
      %856 = vmatprep.subr.mxu0 0.0
      %v857 = vand.u32 %v214, 4294901760
      %858 = vmatpush1.msra.mxu0 %v857
      %859 = vmatprep.subr.mxu0 0.0
      %v860 = vand.u32 %v215, 4294901760
      %861 = vmatpush1.msra.mxu0 %v860
      %v862 = vand.u32 %v177, 4294901760
      %v863 = vsub.f32 %v177, %v862
      %v864 = vand.u32 %v863, 4294901760
      %865 = vmatprep.mubr.f32.mxu0 %v864
      %v866 = vand.u32 %v176, 4294901760
      %v867 = vsub.f32 %v176, %v866
      %v868 = vand.u32 %v867, 4294901760
      %869 = vmatmul.mubr.f32.gmra.mrb[0].mxu0 %v868
      %v870 = vpop.f32.mrb[0].mxu0
      %v871 = vadd.f32 %v754, %v870
      %v872 = vpop.f32.mrb[0].mxu0
      %v873 = vand.u32 %v181, 4294901760
      %v874 = vsub.f32 %v181, %v873
      %v875 = vand.u32 %v874, 4294901760
      %876 = vmatprep.mubr.f32.mxu0 %v875
      %v877 = vand.u32 %v180, 4294901760
      %v878 = vsub.f32 %v180, %v877
      %v879 = vand.u32 %v878, 4294901760
      %880 = vmatmul.mubr.f32.gmra.mrb[0].mxu0 %v879
      %v881 = vpop.f32.mrb[0].mxu0
      %v882 = vadd.f32 %v763, %v881
      %v883 = vpop.f32.mrb[0].mxu0
      %884 = vdwg.mxu0
      %885 = vmatprep.subr.mxu0 0.0
      %v886 = vand.u32 %v184, 4294901760
      %v887 = vsub.f32 %v184, %v886
      %v888 = vand.u32 %v887, 4294901760
      %889 = vmatpush1.msra.mxu0 %v888
      %890 = vmatprep.subr.mxu0 0.0
      %v891 = vand.u32 %v185, 4294901760
      %v892 = vsub.f32 %v185, %v891
      %v893 = vand.u32 %v892, 4294901760
      %894 = vmatpush1.msra.mxu0 %v893
      %895 = vmatprep.subr.mxu0 0.0
      %v896 = vand.u32 %v186, 4294901760
      %v897 = vsub.f32 %v186, %v896
      %v898 = vand.u32 %v897, 4294901760
      %899 = vmatpush1.msra.mxu0 %v898
      %900 = vmatprep.subr.mxu0 0.0
      %v901 = vand.u32 %v187, 4294901760
      %v902 = vsub.f32 %v187, %v901
      %v903 = vand.u32 %v902, 4294901760
      %904 = vmatpush1.msra.mxu0 %v903
      %905 = vmatprep.subr.mxu0 0.0
      %v906 = vand.u32 %v188, 4294901760
      %v907 = vsub.f32 %v188, %v906
      %v908 = vand.u32 %v907, 4294901760
      %909 = vmatpush1.msra.mxu0 %v908
      %910 = vmatprep.subr.mxu0 0.0
      %v911 = vand.u32 %v189, 4294901760
      %v912 = vsub.f32 %v189, %v911
      %v913 = vand.u32 %v912, 4294901760
      %914 = vmatpush1.msra.mxu0 %v913
      %915 = vmatprep.subr.mxu0 0.0
      %v916 = vand.u32 %v190, 4294901760
      %v917 = vsub.f32 %v190, %v916
      %v918 = vand.u32 %v917, 4294901760
      %919 = vmatpush1.msra.mxu0 %v918
      %920 = vmatprep.subr.mxu0 0.0
      %v921 = vand.u32 %v191, 4294901760
      %v922 = vsub.f32 %v191, %v921
      %v923 = vand.u32 %v922, 4294901760
      %924 = vmatpush1.msra.mxu0 %v923
      %925 = vmatprep.subr.mxu0 0.0
      %v926 = vand.u32 %v192, 4294901760
      %v927 = vsub.f32 %v192, %v926
      %v928 = vand.u32 %v927, 4294901760
      %929 = vmatpush1.msra.mxu0 %v928
      %930 = vmatprep.subr.mxu0 0.0
      %v931 = vand.u32 %v193, 4294901760
      %v932 = vsub.f32 %v193, %v931
      %v933 = vand.u32 %v932, 4294901760
      %934 = vmatpush1.msra.mxu0 %v933
      %935 = vmatprep.subr.mxu0 0.0
      %v936 = vand.u32 %v194, 4294901760
      %v937 = vsub.f32 %v194, %v936
      %v938 = vand.u32 %v937, 4294901760
      %939 = vmatpush1.msra.mxu0 %v938
      %940 = vmatprep.subr.mxu0 0.0
      %v941 = vand.u32 %v195, 4294901760
      %v942 = vsub.f32 %v195, %v941
      %v943 = vand.u32 %v942, 4294901760
      %944 = vmatpush1.msra.mxu0 %v943
      %945 = vmatprep.subr.mxu0 0.0
      %v946 = vand.u32 %v196, 4294901760
      %v947 = vsub.f32 %v196, %v946
      %v948 = vand.u32 %v947, 4294901760
      %949 = vmatpush1.msra.mxu0 %v948
      %950 = vmatprep.subr.mxu0 0.0
      %v951 = vand.u32 %v197, 4294901760
      %v952 = vsub.f32 %v197, %v951
      %v953 = vand.u32 %v952, 4294901760
      %954 = vmatpush1.msra.mxu0 %v953
      %955 = vmatprep.subr.mxu0 0.0
      %v956 = vand.u32 %v198, 4294901760
      %v957 = vsub.f32 %v198, %v956
      %v958 = vand.u32 %v957, 4294901760
      %959 = vmatpush1.msra.mxu0 %v958
      %960 = vmatprep.subr.mxu0 0.0
      %v961 = vand.u32 %v199, 4294901760
      %v962 = vsub.f32 %v199, %v961
      %v963 = vand.u32 %v962, 4294901760
      %964 = vmatpush1.msra.mxu0 %v963
      %965 = vmatprep.subr.mxu0 0.0
      %v966 = vand.u32 %v200, 4294901760
      %v967 = vsub.f32 %v200, %v966
      %v968 = vand.u32 %v967, 4294901760
      %969 = vmatpush1.msra.mxu0 %v968
      %970 = vmatprep.subr.mxu0 0.0
      %v971 = vand.u32 %v201, 4294901760
      %v972 = vsub.f32 %v201, %v971
      %v973 = vand.u32 %v972, 4294901760
      %974 = vmatpush1.msra.mxu0 %v973
      %975 = vmatprep.subr.mxu0 0.0
      %v976 = vand.u32 %v202, 4294901760
      %v977 = vsub.f32 %v202, %v976
      %v978 = vand.u32 %v977, 4294901760
      %979 = vmatpush1.msra.mxu0 %v978
      %980 = vmatprep.subr.mxu0 0.0
      %v981 = vand.u32 %v203, 4294901760
      %v982 = vsub.f32 %v203, %v981
      %v983 = vand.u32 %v982, 4294901760
      %984 = vmatpush1.msra.mxu0 %v983
      %985 = vmatprep.subr.mxu0 0.0
      %v986 = vand.u32 %v204, 4294901760
      %v987 = vsub.f32 %v204, %v986
      %v988 = vand.u32 %v987, 4294901760
      %989 = vmatpush1.msra.mxu0 %v988
      %990 = vmatprep.subr.mxu0 0.0
      %v991 = vand.u32 %v205, 4294901760
      %v992 = vsub.f32 %v205, %v991
      %v993 = vand.u32 %v992, 4294901760
      %994 = vmatpush1.msra.mxu0 %v993
      %995 = vmatprep.subr.mxu0 0.0
      %v996 = vand.u32 %v206, 4294901760
      %v997 = vsub.f32 %v206, %v996
      %v998 = vand.u32 %v997, 4294901760
      %999 = vmatpush1.msra.mxu0 %v998
      %1000 = vmatprep.subr.mxu0 0.0
      %v1001 = vand.u32 %v207, 4294901760
      %v1002 = vsub.f32 %v207, %v1001
      %v1003 = vand.u32 %v1002, 4294901760
      %1004 = vmatpush1.msra.mxu0 %v1003
      %1005 = vmatprep.subr.mxu0 0.0
      %v1006 = vand.u32 %v208, 4294901760
      %v1007 = vsub.f32 %v208, %v1006
      %v1008 = vand.u32 %v1007, 4294901760
      %1009 = vmatpush1.msra.mxu0 %v1008
      %1010 = vmatprep.subr.mxu0 0.0
      %v1011 = vand.u32 %v209, 4294901760
      %v1012 = vsub.f32 %v209, %v1011
      %v1013 = vand.u32 %v1012, 4294901760
      %1014 = vmatpush1.msra.mxu0 %v1013
      %1015 = vmatprep.subr.mxu0 0.0
      %v1016 = vand.u32 %v210, 4294901760
      %v1017 = vsub.f32 %v210, %v1016
      %v1018 = vand.u32 %v1017, 4294901760
      %1019 = vmatpush1.msra.mxu0 %v1018
      %1020 = vmatprep.subr.mxu0 0.0
      %v1021 = vand.u32 %v211, 4294901760
      %v1022 = vsub.f32 %v211, %v1021
      %v1023 = vand.u32 %v1022, 4294901760
      %1024 = vmatpush1.msra.mxu0 %v1023
      %1025 = vmatprep.subr.mxu0 0.0
      %v1026 = vand.u32 %v212, 4294901760
      %v1027 = vsub.f32 %v212, %v1026
      %v1028 = vand.u32 %v1027, 4294901760
      %1029 = vmatpush1.msra.mxu0 %v1028
      %1030 = vmatprep.subr.mxu0 0.0
      %v1031 = vand.u32 %v213, 4294901760
      %v1032 = vsub.f32 %v213, %v1031
      %v1033 = vand.u32 %v1032, 4294901760
      %1034 = vmatpush1.msra.mxu0 %v1033
      %1035 = vmatprep.subr.mxu0 0.0
      %v1036 = vand.u32 %v214, 4294901760
      %v1037 = vsub.f32 %v214, %v1036
      %v1038 = vand.u32 %v1037, 4294901760
      %1039 = vmatpush1.msra.mxu0 %v1038
      %1040 = vmatprep.subr.mxu0 0.0
      %v1041 = vand.u32 %v215, 4294901760
      %v1042 = vsub.f32 %v215, %v1041
      %v1043 = vand.u32 %v1042, 4294901760
      %1044 = vmatpush1.msra.mxu0 %v1043
      %v1045 = vand.u32 %v177, 4294901760
      %1046 = vmatprep.mubr.f32.mxu0 %v1045
      %v1047 = vand.u32 %v176, 4294901760
      %1048 = vmatmul.mubr.f32.gmra.mrb[0].mxu0 %v1047
      %v1049 = vpop.f32.mrb[0].mxu0
      %v1050 = vadd.f32 %v871, %v1049
      %v1051 = vpop.f32.mrb[0].mxu0
      %v1052 = vand.u32 %v181, 4294901760
      %1053 = vmatprep.mubr.f32.mxu0 %v1052
      %v1054 = vand.u32 %v180, 4294901760
      %1055 = vmatmul.mubr.f32.gmra.mrb[0].mxu0 %v1054
      %v1056 = vpop.f32.mrb[0].mxu0
      %v1057 = vadd.f32 %v882, %v1056
      %v1058 = vpop.f32.mrb[0].mxu0
      %1059 = vdwg.mxu0
      %1060 = vmatprep.subr.mxu0 0.0
      %v1061 = vand.u32 %v184, 4294901760
      %1062 = vmatpush1.msra.mxu0 %v1061
      %1063 = vmatprep.subr.mxu0 0.0
      %v1064 = vand.u32 %v185, 4294901760
      %1065 = vmatpush1.msra.mxu0 %v1064
      %1066 = vmatprep.subr.mxu0 0.0
      %v1067 = vand.u32 %v186, 4294901760
      %1068 = vmatpush1.msra.mxu0 %v1067
      %1069 = vmatprep.subr.mxu0 0.0
      %v1070 = vand.u32 %v187, 4294901760
      %1071 = vmatpush1.msra.mxu0 %v1070
      %1072 = vmatprep.subr.mxu0 0.0
      %v1073 = vand.u32 %v188, 4294901760
      %1074 = vmatpush1.msra.mxu0 %v1073
      %1075 = vmatprep.subr.mxu0 0.0
      %v1076 = vand.u32 %v189, 4294901760
      %1077 = vmatpush1.msra.mxu0 %v1076
      %1078 = vmatprep.subr.mxu0 0.0
      %v1079 = vand.u32 %v190, 4294901760
      %1080 = vmatpush1.msra.mxu0 %v1079
      %1081 = vmatprep.subr.mxu0 0.0
      %v1082 = vand.u32 %v191, 4294901760
      %1083 = vmatpush1.msra.mxu0 %v1082
      %1084 = vmatprep.subr.mxu0 0.0
      %v1085 = vand.u32 %v192, 4294901760
      %1086 = vmatpush1.msra.mxu0 %v1085
      %1087 = vmatprep.subr.mxu0 0.0
      %v1088 = vand.u32 %v193, 4294901760
      %1089 = vmatpush1.msra.mxu0 %v1088
      %1090 = vmatprep.subr.mxu0 0.0
      %v1091 = vand.u32 %v194, 4294901760
      %1092 = vmatpush1.msra.mxu0 %v1091
      %1093 = vmatprep.subr.mxu0 0.0
      %v1094 = vand.u32 %v195, 4294901760
      %1095 = vmatpush1.msra.mxu0 %v1094
      %1096 = vmatprep.subr.mxu0 0.0
      %v1097 = vand.u32 %v196, 4294901760
      %1098 = vmatpush1.msra.mxu0 %v1097
      %1099 = vmatprep.subr.mxu0 0.0
      %v1100 = vand.u32 %v197, 4294901760
      %1101 = vmatpush1.msra.mxu0 %v1100
      %1102 = vmatprep.subr.mxu0 0.0
      %v1103 = vand.u32 %v198, 4294901760
      %1104 = vmatpush1.msra.mxu0 %v1103
      %1105 = vmatprep.subr.mxu0 0.0
      %v1106 = vand.u32 %v199, 4294901760
      %1107 = vmatpush1.msra.mxu0 %v1106
      %1108 = vmatprep.subr.mxu0 0.0
      %v1109 = vand.u32 %v200, 4294901760
      %1110 = vmatpush1.msra.mxu0 %v1109
      %1111 = vmatprep.subr.mxu0 0.0
      %v1112 = vand.u32 %v201, 4294901760
      %1113 = vmatpush1.msra.mxu0 %v1112
      %1114 = vmatprep.subr.mxu0 0.0
      %v1115 = vand.u32 %v202, 4294901760
      %1116 = vmatpush1.msra.mxu0 %v1115
      %1117 = vmatprep.subr.mxu0 0.0
      %v1118 = vand.u32 %v203, 4294901760
      %1119 = vmatpush1.msra.mxu0 %v1118
      %1120 = vmatprep.subr.mxu0 0.0
      %v1121 = vand.u32 %v204, 4294901760
      %1122 = vmatpush1.msra.mxu0 %v1121
      %1123 = vmatprep.subr.mxu0 0.0
      %v1124 = vand.u32 %v205, 4294901760
      %1125 = vmatpush1.msra.mxu0 %v1124
      %1126 = vmatprep.subr.mxu0 0.0
      %v1127 = vand.u32 %v206, 4294901760
      %1128 = vmatpush1.msra.mxu0 %v1127
      %1129 = vmatprep.subr.mxu0 0.0
      %v1130 = vand.u32 %v207, 4294901760
      %1131 = vmatpush1.msra.mxu0 %v1130
      %1132 = vmatprep.subr.mxu0 0.0
      %v1133 = vand.u32 %v208, 4294901760
      %1134 = vmatpush1.msra.mxu0 %v1133
      %1135 = vmatprep.subr.mxu0 0.0
      %v1136 = vand.u32 %v209, 4294901760
      %1137 = vmatpush1.msra.mxu0 %v1136
      %1138 = vmatprep.subr.mxu0 0.0
      %v1139 = vand.u32 %v210, 4294901760
      %1140 = vmatpush1.msra.mxu0 %v1139
      %1141 = vmatprep.subr.mxu0 0.0
      %v1142 = vand.u32 %v211, 4294901760
      %1143 = vmatpush1.msra.mxu0 %v1142
      %1144 = vmatprep.subr.mxu0 0.0
      %v1145 = vand.u32 %v212, 4294901760
      %1146 = vmatpush1.msra.mxu0 %v1145
      %1147 = vmatprep.subr.mxu0 0.0
      %v1148 = vand.u32 %v213, 4294901760
      %1149 = vmatpush1.msra.mxu0 %v1148
      %1150 = vmatprep.subr.mxu0 0.0
      %v1151 = vand.u32 %v214, 4294901760
      %1152 = vmatpush1.msra.mxu0 %v1151
      %1153 = vmatprep.subr.mxu0 0.0
      %v1154 = vand.u32 %v215, 4294901760
      %1155 = vmatpush1.msra.mxu0 %v1154
      %v1156 = vand.u32 %v177, 4294901760
      %1157 = vmatprep.mubr.f32.mxu0 %v1156
      %v1158 = vand.u32 %v176, 4294901760
      %1159 = vmatmul.mubr.f32.gmra.mrb[0].mxu0 %v1158
      %v1160 = vpop.f32.mrb[0].mxu0
      %v1161 = vadd.f32 %v1050, %v1160
      %v1162 = vpop.f32.mrb[0].mxu0
      %v1163 = vand.u32 %v181, 4294901760
      %1164 = vmatprep.mubr.f32.mxu0 %v1163
      %v1165 = vand.u32 %v180, 4294901760
      %1166 = vmatmul.mubr.f32.gmra.mrb[0].mxu0 %v1165
      %v1167 = vpop.f32.mrb[0].mxu0
      %v1168 = vadd.f32 %v1057, %v1167
      %v1169 = vpop.f32.mrb[0].mxu0
      %1170 = vdwg.mxu0
      %1171 = vmatprep.subr.mxu0 0.0
      %v1172 = vand.u32 %v216, 4294901760
      %1173 = vmatpush1.msra.mxu0 %v1172
      %1174 = vmatprep.subr.mxu0 0.0
      %v1175 = vand.u32 %v217, 4294901760
      %1176 = vmatpush1.msra.mxu0 %v1175
      %1177 = vmatprep.subr.mxu0 0.0
      %v1178 = vand.u32 %v218, 4294901760
      %1179 = vmatpush1.msra.mxu0 %v1178
      %1180 = vmatprep.subr.mxu0 0.0
      %v1181 = vand.u32 %v219, 4294901760
      %1182 = vmatpush1.msra.mxu0 %v1181
      %1183 = vmatprep.subr.mxu0 0.0
      %v1184 = vand.u32 %v220, 4294901760
      %1185 = vmatpush1.msra.mxu0 %v1184
      %1186 = vmatprep.subr.mxu0 0.0
      %v1187 = vand.u32 %v221, 4294901760
      %1188 = vmatpush1.msra.mxu0 %v1187
      %1189 = vmatprep.subr.mxu0 0.0
      %v1190 = vand.u32 %v222, 4294901760
      %1191 = vmatpush1.msra.mxu0 %v1190
      %1192 = vmatprep.subr.mxu0 0.0
      %v1193 = vand.u32 %v223, 4294901760
      %1194 = vmatpush1.msra.mxu0 %v1193
      %1195 = vmatprep.subr.mxu0 0.0
      %v1196 = vand.u32 %v224, 4294901760
      %1197 = vmatpush1.msra.mxu0 %v1196
      %1198 = vmatprep.subr.mxu0 0.0
      %v1199 = vand.u32 %v225, 4294901760
      %1200 = vmatpush1.msra.mxu0 %v1199
      %1201 = vmatprep.subr.mxu0 0.0
      %v1202 = vand.u32 %v226, 4294901760
      %1203 = vmatpush1.msra.mxu0 %v1202
      %1204 = vmatprep.subr.mxu0 0.0
      %v1205 = vand.u32 %v227, 4294901760
      %1206 = vmatpush1.msra.mxu0 %v1205
      %1207 = vmatprep.subr.mxu0 0.0
      %v1208 = vand.u32 %v228, 4294901760
      %1209 = vmatpush1.msra.mxu0 %v1208
      %1210 = vmatprep.subr.mxu0 0.0
      %v1211 = vand.u32 %v229, 4294901760
      %1212 = vmatpush1.msra.mxu0 %v1211
      %1213 = vmatprep.subr.mxu0 0.0
      %v1214 = vand.u32 %v230, 4294901760
      %1215 = vmatpush1.msra.mxu0 %v1214
      %1216 = vmatprep.subr.mxu0 0.0
      %v1217 = vand.u32 %v231, 4294901760
      %1218 = vmatpush1.msra.mxu0 %v1217
      %1219 = vmatprep.subr.mxu0 0.0
      %v1220 = vand.u32 %v232, 4294901760
      %1221 = vmatpush1.msra.mxu0 %v1220
      %1222 = vmatprep.subr.mxu0 0.0
      %v1223 = vand.u32 %v233, 4294901760
      %1224 = vmatpush1.msra.mxu0 %v1223
      %1225 = vmatprep.subr.mxu0 0.0
      %v1226 = vand.u32 %v234, 4294901760
      %1227 = vmatpush1.msra.mxu0 %v1226
      %1228 = vmatprep.subr.mxu0 0.0
      %v1229 = vand.u32 %v235, 4294901760
      %1230 = vmatpush1.msra.mxu0 %v1229
      %1231 = vmatprep.subr.mxu0 0.0
      %v1232 = vand.u32 %v236, 4294901760
      %1233 = vmatpush1.msra.mxu0 %v1232
      %1234 = vmatprep.subr.mxu0 0.0
      %v1235 = vand.u32 %v237, 4294901760
      %1236 = vmatpush1.msra.mxu0 %v1235
      %1237 = vmatprep.subr.mxu0 0.0
      %v1238 = vand.u32 %v238, 4294901760
      %1239 = vmatpush1.msra.mxu0 %v1238
      %1240 = vmatprep.subr.mxu0 0.0
      %v1241 = vand.u32 %v239, 4294901760
      %1242 = vmatpush1.msra.mxu0 %v1241
      %1243 = vmatprep.subr.mxu0 0.0
      %v1244 = vand.u32 %v240, 4294901760
      %1245 = vmatpush1.msra.mxu0 %v1244
      %1246 = vmatprep.subr.mxu0 0.0
      %v1247 = vand.u32 %v241, 4294901760
      %1248 = vmatpush1.msra.mxu0 %v1247
      %1249 = vmatprep.subr.mxu0 0.0
      %v1250 = vand.u32 %v242, 4294901760
      %1251 = vmatpush1.msra.mxu0 %v1250
      %1252 = vmatprep.subr.mxu0 0.0
      %v1253 = vand.u32 %v243, 4294901760
      %1254 = vmatpush1.msra.mxu0 %v1253
      %1255 = vmatprep.subr.mxu0 0.0
      %v1256 = vand.u32 %v244, 4294901760
      %1257 = vmatpush1.msra.mxu0 %v1256
      %1258 = vmatprep.subr.mxu0 0.0
      %v1259 = vand.u32 %v245, 4294901760
      %1260 = vmatpush1.msra.mxu0 %v1259
      %1261 = vmatprep.subr.mxu0 0.0
      %v1262 = vand.u32 %v246, 4294901760
      %1263 = vmatpush1.msra.mxu0 %v1262
      %1264 = vmatprep.subr.mxu0 0.0
      %v1265 = vand.u32 %v247, 4294901760
      %1266 = vmatpush1.msra.mxu0 %v1265
      %v1267 = vand.u32 %v179, 4294901760
      %v1268 = vsub.f32 %v179, %v1267
      %v1269 = vand.u32 %v1268, 4294901760
      %v1270 = vsub.f32 %v1268, %v1269
      %v1271 = vand.u32 %v1270, 4294901760
      %1272 = vmatprep.mubr.f32.mxu0 %v1271
      %v1273 = vand.u32 %v178, 4294901760
      %v1274 = vsub.f32 %v178, %v1273
      %v1275 = vand.u32 %v1274, 4294901760
      %v1276 = vsub.f32 %v1274, %v1275
      %v1277 = vand.u32 %v1276, 4294901760
      %1278 = vmatmul.mubr.f32.gmra.mrb[0].mxu0 %v1277
      %v1279 = vpop.f32.mrb[0].mxu0
      %v1280 = vadd.f32 %v1161, %v1279
      %v1281 = vpop.f32.mrb[0].mxu0
      %v1282 = vand.u32 %v183, 4294901760
      %v1283 = vsub.f32 %v183, %v1282
      %v1284 = vand.u32 %v1283, 4294901760
      %v1285 = vsub.f32 %v1283, %v1284
      %v1286 = vand.u32 %v1285, 4294901760
      %1287 = vmatprep.mubr.f32.mxu0 %v1286
      %v1288 = vand.u32 %v182, 4294901760
      %v1289 = vsub.f32 %v182, %v1288
      %v1290 = vand.u32 %v1289, 4294901760
      %v1291 = vsub.f32 %v1289, %v1290
      %v1292 = vand.u32 %v1291, 4294901760
      %1293 = vmatmul.mubr.f32.gmra.mrb[0].mxu0 %v1292
      %v1294 = vpop.f32.mrb[0].mxu0
      %v1295 = vadd.f32 %v1168, %v1294
      %v1296 = vpop.f32.mrb[0].mxu0
      %1297 = vdwg.mxu0
      %1298 = vmatprep.subr.mxu0 0.0
      %v1299 = vand.u32 %v216, 4294901760
      %v1300 = vsub.f32 %v216, %v1299
      %v1301 = vand.u32 %v1300, 4294901760
      %v1302 = vsub.f32 %v1300, %v1301
      %v1303 = vand.u32 %v1302, 4294901760
      %1304 = vmatpush1.msra.mxu0 %v1303
      %1305 = vmatprep.subr.mxu0 0.0
      %v1306 = vand.u32 %v217, 4294901760
      %v1307 = vsub.f32 %v217, %v1306
      %v1308 = vand.u32 %v1307, 4294901760
      %v1309 = vsub.f32 %v1307, %v1308
      %v1310 = vand.u32 %v1309, 4294901760
      %1311 = vmatpush1.msra.mxu0 %v1310
      %1312 = vmatprep.subr.mxu0 0.0
      %v1313 = vand.u32 %v218, 4294901760
      %v1314 = vsub.f32 %v218, %v1313
      %v1315 = vand.u32 %v1314, 4294901760
      %v1316 = vsub.f32 %v1314, %v1315
      %v1317 = vand.u32 %v1316, 4294901760
      %1318 = vmatpush1.msra.mxu0 %v1317
      %1319 = vmatprep.subr.mxu0 0.0
      %v1320 = vand.u32 %v219, 4294901760
      %v1321 = vsub.f32 %v219, %v1320
      %v1322 = vand.u32 %v1321, 4294901760
      %v1323 = vsub.f32 %v1321, %v1322
      %v1324 = vand.u32 %v1323, 4294901760
      %1325 = vmatpush1.msra.mxu0 %v1324
      %1326 = vmatprep.subr.mxu0 0.0
      %v1327 = vand.u32 %v220, 4294901760
      %v1328 = vsub.f32 %v220, %v1327
      %v1329 = vand.u32 %v1328, 4294901760
      %v1330 = vsub.f32 %v1328, %v1329
      %v1331 = vand.u32 %v1330, 4294901760
      %1332 = vmatpush1.msra.mxu0 %v1331
      %1333 = vmatprep.subr.mxu0 0.0
      %v1334 = vand.u32 %v221, 4294901760
      %v1335 = vsub.f32 %v221, %v1334
      %v1336 = vand.u32 %v1335, 4294901760
      %v1337 = vsub.f32 %v1335, %v1336
      %v1338 = vand.u32 %v1337, 4294901760
      %1339 = vmatpush1.msra.mxu0 %v1338
      %1340 = vmatprep.subr.mxu0 0.0
      %v1341 = vand.u32 %v222, 4294901760
      %v1342 = vsub.f32 %v222, %v1341
      %v1343 = vand.u32 %v1342, 4294901760
      %v1344 = vsub.f32 %v1342, %v1343
      %v1345 = vand.u32 %v1344, 4294901760
      %1346 = vmatpush1.msra.mxu0 %v1345
      %1347 = vmatprep.subr.mxu0 0.0
      %v1348 = vand.u32 %v223, 4294901760
      %v1349 = vsub.f32 %v223, %v1348
      %v1350 = vand.u32 %v1349, 4294901760
      %v1351 = vsub.f32 %v1349, %v1350
      %v1352 = vand.u32 %v1351, 4294901760
      %1353 = vmatpush1.msra.mxu0 %v1352
      %1354 = vmatprep.subr.mxu0 0.0
      %v1355 = vand.u32 %v224, 4294901760
      %v1356 = vsub.f32 %v224, %v1355
      %v1357 = vand.u32 %v1356, 4294901760
      %v1358 = vsub.f32 %v1356, %v1357
      %v1359 = vand.u32 %v1358, 4294901760
      %1360 = vmatpush1.msra.mxu0 %v1359
      %1361 = vmatprep.subr.mxu0 0.0
      %v1362 = vand.u32 %v225, 4294901760
      %v1363 = vsub.f32 %v225, %v1362
      %v1364 = vand.u32 %v1363, 4294901760
      %v1365 = vsub.f32 %v1363, %v1364
      %v1366 = vand.u32 %v1365, 4294901760
      %1367 = vmatpush1.msra.mxu0 %v1366
      %1368 = vmatprep.subr.mxu0 0.0
      %v1369 = vand.u32 %v226, 4294901760
      %v1370 = vsub.f32 %v226, %v1369
      %v1371 = vand.u32 %v1370, 4294901760
      %v1372 = vsub.f32 %v1370, %v1371
      %v1373 = vand.u32 %v1372, 4294901760
      %1374 = vmatpush1.msra.mxu0 %v1373
      %1375 = vmatprep.subr.mxu0 0.0
      %v1376 = vand.u32 %v227, 4294901760
      %v1377 = vsub.f32 %v227, %v1376
      %v1378 = vand.u32 %v1377, 4294901760
      %v1379 = vsub.f32 %v1377, %v1378
      %v1380 = vand.u32 %v1379, 4294901760
      %1381 = vmatpush1.msra.mxu0 %v1380
      %1382 = vmatprep.subr.mxu0 0.0
      %v1383 = vand.u32 %v228, 4294901760
      %v1384 = vsub.f32 %v228, %v1383
      %v1385 = vand.u32 %v1384, 4294901760
      %v1386 = vsub.f32 %v1384, %v1385
      %v1387 = vand.u32 %v1386, 4294901760
      %1388 = vmatpush1.msra.mxu0 %v1387
      %1389 = vmatprep.subr.mxu0 0.0
      %v1390 = vand.u32 %v229, 4294901760
      %v1391 = vsub.f32 %v229, %v1390
      %v1392 = vand.u32 %v1391, 4294901760
      %v1393 = vsub.f32 %v1391, %v1392
      %v1394 = vand.u32 %v1393, 4294901760
      %1395 = vmatpush1.msra.mxu0 %v1394
      %1396 = vmatprep.subr.mxu0 0.0
      %v1397 = vand.u32 %v230, 4294901760
      %v1398 = vsub.f32 %v230, %v1397
      %v1399 = vand.u32 %v1398, 4294901760
      %v1400 = vsub.f32 %v1398, %v1399
      %v1401 = vand.u32 %v1400, 4294901760
      %1402 = vmatpush1.msra.mxu0 %v1401
      %1403 = vmatprep.subr.mxu0 0.0
      %v1404 = vand.u32 %v231, 4294901760
      %v1405 = vsub.f32 %v231, %v1404
      %v1406 = vand.u32 %v1405, 4294901760
      %v1407 = vsub.f32 %v1405, %v1406
      %v1408 = vand.u32 %v1407, 4294901760
      %1409 = vmatpush1.msra.mxu0 %v1408
      %1410 = vmatprep.subr.mxu0 0.0
      %v1411 = vand.u32 %v232, 4294901760
      %v1412 = vsub.f32 %v232, %v1411
      %v1413 = vand.u32 %v1412, 4294901760
      %v1414 = vsub.f32 %v1412, %v1413
      %v1415 = vand.u32 %v1414, 4294901760
      %1416 = vmatpush1.msra.mxu0 %v1415
      %1417 = vmatprep.subr.mxu0 0.0
      %v1418 = vand.u32 %v233, 4294901760
      %v1419 = vsub.f32 %v233, %v1418
      %v1420 = vand.u32 %v1419, 4294901760
      %v1421 = vsub.f32 %v1419, %v1420
      %v1422 = vand.u32 %v1421, 4294901760
      %1423 = vmatpush1.msra.mxu0 %v1422
      %1424 = vmatprep.subr.mxu0 0.0
      %v1425 = vand.u32 %v234, 4294901760
      %v1426 = vsub.f32 %v234, %v1425
      %v1427 = vand.u32 %v1426, 4294901760
      %v1428 = vsub.f32 %v1426, %v1427
      %v1429 = vand.u32 %v1428, 4294901760
      %1430 = vmatpush1.msra.mxu0 %v1429
      %1431 = vmatprep.subr.mxu0 0.0
      %v1432 = vand.u32 %v235, 4294901760
      %v1433 = vsub.f32 %v235, %v1432
      %v1434 = vand.u32 %v1433, 4294901760
      %v1435 = vsub.f32 %v1433, %v1434
      %v1436 = vand.u32 %v1435, 4294901760
      %1437 = vmatpush1.msra.mxu0 %v1436
      %1438 = vmatprep.subr.mxu0 0.0
      %v1439 = vand.u32 %v236, 4294901760
      %v1440 = vsub.f32 %v236, %v1439
      %v1441 = vand.u32 %v1440, 4294901760
      %v1442 = vsub.f32 %v1440, %v1441
      %v1443 = vand.u32 %v1442, 4294901760
      %1444 = vmatpush1.msra.mxu0 %v1443
      %1445 = vmatprep.subr.mxu0 0.0
      %v1446 = vand.u32 %v237, 4294901760
      %v1447 = vsub.f32 %v237, %v1446
      %v1448 = vand.u32 %v1447, 4294901760
      %v1449 = vsub.f32 %v1447, %v1448
      %v1450 = vand.u32 %v1449, 4294901760
      %1451 = vmatpush1.msra.mxu0 %v1450
      %1452 = vmatprep.subr.mxu0 0.0
      %v1453 = vand.u32 %v238, 4294901760
      %v1454 = vsub.f32 %v238, %v1453
      %v1455 = vand.u32 %v1454, 4294901760
      %v1456 = vsub.f32 %v1454, %v1455
      %v1457 = vand.u32 %v1456, 4294901760
      %1458 = vmatpush1.msra.mxu0 %v1457
      %1459 = vmatprep.subr.mxu0 0.0
      %v1460 = vand.u32 %v239, 4294901760
      %v1461 = vsub.f32 %v239, %v1460
      %v1462 = vand.u32 %v1461, 4294901760
      %v1463 = vsub.f32 %v1461, %v1462
      %v1464 = vand.u32 %v1463, 4294901760
      %1465 = vmatpush1.msra.mxu0 %v1464
      %1466 = vmatprep.subr.mxu0 0.0
      %v1467 = vand.u32 %v240, 4294901760
      %v1468 = vsub.f32 %v240, %v1467
      %v1469 = vand.u32 %v1468, 4294901760
      %v1470 = vsub.f32 %v1468, %v1469
      %v1471 = vand.u32 %v1470, 4294901760
      %1472 = vmatpush1.msra.mxu0 %v1471
      %1473 = vmatprep.subr.mxu0 0.0
      %v1474 = vand.u32 %v241, 4294901760
      %v1475 = vsub.f32 %v241, %v1474
      %v1476 = vand.u32 %v1475, 4294901760
      %v1477 = vsub.f32 %v1475, %v1476
      %v1478 = vand.u32 %v1477, 4294901760
      %1479 = vmatpush1.msra.mxu0 %v1478
      %1480 = vmatprep.subr.mxu0 0.0
      %v1481 = vand.u32 %v242, 4294901760
      %v1482 = vsub.f32 %v242, %v1481
      %v1483 = vand.u32 %v1482, 4294901760
      %v1484 = vsub.f32 %v1482, %v1483
      %v1485 = vand.u32 %v1484, 4294901760
      %1486 = vmatpush1.msra.mxu0 %v1485
      %1487 = vmatprep.subr.mxu0 0.0
      %v1488 = vand.u32 %v243, 4294901760
      %v1489 = vsub.f32 %v243, %v1488
      %v1490 = vand.u32 %v1489, 4294901760
      %v1491 = vsub.f32 %v1489, %v1490
      %v1492 = vand.u32 %v1491, 4294901760
      %1493 = vmatpush1.msra.mxu0 %v1492
      %1494 = vmatprep.subr.mxu0 0.0
      %v1495 = vand.u32 %v244, 4294901760
      %v1496 = vsub.f32 %v244, %v1495
      %v1497 = vand.u32 %v1496, 4294901760
      %v1498 = vsub.f32 %v1496, %v1497
      %v1499 = vand.u32 %v1498, 4294901760
      %1500 = vmatpush1.msra.mxu0 %v1499
      %1501 = vmatprep.subr.mxu0 0.0
      %v1502 = vand.u32 %v245, 4294901760
      %v1503 = vsub.f32 %v245, %v1502
      %v1504 = vand.u32 %v1503, 4294901760
      %v1505 = vsub.f32 %v1503, %v1504
      %v1506 = vand.u32 %v1505, 4294901760
      %1507 = vmatpush1.msra.mxu0 %v1506
      %1508 = vmatprep.subr.mxu0 0.0
      %v1509 = vand.u32 %v246, 4294901760
      %v1510 = vsub.f32 %v246, %v1509
      %v1511 = vand.u32 %v1510, 4294901760
      %v1512 = vsub.f32 %v1510, %v1511
      %v1513 = vand.u32 %v1512, 4294901760
      %1514 = vmatpush1.msra.mxu0 %v1513
      %1515 = vmatprep.subr.mxu0 0.0
      %v1516 = vand.u32 %v247, 4294901760
      %v1517 = vsub.f32 %v247, %v1516
      %v1518 = vand.u32 %v1517, 4294901760
      %v1519 = vsub.f32 %v1517, %v1518
      %v1520 = vand.u32 %v1519, 4294901760
      %1521 = vmatpush1.msra.mxu0 %v1520
      %v1522 = vand.u32 %v179, 4294901760
      %1523 = vmatprep.mubr.f32.mxu0 %v1522
      %v1524 = vand.u32 %v178, 4294901760
      %1525 = vmatmul.mubr.f32.gmra.mrb[0].mxu0 %v1524
      %v1526 = vpop.f32.mrb[0].mxu0
      %v1527 = vadd.f32 %v1280, %v1526
      %v1528 = vpop.f32.mrb[0].mxu0
      %v1529 = vand.u32 %v183, 4294901760
      %1530 = vmatprep.mubr.f32.mxu0 %v1529
      %v1531 = vand.u32 %v182, 4294901760
      %1532 = vmatmul.mubr.f32.gmra.mrb[0].mxu0 %v1531
      %v1533 = vpop.f32.mrb[0].mxu0
      %v1534 = vadd.f32 %v1295, %v1533
      %v1535 = vpop.f32.mrb[0].mxu0
      %1536 = vdwg.mxu0
      %1537 = vmatprep.subr.mxu0 0.0
      %v1538 = vand.u32 %v216, 4294901760
      %v1539 = vsub.f32 %v216, %v1538
      %1540 = vmatpush1.msra.mxu0 %v1539
      %1541 = vmatprep.subr.mxu0 0.0
      %v1542 = vand.u32 %v217, 4294901760
      %v1543 = vsub.f32 %v217, %v1542
      %1544 = vmatpush1.msra.mxu0 %v1543
      %1545 = vmatprep.subr.mxu0 0.0
      %v1546 = vand.u32 %v218, 4294901760
      %v1547 = vsub.f32 %v218, %v1546
      %1548 = vmatpush1.msra.mxu0 %v1547
      %1549 = vmatprep.subr.mxu0 0.0
      %v1550 = vand.u32 %v219, 4294901760
      %v1551 = vsub.f32 %v219, %v1550
      %1552 = vmatpush1.msra.mxu0 %v1551
      %1553 = vmatprep.subr.mxu0 0.0
      %v1554 = vand.u32 %v220, 4294901760
      %v1555 = vsub.f32 %v220, %v1554
      %1556 = vmatpush1.msra.mxu0 %v1555
      %1557 = vmatprep.subr.mxu0 0.0
      %v1558 = vand.u32 %v221, 4294901760
      %v1559 = vsub.f32 %v221, %v1558
      %1560 = vmatpush1.msra.mxu0 %v1559
      %1561 = vmatprep.subr.mxu0 0.0
      %v1562 = vand.u32 %v222, 4294901760
      %v1563 = vsub.f32 %v222, %v1562
      %1564 = vmatpush1.msra.mxu0 %v1563
      %1565 = vmatprep.subr.mxu0 0.0
      %v1566 = vand.u32 %v223, 4294901760
      %v1567 = vsub.f32 %v223, %v1566
      %1568 = vmatpush1.msra.mxu0 %v1567
      %1569 = vmatprep.subr.mxu0 0.0
      %v1570 = vand.u32 %v224, 4294901760
      %v1571 = vsub.f32 %v224, %v1570
      %1572 = vmatpush1.msra.mxu0 %v1571
      %1573 = vmatprep.subr.mxu0 0.0
      %v1574 = vand.u32 %v225, 4294901760
      %v1575 = vsub.f32 %v225, %v1574
      %1576 = vmatpush1.msra.mxu0 %v1575
      %1577 = vmatprep.subr.mxu0 0.0
      %v1578 = vand.u32 %v226, 4294901760
      %v1579 = vsub.f32 %v226, %v1578
      %1580 = vmatpush1.msra.mxu0 %v1579
      %1581 = vmatprep.subr.mxu0 0.0
      %v1582 = vand.u32 %v227, 4294901760
      %v1583 = vsub.f32 %v227, %v1582
      %1584 = vmatpush1.msra.mxu0 %v1583
      %1585 = vmatprep.subr.mxu0 0.0
      %v1586 = vand.u32 %v228, 4294901760
      %v1587 = vsub.f32 %v228, %v1586
      %1588 = vmatpush1.msra.mxu0 %v1587
      %1589 = vmatprep.subr.mxu0 0.0
      %v1590 = vand.u32 %v229, 4294901760
      %v1591 = vsub.f32 %v229, %v1590
      %1592 = vmatpush1.msra.mxu0 %v1591
      %1593 = vmatprep.subr.mxu0 0.0
      %v1594 = vand.u32 %v230, 4294901760
      %v1595 = vsub.f32 %v230, %v1594
      %1596 = vmatpush1.msra.mxu0 %v1595
      %1597 = vmatprep.subr.mxu0 0.0
      %v1598 = vand.u32 %v231, 4294901760
      %v1599 = vsub.f32 %v231, %v1598
      %1600 = vmatpush1.msra.mxu0 %v1599
      %1601 = vmatprep.subr.mxu0 0.0
      %v1602 = vand.u32 %v232, 4294901760
      %v1603 = vsub.f32 %v232, %v1602
      %1604 = vmatpush1.msra.mxu0 %v1603
      %1605 = vmatprep.subr.mxu0 0.0
      %v1606 = vand.u32 %v233, 4294901760
      %v1607 = vsub.f32 %v233, %v1606
      %1608 = vmatpush1.msra.mxu0 %v1607
      %1609 = vmatprep.subr.mxu0 0.0
      %v1610 = vand.u32 %v234, 4294901760
      %v1611 = vsub.f32 %v234, %v1610
      %1612 = vmatpush1.msra.mxu0 %v1611
      %1613 = vmatprep.subr.mxu0 0.0
      %v1614 = vand.u32 %v235, 4294901760
      %v1615 = vsub.f32 %v235, %v1614
      %1616 = vmatpush1.msra.mxu0 %v1615
      %1617 = vmatprep.subr.mxu0 0.0
      %v1618 = vand.u32 %v236, 4294901760
      %v1619 = vsub.f32 %v236, %v1618
      %1620 = vmatpush1.msra.mxu0 %v1619
      %1621 = vmatprep.subr.mxu0 0.0
      %v1622 = vand.u32 %v237, 4294901760
      %v1623 = vsub.f32 %v237, %v1622
      %1624 = vmatpush1.msra.mxu0 %v1623
      %1625 = vmatprep.subr.mxu0 0.0
      %v1626 = vand.u32 %v238, 4294901760
      %v1627 = vsub.f32 %v238, %v1626
      %1628 = vmatpush1.msra.mxu0 %v1627
      %1629 = vmatprep.subr.mxu0 0.0
      %v1630 = vand.u32 %v239, 4294901760
      %v1631 = vsub.f32 %v239, %v1630
      %1632 = vmatpush1.msra.mxu0 %v1631
      %1633 = vmatprep.subr.mxu0 0.0
      %v1634 = vand.u32 %v240, 4294901760
      %v1635 = vsub.f32 %v240, %v1634
      %1636 = vmatpush1.msra.mxu0 %v1635
      %1637 = vmatprep.subr.mxu0 0.0
      %v1638 = vand.u32 %v241, 4294901760
      %v1639 = vsub.f32 %v241, %v1638
      %1640 = vmatpush1.msra.mxu0 %v1639
      %1641 = vmatprep.subr.mxu0 0.0
      %v1642 = vand.u32 %v242, 4294901760
      %v1643 = vsub.f32 %v242, %v1642
      %1644 = vmatpush1.msra.mxu0 %v1643
      %1645 = vmatprep.subr.mxu0 0.0
      %v1646 = vand.u32 %v243, 4294901760
      %v1647 = vsub.f32 %v243, %v1646
      %1648 = vmatpush1.msra.mxu0 %v1647
      %1649 = vmatprep.subr.mxu0 0.0
      %v1650 = vand.u32 %v244, 4294901760
      %v1651 = vsub.f32 %v244, %v1650
      %1652 = vmatpush1.msra.mxu0 %v1651
      %1653 = vmatprep.subr.mxu0 0.0
      %v1654 = vand.u32 %v245, 4294901760
      %v1655 = vsub.f32 %v245, %v1654
      %1656 = vmatpush1.msra.mxu0 %v1655
      %1657 = vmatprep.subr.mxu0 0.0
      %v1658 = vand.u32 %v246, 4294901760
      %v1659 = vsub.f32 %v246, %v1658
      %1660 = vmatpush1.msra.mxu0 %v1659
      %1661 = vmatprep.subr.mxu0 0.0
      %v1662 = vand.u32 %v247, 4294901760
      %v1663 = vsub.f32 %v247, %v1662
      %1664 = vmatpush1.msra.mxu0 %v1663
      %v1665 = vand.u32 %v179, 4294901760
      %v1666 = vsub.f32 %v179, %v1665
      %1667 = vmatprep.mubr.f32.mxu0 %v1666
      %v1668 = vand.u32 %v178, 4294901760
      %v1669 = vsub.f32 %v178, %v1668
      %1670 = vmatmul.mubr.f32.gmra.mrb[0].mxu0 %v1669
      %v1671 = vpop.f32.mrb[0].mxu0
      %v1672 = vadd.f32 %v1527, %v1671
      %v1673 = vpop.f32.mrb[0].mxu0
      %v1674 = vand.u32 %v183, 4294901760
      %v1675 = vsub.f32 %v183, %v1674
      %1676 = vmatprep.mubr.f32.mxu0 %v1675
      %v1677 = vand.u32 %v182, 4294901760
      %v1678 = vsub.f32 %v182, %v1677
      %1679 = vmatmul.mubr.f32.gmra.mrb[0].mxu0 %v1678
      %v1680 = vpop.f32.mrb[0].mxu0
      %v1681 = vadd.f32 %v1534, %v1680
      %v1682 = vpop.f32.mrb[0].mxu0
      %1683 = vdwg.mxu0
      %1684 = vmatprep.subr.mxu0 0.0
      %v1685 = vand.u32 %v216, 4294901760
      %1686 = vmatpush1.msra.mxu0 %v1685
      %1687 = vmatprep.subr.mxu0 0.0
      %v1688 = vand.u32 %v217, 4294901760
      %1689 = vmatpush1.msra.mxu0 %v1688
      %1690 = vmatprep.subr.mxu0 0.0
      %v1691 = vand.u32 %v218, 4294901760
      %1692 = vmatpush1.msra.mxu0 %v1691
      %1693 = vmatprep.subr.mxu0 0.0
      %v1694 = vand.u32 %v219, 4294901760
      %1695 = vmatpush1.msra.mxu0 %v1694
      %1696 = vmatprep.subr.mxu0 0.0
      %v1697 = vand.u32 %v220, 4294901760
      %1698 = vmatpush1.msra.mxu0 %v1697
      %1699 = vmatprep.subr.mxu0 0.0
      %v1700 = vand.u32 %v221, 4294901760
      %1701 = vmatpush1.msra.mxu0 %v1700
      %1702 = vmatprep.subr.mxu0 0.0
      %v1703 = vand.u32 %v222, 4294901760
      %1704 = vmatpush1.msra.mxu0 %v1703
      %1705 = vmatprep.subr.mxu0 0.0
      %v1706 = vand.u32 %v223, 4294901760
      %1707 = vmatpush1.msra.mxu0 %v1706
      %1708 = vmatprep.subr.mxu0 0.0
      %v1709 = vand.u32 %v224, 4294901760
      %1710 = vmatpush1.msra.mxu0 %v1709
      %1711 = vmatprep.subr.mxu0 0.0
      %v1712 = vand.u32 %v225, 4294901760
      %1713 = vmatpush1.msra.mxu0 %v1712
      %1714 = vmatprep.subr.mxu0 0.0
      %v1715 = vand.u32 %v226, 4294901760
      %1716 = vmatpush1.msra.mxu0 %v1715
      %1717 = vmatprep.subr.mxu0 0.0
      %v1718 = vand.u32 %v227, 4294901760
      %1719 = vmatpush1.msra.mxu0 %v1718
      %1720 = vmatprep.subr.mxu0 0.0
      %v1721 = vand.u32 %v228, 4294901760
      %1722 = vmatpush1.msra.mxu0 %v1721
      %1723 = vmatprep.subr.mxu0 0.0
      %v1724 = vand.u32 %v229, 4294901760
      %1725 = vmatpush1.msra.mxu0 %v1724
      %1726 = vmatprep.subr.mxu0 0.0
      %v1727 = vand.u32 %v230, 4294901760
      %1728 = vmatpush1.msra.mxu0 %v1727
      %1729 = vmatprep.subr.mxu0 0.0
      %v1730 = vand.u32 %v231, 4294901760
      %1731 = vmatpush1.msra.mxu0 %v1730
      %1732 = vmatprep.subr.mxu0 0.0
      %v1733 = vand.u32 %v232, 4294901760
      %1734 = vmatpush1.msra.mxu0 %v1733
      %1735 = vmatprep.subr.mxu0 0.0
      %v1736 = vand.u32 %v233, 4294901760
      %1737 = vmatpush1.msra.mxu0 %v1736
      %1738 = vmatprep.subr.mxu0 0.0
      %v1739 = vand.u32 %v234, 4294901760
      %1740 = vmatpush1.msra.mxu0 %v1739
      %1741 = vmatprep.subr.mxu0 0.0
      %v1742 = vand.u32 %v235, 4294901760
      %1743 = vmatpush1.msra.mxu0 %v1742
      %1744 = vmatprep.subr.mxu0 0.0
      %v1745 = vand.u32 %v236, 4294901760
      %1746 = vmatpush1.msra.mxu0 %v1745
      %1747 = vmatprep.subr.mxu0 0.0
      %v1748 = vand.u32 %v237, 4294901760
      %1749 = vmatpush1.msra.mxu0 %v1748
      %1750 = vmatprep.subr.mxu0 0.0
      %v1751 = vand.u32 %v238, 4294901760
      %1752 = vmatpush1.msra.mxu0 %v1751
      %1753 = vmatprep.subr.mxu0 0.0
      %v1754 = vand.u32 %v239, 4294901760
      %1755 = vmatpush1.msra.mxu0 %v1754
      %1756 = vmatprep.subr.mxu0 0.0
      %v1757 = vand.u32 %v240, 4294901760
      %1758 = vmatpush1.msra.mxu0 %v1757
      %1759 = vmatprep.subr.mxu0 0.0
      %v1760 = vand.u32 %v241, 4294901760
      %1761 = vmatpush1.msra.mxu0 %v1760
      %1762 = vmatprep.subr.mxu0 0.0
      %v1763 = vand.u32 %v242, 4294901760
      %1764 = vmatpush1.msra.mxu0 %v1763
      %1765 = vmatprep.subr.mxu0 0.0
      %v1766 = vand.u32 %v243, 4294901760
      %1767 = vmatpush1.msra.mxu0 %v1766
      %1768 = vmatprep.subr.mxu0 0.0
      %v1769 = vand.u32 %v244, 4294901760
      %1770 = vmatpush1.msra.mxu0 %v1769
      %1771 = vmatprep.subr.mxu0 0.0
      %v1772 = vand.u32 %v245, 4294901760
      %1773 = vmatpush1.msra.mxu0 %v1772
      %1774 = vmatprep.subr.mxu0 0.0
      %v1775 = vand.u32 %v246, 4294901760
      %1776 = vmatpush1.msra.mxu0 %v1775
      %1777 = vmatprep.subr.mxu0 0.0
      %v1778 = vand.u32 %v247, 4294901760
      %1779 = vmatpush1.msra.mxu0 %v1778
      %v1780 = vand.u32 %v179, 4294901760
      %v1781 = vsub.f32 %v179, %v1780
      %v1782 = vand.u32 %v1781, 4294901760
      %1783 = vmatprep.mubr.f32.mxu0 %v1782
      %v1784 = vand.u32 %v178, 4294901760
      %v1785 = vsub.f32 %v178, %v1784
      %v1786 = vand.u32 %v1785, 4294901760
      %1787 = vmatmul.mubr.f32.gmra.mrb[0].mxu0 %v1786
      %v1788 = vpop.f32.mrb[0].mxu0
      %v1789 = vadd.f32 %v1672, %v1788
      %v1790 = vpop.f32.mrb[0].mxu0
      %v1791 = vand.u32 %v183, 4294901760
      %v1792 = vsub.f32 %v183, %v1791
      %v1793 = vand.u32 %v1792, 4294901760
      %1794 = vmatprep.mubr.f32.mxu0 %v1793
      %v1795 = vand.u32 %v182, 4294901760
      %v1796 = vsub.f32 %v182, %v1795
      %v1797 = vand.u32 %v1796, 4294901760
      %1798 = vmatmul.mubr.f32.gmra.mrb[0].mxu0 %v1797
      %v1799 = vpop.f32.mrb[0].mxu0
      %v1800 = vadd.f32 %v1681, %v1799
      %v1801 = vpop.f32.mrb[0].mxu0
      %1802 = vdwg.mxu0
      %1803 = vmatprep.subr.mxu0 0.0
      %v1804 = vand.u32 %v216, 4294901760
      %v1805 = vsub.f32 %v216, %v1804
      %v1806 = vand.u32 %v1805, 4294901760
      %1807 = vmatpush1.msra.mxu0 %v1806
      %1808 = vmatprep.subr.mxu0 0.0
      %v1809 = vand.u32 %v217, 4294901760
      %v1810 = vsub.f32 %v217, %v1809
      %v1811 = vand.u32 %v1810, 4294901760
      %1812 = vmatpush1.msra.mxu0 %v1811
      %1813 = vmatprep.subr.mxu0 0.0
      %v1814 = vand.u32 %v218, 4294901760
      %v1815 = vsub.f32 %v218, %v1814
      %v1816 = vand.u32 %v1815, 4294901760
      %1817 = vmatpush1.msra.mxu0 %v1816
      %1818 = vmatprep.subr.mxu0 0.0
      %v1819 = vand.u32 %v219, 4294901760
      %v1820 = vsub.f32 %v219, %v1819
      %v1821 = vand.u32 %v1820, 4294901760
      %1822 = vmatpush1.msra.mxu0 %v1821
      %1823 = vmatprep.subr.mxu0 0.0
      %v1824 = vand.u32 %v220, 4294901760
      %v1825 = vsub.f32 %v220, %v1824
      %v1826 = vand.u32 %v1825, 4294901760
      %1827 = vmatpush1.msra.mxu0 %v1826
      %1828 = vmatprep.subr.mxu0 0.0
      %v1829 = vand.u32 %v221, 4294901760
      %v1830 = vsub.f32 %v221, %v1829
      %v1831 = vand.u32 %v1830, 4294901760
      %1832 = vmatpush1.msra.mxu0 %v1831
      %1833 = vmatprep.subr.mxu0 0.0
      %v1834 = vand.u32 %v222, 4294901760
      %v1835 = vsub.f32 %v222, %v1834
      %v1836 = vand.u32 %v1835, 4294901760
      %1837 = vmatpush1.msra.mxu0 %v1836
      %1838 = vmatprep.subr.mxu0 0.0
      %v1839 = vand.u32 %v223, 4294901760
      %v1840 = vsub.f32 %v223, %v1839
      %v1841 = vand.u32 %v1840, 4294901760
      %1842 = vmatpush1.msra.mxu0 %v1841
      %1843 = vmatprep.subr.mxu0 0.0
      %v1844 = vand.u32 %v224, 4294901760
      %v1845 = vsub.f32 %v224, %v1844
      %v1846 = vand.u32 %v1845, 4294901760
      %1847 = vmatpush1.msra.mxu0 %v1846
      %1848 = vmatprep.subr.mxu0 0.0
      %v1849 = vand.u32 %v225, 4294901760
      %v1850 = vsub.f32 %v225, %v1849
      %v1851 = vand.u32 %v1850, 4294901760
      %1852 = vmatpush1.msra.mxu0 %v1851
      %1853 = vmatprep.subr.mxu0 0.0
      %v1854 = vand.u32 %v226, 4294901760
      %v1855 = vsub.f32 %v226, %v1854
      %v1856 = vand.u32 %v1855, 4294901760
      %1857 = vmatpush1.msra.mxu0 %v1856
      %1858 = vmatprep.subr.mxu0 0.0
      %v1859 = vand.u32 %v227, 4294901760
      %v1860 = vsub.f32 %v227, %v1859
      %v1861 = vand.u32 %v1860, 4294901760
      %1862 = vmatpush1.msra.mxu0 %v1861
      %1863 = vmatprep.subr.mxu0 0.0
      %v1864 = vand.u32 %v228, 4294901760
      %v1865 = vsub.f32 %v228, %v1864
      %v1866 = vand.u32 %v1865, 4294901760
      %1867 = vmatpush1.msra.mxu0 %v1866
      %1868 = vmatprep.subr.mxu0 0.0
      %v1869 = vand.u32 %v229, 4294901760
      %v1870 = vsub.f32 %v229, %v1869
      %v1871 = vand.u32 %v1870, 4294901760
      %1872 = vmatpush1.msra.mxu0 %v1871
      %1873 = vmatprep.subr.mxu0 0.0
      %v1874 = vand.u32 %v230, 4294901760
      %v1875 = vsub.f32 %v230, %v1874
      %v1876 = vand.u32 %v1875, 4294901760
      %1877 = vmatpush1.msra.mxu0 %v1876
      %1878 = vmatprep.subr.mxu0 0.0
      %v1879 = vand.u32 %v231, 4294901760
      %v1880 = vsub.f32 %v231, %v1879
      %v1881 = vand.u32 %v1880, 4294901760
      %1882 = vmatpush1.msra.mxu0 %v1881
      %1883 = vmatprep.subr.mxu0 0.0
      %v1884 = vand.u32 %v232, 4294901760
      %v1885 = vsub.f32 %v232, %v1884
      %v1886 = vand.u32 %v1885, 4294901760
      %1887 = vmatpush1.msra.mxu0 %v1886
      %1888 = vmatprep.subr.mxu0 0.0
      %v1889 = vand.u32 %v233, 4294901760
      %v1890 = vsub.f32 %v233, %v1889
      %v1891 = vand.u32 %v1890, 4294901760
      %1892 = vmatpush1.msra.mxu0 %v1891
      %1893 = vmatprep.subr.mxu0 0.0
      %v1894 = vand.u32 %v234, 4294901760
      %v1895 = vsub.f32 %v234, %v1894
      %v1896 = vand.u32 %v1895, 4294901760
      %1897 = vmatpush1.msra.mxu0 %v1896
      %1898 = vmatprep.subr.mxu0 0.0
      %v1899 = vand.u32 %v235, 4294901760
      %v1900 = vsub.f32 %v235, %v1899
      %v1901 = vand.u32 %v1900, 4294901760
      %1902 = vmatpush1.msra.mxu0 %v1901
      %1903 = vmatprep.subr.mxu0 0.0
      %v1904 = vand.u32 %v236, 4294901760
      %v1905 = vsub.f32 %v236, %v1904
      %v1906 = vand.u32 %v1905, 4294901760
      %1907 = vmatpush1.msra.mxu0 %v1906
      %1908 = vmatprep.subr.mxu0 0.0
      %v1909 = vand.u32 %v237, 4294901760
      %v1910 = vsub.f32 %v237, %v1909
      %v1911 = vand.u32 %v1910, 4294901760
      %1912 = vmatpush1.msra.mxu0 %v1911
      %1913 = vmatprep.subr.mxu0 0.0
      %v1914 = vand.u32 %v238, 4294901760
      %v1915 = vsub.f32 %v238, %v1914
      %v1916 = vand.u32 %v1915, 4294901760
      %1917 = vmatpush1.msra.mxu0 %v1916
      %1918 = vmatprep.subr.mxu0 0.0
      %v1919 = vand.u32 %v239, 4294901760
      %v1920 = vsub.f32 %v239, %v1919
      %v1921 = vand.u32 %v1920, 4294901760
      %1922 = vmatpush1.msra.mxu0 %v1921
      %1923 = vmatprep.subr.mxu0 0.0
      %v1924 = vand.u32 %v240, 4294901760
      %v1925 = vsub.f32 %v240, %v1924
      %v1926 = vand.u32 %v1925, 4294901760
      %1927 = vmatpush1.msra.mxu0 %v1926
      %1928 = vmatprep.subr.mxu0 0.0
      %v1929 = vand.u32 %v241, 4294901760
      %v1930 = vsub.f32 %v241, %v1929
      %v1931 = vand.u32 %v1930, 4294901760
      %1932 = vmatpush1.msra.mxu0 %v1931
      %1933 = vmatprep.subr.mxu0 0.0
      %v1934 = vand.u32 %v242, 4294901760
      %v1935 = vsub.f32 %v242, %v1934
      %v1936 = vand.u32 %v1935, 4294901760
      %1937 = vmatpush1.msra.mxu0 %v1936
      %1938 = vmatprep.subr.mxu0 0.0
      %v1939 = vand.u32 %v243, 4294901760
      %v1940 = vsub.f32 %v243, %v1939
      %v1941 = vand.u32 %v1940, 4294901760
      %1942 = vmatpush1.msra.mxu0 %v1941
      %1943 = vmatprep.subr.mxu0 0.0
      %v1944 = vand.u32 %v244, 4294901760
      %v1945 = vsub.f32 %v244, %v1944
      %v1946 = vand.u32 %v1945, 4294901760
      %1947 = vmatpush1.msra.mxu0 %v1946
      %1948 = vmatprep.subr.mxu0 0.0
      %v1949 = vand.u32 %v245, 4294901760
      %v1950 = vsub.f32 %v245, %v1949
      %v1951 = vand.u32 %v1950, 4294901760
      %1952 = vmatpush1.msra.mxu0 %v1951
      %1953 = vmatprep.subr.mxu0 0.0
      %v1954 = vand.u32 %v246, 4294901760
      %v1955 = vsub.f32 %v246, %v1954
      %v1956 = vand.u32 %v1955, 4294901760
      %1957 = vmatpush1.msra.mxu0 %v1956
      %1958 = vmatprep.subr.mxu0 0.0
      %v1959 = vand.u32 %v247, 4294901760
      %v1960 = vsub.f32 %v247, %v1959
      %v1961 = vand.u32 %v1960, 4294901760
      %1962 = vmatpush1.msra.mxu0 %v1961
      %v1963 = vand.u32 %v179, 4294901760
      %1964 = vmatprep.mubr.f32.mxu0 %v1963
      %v1965 = vand.u32 %v178, 4294901760
      %1966 = vmatmul.mubr.f32.gmra.mrb[0].mxu0 %v1965
      %v1967 = vpop.f32.mrb[0].mxu0
      %v1968 = vadd.f32 %v1789, %v1967
      %v1969 = vpop.f32.mrb[0].mxu0
      %v1970 = vand.u32 %v183, 4294901760
      %1971 = vmatprep.mubr.f32.mxu0 %v1970
      %v1972 = vand.u32 %v182, 4294901760
      %1973 = vmatmul.mubr.f32.gmra.mrb[0].mxu0 %v1972
      %v1974 = vpop.f32.mrb[0].mxu0
      %v1975 = vadd.f32 %v1800, %v1974
      %v1976 = vpop.f32.mrb[0].mxu0
      %1977 = vdwg.mxu0
      %1978 = vmatprep.subr.mxu0 0.0
      %v1979 = vand.u32 %v216, 4294901760
      %1980 = vmatpush1.msra.mxu0 %v1979
      %1981 = vmatprep.subr.mxu0 0.0
      %v1982 = vand.u32 %v217, 4294901760
      %1983 = vmatpush1.msra.mxu0 %v1982
      %1984 = vmatprep.subr.mxu0 0.0
      %v1985 = vand.u32 %v218, 4294901760
      %1986 = vmatpush1.msra.mxu0 %v1985
      %1987 = vmatprep.subr.mxu0 0.0
      %v1988 = vand.u32 %v219, 4294901760
      %1989 = vmatpush1.msra.mxu0 %v1988
      %1990 = vmatprep.subr.mxu0 0.0
      %v1991 = vand.u32 %v220, 4294901760
      %1992 = vmatpush1.msra.mxu0 %v1991
      %1993 = vmatprep.subr.mxu0 0.0
      %v1994 = vand.u32 %v221, 4294901760
      %1995 = vmatpush1.msra.mxu0 %v1994
      %1996 = vmatprep.subr.mxu0 0.0
      %v1997 = vand.u32 %v222, 4294901760
      %1998 = vmatpush1.msra.mxu0 %v1997
      %1999 = vmatprep.subr.mxu0 0.0
      %v2000 = vand.u32 %v223, 4294901760
      %2001 = vmatpush1.msra.mxu0 %v2000
      %2002 = vmatprep.subr.mxu0 0.0
      %v2003 = vand.u32 %v224, 4294901760
      %2004 = vmatpush1.msra.mxu0 %v2003
      %2005 = vmatprep.subr.mxu0 0.0
      %v2006 = vand.u32 %v225, 4294901760
      %2007 = vmatpush1.msra.mxu0 %v2006
      %2008 = vmatprep.subr.mxu0 0.0
      %v2009 = vand.u32 %v226, 4294901760
      %2010 = vmatpush1.msra.mxu0 %v2009
      %2011 = vmatprep.subr.mxu0 0.0
      %v2012 = vand.u32 %v227, 4294901760
      %2013 = vmatpush1.msra.mxu0 %v2012
      %2014 = vmatprep.subr.mxu0 0.0
      %v2015 = vand.u32 %v228, 4294901760
      %2016 = vmatpush1.msra.mxu0 %v2015
      %2017 = vmatprep.subr.mxu0 0.0
      %v2018 = vand.u32 %v229, 4294901760
      %2019 = vmatpush1.msra.mxu0 %v2018
      %2020 = vmatprep.subr.mxu0 0.0
      %v2021 = vand.u32 %v230, 4294901760
      %2022 = vmatpush1.msra.mxu0 %v2021
      %2023 = vmatprep.subr.mxu0 0.0
      %v2024 = vand.u32 %v231, 4294901760
      %2025 = vmatpush1.msra.mxu0 %v2024
      %2026 = vmatprep.subr.mxu0 0.0
      %v2027 = vand.u32 %v232, 4294901760
      %2028 = vmatpush1.msra.mxu0 %v2027
      %2029 = vmatprep.subr.mxu0 0.0
      %v2030 = vand.u32 %v233, 4294901760
      %2031 = vmatpush1.msra.mxu0 %v2030
      %2032 = vmatprep.subr.mxu0 0.0
      %v2033 = vand.u32 %v234, 4294901760
      %2034 = vmatpush1.msra.mxu0 %v2033
      %2035 = vmatprep.subr.mxu0 0.0
      %v2036 = vand.u32 %v235, 4294901760
      %2037 = vmatpush1.msra.mxu0 %v2036
      %2038 = vmatprep.subr.mxu0 0.0
      %v2039 = vand.u32 %v236, 4294901760
      %2040 = vmatpush1.msra.mxu0 %v2039
      %2041 = vmatprep.subr.mxu0 0.0
      %v2042 = vand.u32 %v237, 4294901760
      %2043 = vmatpush1.msra.mxu0 %v2042
      %2044 = vmatprep.subr.mxu0 0.0
      %v2045 = vand.u32 %v238, 4294901760
      %2046 = vmatpush1.msra.mxu0 %v2045
      %2047 = vmatprep.subr.mxu0 0.0
      %v2048 = vand.u32 %v239, 4294901760
      %2049 = vmatpush1.msra.mxu0 %v2048
      %2050 = vmatprep.subr.mxu0 0.0
      %v2051 = vand.u32 %v240, 4294901760
      %2052 = vmatpush1.msra.mxu0 %v2051
      %2053 = vmatprep.subr.mxu0 0.0
      %v2054 = vand.u32 %v241, 4294901760
      %2055 = vmatpush1.msra.mxu0 %v2054
      %2056 = vmatprep.subr.mxu0 0.0
      %v2057 = vand.u32 %v242, 4294901760
      %2058 = vmatpush1.msra.mxu0 %v2057
      %2059 = vmatprep.subr.mxu0 0.0
      %v2060 = vand.u32 %v243, 4294901760
      %2061 = vmatpush1.msra.mxu0 %v2060
      %2062 = vmatprep.subr.mxu0 0.0
      %v2063 = vand.u32 %v244, 4294901760
      %2064 = vmatpush1.msra.mxu0 %v2063
      %2065 = vmatprep.subr.mxu0 0.0
      %v2066 = vand.u32 %v245, 4294901760
      %2067 = vmatpush1.msra.mxu0 %v2066
      %2068 = vmatprep.subr.mxu0 0.0
      %v2069 = vand.u32 %v246, 4294901760
      %2070 = vmatpush1.msra.mxu0 %v2069
      %2071 = vmatprep.subr.mxu0 0.0
      %v2072 = vand.u32 %v247, 4294901760
      %2073 = vmatpush1.msra.mxu0 %v2072
      %v2074 = vand.u32 %v179, 4294901760
      %2075 = vmatprep.mubr.f32.mxu0 %v2074
      %v2076 = vand.u32 %v178, 4294901760
      %2077 = vmatmul.mubr.f32.gmra.mrb[0].mxu0 %v2076
      %v2078 = vpop.f32.mrb[0].mxu0
      %v2079 = vadd.f32 %v1968, %v2078
      %v2080 = vpop.f32.mrb[0].mxu0
      %v2081 = vand.u32 %v183, 4294901760
      %2082 = vmatprep.mubr.f32.mxu0 %v2081
      %v2083 = vand.u32 %v182, 4294901760
      %2084 = vmatmul.mubr.f32.gmra.mrb[0].mxu0 %v2083
      %v2085 = vpop.f32.mrb[0].mxu0
      %v2086 = vadd.f32 %v1975, %v2085
      %v2087 = vpop.f32.mrb[0].mxu0
      %2088 = vdwg.mxu0
      %v2089 = vmax.f32 %v2079, 0.0
      %v2090 = vmax.f32 %v2086, 0.0
      %v2091 = vld [vmem:[%s2 + $0x208] sm:$0xff]
      %v2092 = vld [vmem:[%s2 + $0x210] sm:$0xff]
      %v2093 = vmul.f32 %v2089, %v2091
      %v2094 = vmul.f32 %v2090, %v2092
      %v2095 = vadd.f32 %v2093, %v2094
      %v2096 = vrot.slane %v2095, 4
      %v2097 = vadd.f32 %v2095, %v2096
      %v2098 = vrot.slane %v2097, 2
      %v2099 = vadd.f32 %v2097, %v2098
      %v2100 = vrot.slane %v2099, 1
      %v2101 = vadd.f32 %v2099, %v2100
      %v2102 = vld [vmem:[%s2 + $0x218] sm:$0xff]
      %v2103 = vld [vmem:[%s2 + $0x220] sm:$0xff]
      %v2104 = vld [vmem:[%s2 + $0x228] sm:$0xff]
      %v2105 = vld [vmem:[%s2 + $0x230] sm:$0xff]
      %v2106 = vld [vmem:[%s2 + $0x238] sm:$0xff]
      %v2107 = vld [vmem:[%s2 + $0x240] sm:$0xff]
      %v2108 = vld [vmem:[%s2 + $0x248] sm:$0xff]
      %v2109 = vld [vmem:[%s2 + $0x250] sm:$0xff]
      %v2110 = vld [vmem:[%s2 + $0x258] sm:$0xff]
      %v2111 = vld [vmem:[%s2 + $0x260] sm:$0xff]
      %v2112 = vld [vmem:[%s2 + $0x268] sm:$0xff]
      %v2113 = vld [vmem:[%s2 + $0x270] sm:$0xff]
      %v2114 = vld [vmem:[%s2 + $0x278] sm:$0xff]
      %v2115 = vld [vmem:[%s2 + $0x280] sm:$0xff]
      %v2116 = vld [vmem:[%s2 + $0x288] sm:$0xff]
      %v2117 = vld [vmem:[%s2 + $0x290] sm:$0xff]
      %v2118 = vld [vmem:[%s2 + $0x298] sm:$0x1]
      %2119 = vmatprep.subr.mxu0 0.0
      %v2120 = vand.u32 %v2102, 4294901760
      %2121 = vmatpush1.msra.mxu0 %v2120
      %2122 = vmatprep.subr.mxu0 0.0
      %v2123 = vand.u32 %v2103, 4294901760
      %2124 = vmatpush1.msra.mxu0 %v2123
      %2125 = vmatprep.subr.mxu0 0.0
      %v2126 = vand.u32 %v2104, 4294901760
      %2127 = vmatpush1.msra.mxu0 %v2126
      %2128 = vmatprep.subr.mxu0 0.0
      %v2129 = vand.u32 %v2105, 4294901760
      %2130 = vmatpush1.msra.mxu0 %v2129
      %2131 = vmatprep.subr.mxu0 0.0
      %v2132 = vand.u32 %v2106, 4294901760
      %2133 = vmatpush1.msra.mxu0 %v2132
      %2134 = vmatprep.subr.mxu0 0.0
      %v2135 = vand.u32 %v2107, 4294901760
      %2136 = vmatpush1.msra.mxu0 %v2135
      %2137 = vmatprep.subr.mxu0 0.0
      %v2138 = vand.u32 %v2108, 4294901760
      %2139 = vmatpush1.msra.mxu0 %v2138
      %2140 = vmatprep.subr.mxu0 0.0
      %v2141 = vand.u32 %v2109, 4294901760
      %2142 = vmatpush1.msra.mxu0 %v2141
      %2143 = vmatprep.subr.mxu0 0.0
      %v2144 = vand.u32 %v2110, 4294901760
      %2145 = vmatpush1.msra.mxu0 %v2144
      %2146 = vmatprep.subr.mxu0 0.0
      %v2147 = vand.u32 %v2111, 4294901760
      %2148 = vmatpush1.msra.mxu0 %v2147
      %2149 = vmatprep.subr.mxu0 0.0
      %v2150 = vand.u32 %v2112, 4294901760
      %2151 = vmatpush1.msra.mxu0 %v2150
      %2152 = vmatprep.subr.mxu0 0.0
      %v2153 = vand.u32 %v2113, 4294901760
      %2154 = vmatpush1.msra.mxu0 %v2153
      %2155 = vmatprep.subr.mxu0 0.0
      %v2156 = vand.u32 %v2114, 4294901760
      %2157 = vmatpush1.msra.mxu0 %v2156
      %2158 = vmatprep.subr.mxu0 0.0
      %v2159 = vand.u32 %v2115, 4294901760
      %2160 = vmatpush1.msra.mxu0 %v2159
      %2161 = vmatprep.subr.mxu0 0.0
      %v2162 = vand.u32 %v2116, 4294901760
      %2163 = vmatpush1.msra.mxu0 %v2162
      %2164 = vmatprep.subr.mxu0 0.0
      %v2165 = vand.u32 %v2117, 4294901760
      %2166 = vmatpush1.msra.mxu0 %v2165
      %2167 = vmatprep.subr.mxu0 0.0
      %2168 = vmatpush1.msra.mxu0 0.0
      %2169 = vmatprep.subr.mxu0 0.0
      %2170 = vmatpush1.msra.mxu0 0.0
      %2171 = vmatprep.subr.mxu0 0.0
      %2172 = vmatpush1.msra.mxu0 0.0
      %2173 = vmatprep.subr.mxu0 0.0
      %2174 = vmatpush1.msra.mxu0 0.0
      %2175 = vmatprep.subr.mxu0 0.0
      %2176 = vmatpush1.msra.mxu0 0.0
      %2177 = vmatprep.subr.mxu0 0.0
      %2178 = vmatpush1.msra.mxu0 0.0
      %2179 = vmatprep.subr.mxu0 0.0
      %2180 = vmatpush1.msra.mxu0 0.0
      %2181 = vmatprep.subr.mxu0 0.0
      %2182 = vmatpush1.msra.mxu0 0.0
      %2183 = vmatprep.subr.mxu0 0.0
      %2184 = vmatpush1.msra.mxu0 0.0
      %2185 = vmatprep.subr.mxu0 0.0
      %2186 = vmatpush1.msra.mxu0 0.0
      %2187 = vmatprep.subr.mxu0 0.0
      %2188 = vmatpush1.msra.mxu0 0.0
      %2189 = vmatprep.subr.mxu0 0.0
      %2190 = vmatpush1.msra.mxu0 0.0
      %2191 = vmatprep.subr.mxu0 0.0
      %2192 = vmatpush1.msra.mxu0 0.0
      %2193 = vmatprep.subr.mxu0 0.0
      %2194 = vmatpush1.msra.mxu0 0.0
      %2195 = vmatprep.subr.mxu0 0.0
      %2196 = vmatpush1.msra.mxu0 0.0
      %2197 = vmatprep.subr.mxu0 0.0
      %2198 = vmatpush1.msra.mxu0 0.0
      %2199 = vmatprep.mubr.f32.mxu0 0.0
      %v2200 = vand.u32 %v2101, 4294901760
      %v2201 = vsub.f32 %v2101, %v2200
      %v2202 = vand.u32 %v2201, 4294901760
      %v2203 = vsub.f32 %v2201, %v2202
      %v2204 = vand.u32 %v2203, 4294901760
      %2205 = vmatmul.mubr.f32.gmra.mrb[0].mxu0 %v2204
      %v2206 = vpop.f32.mrb[0].mxu0
      %v2207 = vadd.f32 %v2118, %v2206
      %v2208 = vpop.f32.mrb[0].mxu0
      %2209 = vdwg.mxu0
      %2210 = vmatprep.subr.mxu0 0.0
      %v2211 = vand.u32 %v2102, 4294901760
      %v2212 = vsub.f32 %v2102, %v2211
      %v2213 = vand.u32 %v2212, 4294901760
      %v2214 = vsub.f32 %v2212, %v2213
      %v2215 = vand.u32 %v2214, 4294901760
      %2216 = vmatpush1.msra.mxu0 %v2215
      %2217 = vmatprep.subr.mxu0 0.0
      %v2218 = vand.u32 %v2103, 4294901760
      %v2219 = vsub.f32 %v2103, %v2218
      %v2220 = vand.u32 %v2219, 4294901760
      %v2221 = vsub.f32 %v2219, %v2220
      %v2222 = vand.u32 %v2221, 4294901760
      %2223 = vmatpush1.msra.mxu0 %v2222
      %2224 = vmatprep.subr.mxu0 0.0
      %v2225 = vand.u32 %v2104, 4294901760
      %v2226 = vsub.f32 %v2104, %v2225
      %v2227 = vand.u32 %v2226, 4294901760
      %v2228 = vsub.f32 %v2226, %v2227
      %v2229 = vand.u32 %v2228, 4294901760
      %2230 = vmatpush1.msra.mxu0 %v2229
      %2231 = vmatprep.subr.mxu0 0.0
      %v2232 = vand.u32 %v2105, 4294901760
      %v2233 = vsub.f32 %v2105, %v2232
      %v2234 = vand.u32 %v2233, 4294901760
      %v2235 = vsub.f32 %v2233, %v2234
      %v2236 = vand.u32 %v2235, 4294901760
      %2237 = vmatpush1.msra.mxu0 %v2236
      %2238 = vmatprep.subr.mxu0 0.0
      %v2239 = vand.u32 %v2106, 4294901760
      %v2240 = vsub.f32 %v2106, %v2239
      %v2241 = vand.u32 %v2240, 4294901760
      %v2242 = vsub.f32 %v2240, %v2241
      %v2243 = vand.u32 %v2242, 4294901760
      %2244 = vmatpush1.msra.mxu0 %v2243
      %2245 = vmatprep.subr.mxu0 0.0
      %v2246 = vand.u32 %v2107, 4294901760
      %v2247 = vsub.f32 %v2107, %v2246
      %v2248 = vand.u32 %v2247, 4294901760
      %v2249 = vsub.f32 %v2247, %v2248
      %v2250 = vand.u32 %v2249, 4294901760
      %2251 = vmatpush1.msra.mxu0 %v2250
      %2252 = vmatprep.subr.mxu0 0.0
      %v2253 = vand.u32 %v2108, 4294901760
      %v2254 = vsub.f32 %v2108, %v2253
      %v2255 = vand.u32 %v2254, 4294901760
      %v2256 = vsub.f32 %v2254, %v2255
      %v2257 = vand.u32 %v2256, 4294901760
      %2258 = vmatpush1.msra.mxu0 %v2257
      %2259 = vmatprep.subr.mxu0 0.0
      %v2260 = vand.u32 %v2109, 4294901760
      %v2261 = vsub.f32 %v2109, %v2260
      %v2262 = vand.u32 %v2261, 4294901760
      %v2263 = vsub.f32 %v2261, %v2262
      %v2264 = vand.u32 %v2263, 4294901760
      %2265 = vmatpush1.msra.mxu0 %v2264
      %2266 = vmatprep.subr.mxu0 0.0
      %v2267 = vand.u32 %v2110, 4294901760
      %v2268 = vsub.f32 %v2110, %v2267
      %v2269 = vand.u32 %v2268, 4294901760
      %v2270 = vsub.f32 %v2268, %v2269
      %v2271 = vand.u32 %v2270, 4294901760
      %2272 = vmatpush1.msra.mxu0 %v2271
      %2273 = vmatprep.subr.mxu0 0.0
      %v2274 = vand.u32 %v2111, 4294901760
      %v2275 = vsub.f32 %v2111, %v2274
      %v2276 = vand.u32 %v2275, 4294901760
      %v2277 = vsub.f32 %v2275, %v2276
      %v2278 = vand.u32 %v2277, 4294901760
      %2279 = vmatpush1.msra.mxu0 %v2278
      %2280 = vmatprep.subr.mxu0 0.0
      %v2281 = vand.u32 %v2112, 4294901760
      %v2282 = vsub.f32 %v2112, %v2281
      %v2283 = vand.u32 %v2282, 4294901760
      %v2284 = vsub.f32 %v2282, %v2283
      %v2285 = vand.u32 %v2284, 4294901760
      %2286 = vmatpush1.msra.mxu0 %v2285
      %2287 = vmatprep.subr.mxu0 0.0
      %v2288 = vand.u32 %v2113, 4294901760
      %v2289 = vsub.f32 %v2113, %v2288
      %v2290 = vand.u32 %v2289, 4294901760
      %v2291 = vsub.f32 %v2289, %v2290
      %v2292 = vand.u32 %v2291, 4294901760
      %2293 = vmatpush1.msra.mxu0 %v2292
      %2294 = vmatprep.subr.mxu0 0.0
      %v2295 = vand.u32 %v2114, 4294901760
      %v2296 = vsub.f32 %v2114, %v2295
      %v2297 = vand.u32 %v2296, 4294901760
      %v2298 = vsub.f32 %v2296, %v2297
      %v2299 = vand.u32 %v2298, 4294901760
      %2300 = vmatpush1.msra.mxu0 %v2299
      %2301 = vmatprep.subr.mxu0 0.0
      %v2302 = vand.u32 %v2115, 4294901760
      %v2303 = vsub.f32 %v2115, %v2302
      %v2304 = vand.u32 %v2303, 4294901760
      %v2305 = vsub.f32 %v2303, %v2304
      %v2306 = vand.u32 %v2305, 4294901760
      %2307 = vmatpush1.msra.mxu0 %v2306
      %2308 = vmatprep.subr.mxu0 0.0
      %v2309 = vand.u32 %v2116, 4294901760
      %v2310 = vsub.f32 %v2116, %v2309
      %v2311 = vand.u32 %v2310, 4294901760
      %v2312 = vsub.f32 %v2310, %v2311
      %v2313 = vand.u32 %v2312, 4294901760
      %2314 = vmatpush1.msra.mxu0 %v2313
      %2315 = vmatprep.subr.mxu0 0.0
      %v2316 = vand.u32 %v2117, 4294901760
      %v2317 = vsub.f32 %v2117, %v2316
      %v2318 = vand.u32 %v2317, 4294901760
      %v2319 = vsub.f32 %v2317, %v2318
      %v2320 = vand.u32 %v2319, 4294901760
      %2321 = vmatpush1.msra.mxu0 %v2320
      %2322 = vmatprep.subr.mxu0 0.0
      %2323 = vmatpush1.msra.mxu0 0.0
      %2324 = vmatprep.subr.mxu0 0.0
      %2325 = vmatpush1.msra.mxu0 0.0
      %2326 = vmatprep.subr.mxu0 0.0
      %2327 = vmatpush1.msra.mxu0 0.0
      %2328 = vmatprep.subr.mxu0 0.0
      %2329 = vmatpush1.msra.mxu0 0.0
      %2330 = vmatprep.subr.mxu0 0.0
      %2331 = vmatpush1.msra.mxu0 0.0
      %2332 = vmatprep.subr.mxu0 0.0
      %2333 = vmatpush1.msra.mxu0 0.0
      %2334 = vmatprep.subr.mxu0 0.0
      %2335 = vmatpush1.msra.mxu0 0.0
      %2336 = vmatprep.subr.mxu0 0.0
      %2337 = vmatpush1.msra.mxu0 0.0
      %2338 = vmatprep.subr.mxu0 0.0
      %2339 = vmatpush1.msra.mxu0 0.0
      %2340 = vmatprep.subr.mxu0 0.0
      %2341 = vmatpush1.msra.mxu0 0.0
      %2342 = vmatprep.subr.mxu0 0.0
      %2343 = vmatpush1.msra.mxu0 0.0
      %2344 = vmatprep.subr.mxu0 0.0
      %2345 = vmatpush1.msra.mxu0 0.0
      %2346 = vmatprep.subr.mxu0 0.0
      %2347 = vmatpush1.msra.mxu0 0.0
      %2348 = vmatprep.subr.mxu0 0.0
      %2349 = vmatpush1.msra.mxu0 0.0
      %2350 = vmatprep.subr.mxu0 0.0
      %2351 = vmatpush1.msra.mxu0 0.0
      %2352 = vmatprep.subr.mxu0 0.0
      %2353 = vmatpush1.msra.mxu0 0.0
      %2354 = vmatprep.mubr.f32.mxu0 0.0
      %v2355 = vand.u32 %v2101, 4294901760
      %2356 = vmatmul.mubr.f32.gmra.mrb[0].mxu0 %v2355
      %v2357 = vpop.f32.mrb[0].mxu0
      %v2358 = vadd.f32 %v2207, %v2357
      %v2359 = vpop.f32.mrb[0].mxu0
      %2360 = vdwg.mxu0
      %2361 = vmatprep.subr.mxu0 0.0
      %v2362 = vand.u32 %v2102, 4294901760
      %v2363 = vsub.f32 %v2102, %v2362
      %2364 = vmatpush1.msra.mxu0 %v2363
      %2365 = vmatprep.subr.mxu0 0.0
      %v2366 = vand.u32 %v2103, 4294901760
      %v2367 = vsub.f32 %v2103, %v2366
      %2368 = vmatpush1.msra.mxu0 %v2367
      %2369 = vmatprep.subr.mxu0 0.0
      %v2370 = vand.u32 %v2104, 4294901760
      %v2371 = vsub.f32 %v2104, %v2370
      %2372 = vmatpush1.msra.mxu0 %v2371
      %2373 = vmatprep.subr.mxu0 0.0
      %v2374 = vand.u32 %v2105, 4294901760
      %v2375 = vsub.f32 %v2105, %v2374
      %2376 = vmatpush1.msra.mxu0 %v2375
      %2377 = vmatprep.subr.mxu0 0.0
      %v2378 = vand.u32 %v2106, 4294901760
      %v2379 = vsub.f32 %v2106, %v2378
      %2380 = vmatpush1.msra.mxu0 %v2379
      %2381 = vmatprep.subr.mxu0 0.0
      %v2382 = vand.u32 %v2107, 4294901760
      %v2383 = vsub.f32 %v2107, %v2382
      %2384 = vmatpush1.msra.mxu0 %v2383
      %2385 = vmatprep.subr.mxu0 0.0
      %v2386 = vand.u32 %v2108, 4294901760
      %v2387 = vsub.f32 %v2108, %v2386
      %2388 = vmatpush1.msra.mxu0 %v2387
      %2389 = vmatprep.subr.mxu0 0.0
      %v2390 = vand.u32 %v2109, 4294901760
      %v2391 = vsub.f32 %v2109, %v2390
      %2392 = vmatpush1.msra.mxu0 %v2391
      %2393 = vmatprep.subr.mxu0 0.0
      %v2394 = vand.u32 %v2110, 4294901760
      %v2395 = vsub.f32 %v2110, %v2394
      %2396 = vmatpush1.msra.mxu0 %v2395
      %2397 = vmatprep.subr.mxu0 0.0
      %v2398 = vand.u32 %v2111, 4294901760
      %v2399 = vsub.f32 %v2111, %v2398
      %2400 = vmatpush1.msra.mxu0 %v2399
      %2401 = vmatprep.subr.mxu0 0.0
      %v2402 = vand.u32 %v2112, 4294901760
      %v2403 = vsub.f32 %v2112, %v2402
      %2404 = vmatpush1.msra.mxu0 %v2403
      %2405 = vmatprep.subr.mxu0 0.0
      %v2406 = vand.u32 %v2113, 4294901760
      %v2407 = vsub.f32 %v2113, %v2406
      %2408 = vmatpush1.msra.mxu0 %v2407
      %2409 = vmatprep.subr.mxu0 0.0
      %v2410 = vand.u32 %v2114, 4294901760
      %v2411 = vsub.f32 %v2114, %v2410
      %2412 = vmatpush1.msra.mxu0 %v2411
      %2413 = vmatprep.subr.mxu0 0.0
      %v2414 = vand.u32 %v2115, 4294901760
      %v2415 = vsub.f32 %v2115, %v2414
      %2416 = vmatpush1.msra.mxu0 %v2415
      %2417 = vmatprep.subr.mxu0 0.0
      %v2418 = vand.u32 %v2116, 4294901760
      %v2419 = vsub.f32 %v2116, %v2418
      %2420 = vmatpush1.msra.mxu0 %v2419
      %2421 = vmatprep.subr.mxu0 0.0
      %v2422 = vand.u32 %v2117, 4294901760
      %v2423 = vsub.f32 %v2117, %v2422
      %2424 = vmatpush1.msra.mxu0 %v2423
      %2425 = vmatprep.subr.mxu0 0.0
      %2426 = vmatpush1.msra.mxu0 0.0
      %2427 = vmatprep.subr.mxu0 0.0
      %2428 = vmatpush1.msra.mxu0 0.0
      %2429 = vmatprep.subr.mxu0 0.0
      %2430 = vmatpush1.msra.mxu0 0.0
      %2431 = vmatprep.subr.mxu0 0.0
      %2432 = vmatpush1.msra.mxu0 0.0
      %2433 = vmatprep.subr.mxu0 0.0
      %2434 = vmatpush1.msra.mxu0 0.0
      %2435 = vmatprep.subr.mxu0 0.0
      %2436 = vmatpush1.msra.mxu0 0.0
      %2437 = vmatprep.subr.mxu0 0.0
      %2438 = vmatpush1.msra.mxu0 0.0
      %2439 = vmatprep.subr.mxu0 0.0
      %2440 = vmatpush1.msra.mxu0 0.0
      %2441 = vmatprep.subr.mxu0 0.0
      %2442 = vmatpush1.msra.mxu0 0.0
      %2443 = vmatprep.subr.mxu0 0.0
      %2444 = vmatpush1.msra.mxu0 0.0
      %2445 = vmatprep.subr.mxu0 0.0
      %2446 = vmatpush1.msra.mxu0 0.0
      %2447 = vmatprep.subr.mxu0 0.0
      %2448 = vmatpush1.msra.mxu0 0.0
      %2449 = vmatprep.subr.mxu0 0.0
      %2450 = vmatpush1.msra.mxu0 0.0
      %2451 = vmatprep.subr.mxu0 0.0
      %2452 = vmatpush1.msra.mxu0 0.0
      %2453 = vmatprep.subr.mxu0 0.0
      %2454 = vmatpush1.msra.mxu0 0.0
      %2455 = vmatprep.subr.mxu0 0.0
      %2456 = vmatpush1.msra.mxu0 0.0
      %2457 = vmatprep.mubr.f32.mxu0 0.0
      %v2458 = vand.u32 %v2101, 4294901760
      %v2459 = vsub.f32 %v2101, %v2458
      %2460 = vmatmul.mubr.f32.gmra.mrb[0].mxu0 %v2459
      %v2461 = vpop.f32.mrb[0].mxu0
      %v2462 = vadd.f32 %v2358, %v2461
      %v2463 = vpop.f32.mrb[0].mxu0
      %2464 = vdwg.mxu0
      %2465 = vmatprep.subr.mxu0 0.0
      %v2466 = vand.u32 %v2102, 4294901760
      %2467 = vmatpush1.msra.mxu0 %v2466
      %2468 = vmatprep.subr.mxu0 0.0
      %v2469 = vand.u32 %v2103, 4294901760
      %2470 = vmatpush1.msra.mxu0 %v2469
      %2471 = vmatprep.subr.mxu0 0.0
      %v2472 = vand.u32 %v2104, 4294901760
      %2473 = vmatpush1.msra.mxu0 %v2472
      %2474 = vmatprep.subr.mxu0 0.0
      %v2475 = vand.u32 %v2105, 4294901760
      %2476 = vmatpush1.msra.mxu0 %v2475
      %2477 = vmatprep.subr.mxu0 0.0
      %v2478 = vand.u32 %v2106, 4294901760
      %2479 = vmatpush1.msra.mxu0 %v2478
      %2480 = vmatprep.subr.mxu0 0.0
      %v2481 = vand.u32 %v2107, 4294901760
      %2482 = vmatpush1.msra.mxu0 %v2481
      %2483 = vmatprep.subr.mxu0 0.0
      %v2484 = vand.u32 %v2108, 4294901760
      %2485 = vmatpush1.msra.mxu0 %v2484
      %2486 = vmatprep.subr.mxu0 0.0
      %v2487 = vand.u32 %v2109, 4294901760
      %2488 = vmatpush1.msra.mxu0 %v2487
      %2489 = vmatprep.subr.mxu0 0.0
      %v2490 = vand.u32 %v2110, 4294901760
      %2491 = vmatpush1.msra.mxu0 %v2490
      %2492 = vmatprep.subr.mxu0 0.0
      %v2493 = vand.u32 %v2111, 4294901760
      %2494 = vmatpush1.msra.mxu0 %v2493
      %2495 = vmatprep.subr.mxu0 0.0
      %v2496 = vand.u32 %v2112, 4294901760
      %2497 = vmatpush1.msra.mxu0 %v2496
      %2498 = vmatprep.subr.mxu0 0.0
      %v2499 = vand.u32 %v2113, 4294901760
      %2500 = vmatpush1.msra.mxu0 %v2499
      %2501 = vmatprep.subr.mxu0 0.0
      %v2502 = vand.u32 %v2114, 4294901760
      %2503 = vmatpush1.msra.mxu0 %v2502
      %2504 = vmatprep.subr.mxu0 0.0
      %v2505 = vand.u32 %v2115, 4294901760
      %2506 = vmatpush1.msra.mxu0 %v2505
      %2507 = vmatprep.subr.mxu0 0.0
      %v2508 = vand.u32 %v2116, 4294901760
      %2509 = vmatpush1.msra.mxu0 %v2508
      %2510 = vmatprep.subr.mxu0 0.0
      %v2511 = vand.u32 %v2117, 4294901760
      %2512 = vmatpush1.msra.mxu0 %v2511
      %2513 = vmatprep.subr.mxu0 0.0
      %2514 = vmatpush1.msra.mxu0 0.0
      %2515 = vmatprep.subr.mxu0 0.0
      %2516 = vmatpush1.msra.mxu0 0.0
      %2517 = vmatprep.subr.mxu0 0.0
      %2518 = vmatpush1.msra.mxu0 0.0
      %2519 = vmatprep.subr.mxu0 0.0
      %2520 = vmatpush1.msra.mxu0 0.0
      %2521 = vmatprep.subr.mxu0 0.0
      %2522 = vmatpush1.msra.mxu0 0.0
      %2523 = vmatprep.subr.mxu0 0.0
      %2524 = vmatpush1.msra.mxu0 0.0
      %2525 = vmatprep.subr.mxu0 0.0
      %2526 = vmatpush1.msra.mxu0 0.0
      %2527 = vmatprep.subr.mxu0 0.0
      %2528 = vmatpush1.msra.mxu0 0.0
      %2529 = vmatprep.subr.mxu0 0.0
      %2530 = vmatpush1.msra.mxu0 0.0
      %2531 = vmatprep.subr.mxu0 0.0
      %2532 = vmatpush1.msra.mxu0 0.0
      %2533 = vmatprep.subr.mxu0 0.0
      %2534 = vmatpush1.msra.mxu0 0.0
      %2535 = vmatprep.subr.mxu0 0.0
      %2536 = vmatpush1.msra.mxu0 0.0
      %2537 = vmatprep.subr.mxu0 0.0
      %2538 = vmatpush1.msra.mxu0 0.0
      %2539 = vmatprep.subr.mxu0 0.0
      %2540 = vmatpush1.msra.mxu0 0.0
      %2541 = vmatprep.subr.mxu0 0.0
      %2542 = vmatpush1.msra.mxu0 0.0
      %2543 = vmatprep.subr.mxu0 0.0
      %2544 = vmatpush1.msra.mxu0 0.0
      %2545 = vmatprep.mubr.f32.mxu0 0.0
      %v2546 = vand.u32 %v2101, 4294901760
      %v2547 = vsub.f32 %v2101, %v2546
      %v2548 = vand.u32 %v2547, 4294901760
      %2549 = vmatmul.mubr.f32.gmra.mrb[0].mxu0 %v2548
      %v2550 = vpop.f32.mrb[0].mxu0
      %v2551 = vadd.f32 %v2462, %v2550
      %v2552 = vpop.f32.mrb[0].mxu0
      %2553 = vdwg.mxu0
      %2554 = vmatprep.subr.mxu0 0.0
      %v2555 = vand.u32 %v2102, 4294901760
      %v2556 = vsub.f32 %v2102, %v2555
      %v2557 = vand.u32 %v2556, 4294901760
      %2558 = vmatpush1.msra.mxu0 %v2557
      %2559 = vmatprep.subr.mxu0 0.0
      %v2560 = vand.u32 %v2103, 4294901760
      %v2561 = vsub.f32 %v2103, %v2560
      %v2562 = vand.u32 %v2561, 4294901760
      %2563 = vmatpush1.msra.mxu0 %v2562
      %2564 = vmatprep.subr.mxu0 0.0
      %v2565 = vand.u32 %v2104, 4294901760
      %v2566 = vsub.f32 %v2104, %v2565
      %v2567 = vand.u32 %v2566, 4294901760
      %2568 = vmatpush1.msra.mxu0 %v2567
      %2569 = vmatprep.subr.mxu0 0.0
      %v2570 = vand.u32 %v2105, 4294901760
      %v2571 = vsub.f32 %v2105, %v2570
      %v2572 = vand.u32 %v2571, 4294901760
      %2573 = vmatpush1.msra.mxu0 %v2572
      %2574 = vmatprep.subr.mxu0 0.0
      %v2575 = vand.u32 %v2106, 4294901760
      %v2576 = vsub.f32 %v2106, %v2575
      %v2577 = vand.u32 %v2576, 4294901760
      %2578 = vmatpush1.msra.mxu0 %v2577
      %2579 = vmatprep.subr.mxu0 0.0
      %v2580 = vand.u32 %v2107, 4294901760
      %v2581 = vsub.f32 %v2107, %v2580
      %v2582 = vand.u32 %v2581, 4294901760
      %2583 = vmatpush1.msra.mxu0 %v2582
      %2584 = vmatprep.subr.mxu0 0.0
      %v2585 = vand.u32 %v2108, 4294901760
      %v2586 = vsub.f32 %v2108, %v2585
      %v2587 = vand.u32 %v2586, 4294901760
      %2588 = vmatpush1.msra.mxu0 %v2587
      %2589 = vmatprep.subr.mxu0 0.0
      %v2590 = vand.u32 %v2109, 4294901760
      %v2591 = vsub.f32 %v2109, %v2590
      %v2592 = vand.u32 %v2591, 4294901760
      %2593 = vmatpush1.msra.mxu0 %v2592
      %2594 = vmatprep.subr.mxu0 0.0
      %v2595 = vand.u32 %v2110, 4294901760
      %v2596 = vsub.f32 %v2110, %v2595
      %v2597 = vand.u32 %v2596, 4294901760
      %2598 = vmatpush1.msra.mxu0 %v2597
      %2599 = vmatprep.subr.mxu0 0.0
      %v2600 = vand.u32 %v2111, 4294901760
      %v2601 = vsub.f32 %v2111, %v2600
      %v2602 = vand.u32 %v2601, 4294901760
      %2603 = vmatpush1.msra.mxu0 %v2602
      %2604 = vmatprep.subr.mxu0 0.0
      %v2605 = vand.u32 %v2112, 4294901760
      %v2606 = vsub.f32 %v2112, %v2605
      %v2607 = vand.u32 %v2606, 4294901760
      %2608 = vmatpush1.msra.mxu0 %v2607
      %2609 = vmatprep.subr.mxu0 0.0
      %v2610 = vand.u32 %v2113, 4294901760
      %v2611 = vsub.f32 %v2113, %v2610
      %v2612 = vand.u32 %v2611, 4294901760
      %2613 = vmatpush1.msra.mxu0 %v2612
      %2614 = vmatprep.subr.mxu0 0.0
      %v2615 = vand.u32 %v2114, 4294901760
      %v2616 = vsub.f32 %v2114, %v2615
      %v2617 = vand.u32 %v2616, 4294901760
      %2618 = vmatpush1.msra.mxu0 %v2617
      %2619 = vmatprep.subr.mxu0 0.0
      %v2620 = vand.u32 %v2115, 4294901760
      %v2621 = vsub.f32 %v2115, %v2620
      %v2622 = vand.u32 %v2621, 4294901760
      %2623 = vmatpush1.msra.mxu0 %v2622
      %2624 = vmatprep.subr.mxu0 0.0
      %v2625 = vand.u32 %v2116, 4294901760
      %v2626 = vsub.f32 %v2116, %v2625
      %v2627 = vand.u32 %v2626, 4294901760
      %2628 = vmatpush1.msra.mxu0 %v2627
      %2629 = vmatprep.subr.mxu0 0.0
      %v2630 = vand.u32 %v2117, 4294901760
      %v2631 = vsub.f32 %v2117, %v2630
      %v2632 = vand.u32 %v2631, 4294901760
      %2633 = vmatpush1.msra.mxu0 %v2632
      %2634 = vmatprep.subr.mxu0 0.0
      %2635 = vmatpush1.msra.mxu0 0.0
      %2636 = vmatprep.subr.mxu0 0.0
      %2637 = vmatpush1.msra.mxu0 0.0
      %2638 = vmatprep.subr.mxu0 0.0
      %2639 = vmatpush1.msra.mxu0 0.0
      %2640 = vmatprep.subr.mxu0 0.0
      %2641 = vmatpush1.msra.mxu0 0.0
      %2642 = vmatprep.subr.mxu0 0.0
      %2643 = vmatpush1.msra.mxu0 0.0
      %2644 = vmatprep.subr.mxu0 0.0
      %2645 = vmatpush1.msra.mxu0 0.0
      %2646 = vmatprep.subr.mxu0 0.0
      %2647 = vmatpush1.msra.mxu0 0.0
      %2648 = vmatprep.subr.mxu0 0.0
      %2649 = vmatpush1.msra.mxu0 0.0
      %2650 = vmatprep.subr.mxu0 0.0
      %2651 = vmatpush1.msra.mxu0 0.0
      %2652 = vmatprep.subr.mxu0 0.0
      %2653 = vmatpush1.msra.mxu0 0.0
      %2654 = vmatprep.subr.mxu0 0.0
      %2655 = vmatpush1.msra.mxu0 0.0
      %2656 = vmatprep.subr.mxu0 0.0
      %2657 = vmatpush1.msra.mxu0 0.0
      %2658 = vmatprep.subr.mxu0 0.0
      %2659 = vmatpush1.msra.mxu0 0.0
      %2660 = vmatprep.subr.mxu0 0.0
      %2661 = vmatpush1.msra.mxu0 0.0
      %2662 = vmatprep.subr.mxu0 0.0
      %2663 = vmatpush1.msra.mxu0 0.0
      %2664 = vmatprep.subr.mxu0 0.0
      %2665 = vmatpush1.msra.mxu0 0.0
      %2666 = vmatprep.mubr.f32.mxu0 0.0
      %v2667 = vand.u32 %v2101, 4294901760
      %2668 = vmatmul.mubr.f32.gmra.mrb[0].mxu0 %v2667
      %v2669 = vpop.f32.mrb[0].mxu0
      %v2670 = vadd.f32 %v2551, %v2669
      %v2671 = vpop.f32.mrb[0].mxu0
      %2672 = vdwg.mxu0
      %2673 = vmatprep.subr.mxu0 0.0
      %v2674 = vand.u32 %v2102, 4294901760
      %2675 = vmatpush1.msra.mxu0 %v2674
      %2676 = vmatprep.subr.mxu0 0.0
      %v2677 = vand.u32 %v2103, 4294901760
      %2678 = vmatpush1.msra.mxu0 %v2677
      %2679 = vmatprep.subr.mxu0 0.0
      %v2680 = vand.u32 %v2104, 4294901760
      %2681 = vmatpush1.msra.mxu0 %v2680
      %2682 = vmatprep.subr.mxu0 0.0
      %v2683 = vand.u32 %v2105, 4294901760
      %2684 = vmatpush1.msra.mxu0 %v2683
      %2685 = vmatprep.subr.mxu0 0.0
      %v2686 = vand.u32 %v2106, 4294901760
      %2687 = vmatpush1.msra.mxu0 %v2686
      %2688 = vmatprep.subr.mxu0 0.0
      %v2689 = vand.u32 %v2107, 4294901760
      %2690 = vmatpush1.msra.mxu0 %v2689
      %2691 = vmatprep.subr.mxu0 0.0
      %v2692 = vand.u32 %v2108, 4294901760
      %2693 = vmatpush1.msra.mxu0 %v2692
      %2694 = vmatprep.subr.mxu0 0.0
      %v2695 = vand.u32 %v2109, 4294901760
      %2696 = vmatpush1.msra.mxu0 %v2695
      %2697 = vmatprep.subr.mxu0 0.0
      %v2698 = vand.u32 %v2110, 4294901760
      %2699 = vmatpush1.msra.mxu0 %v2698
      %2700 = vmatprep.subr.mxu0 0.0
      %v2701 = vand.u32 %v2111, 4294901760
      %2702 = vmatpush1.msra.mxu0 %v2701
      %2703 = vmatprep.subr.mxu0 0.0
      %v2704 = vand.u32 %v2112, 4294901760
      %2705 = vmatpush1.msra.mxu0 %v2704
      %2706 = vmatprep.subr.mxu0 0.0
      %v2707 = vand.u32 %v2113, 4294901760
      %2708 = vmatpush1.msra.mxu0 %v2707
      %2709 = vmatprep.subr.mxu0 0.0
      %v2710 = vand.u32 %v2114, 4294901760
      %2711 = vmatpush1.msra.mxu0 %v2710
      %2712 = vmatprep.subr.mxu0 0.0
      %v2713 = vand.u32 %v2115, 4294901760
      %2714 = vmatpush1.msra.mxu0 %v2713
      %2715 = vmatprep.subr.mxu0 0.0
      %v2716 = vand.u32 %v2116, 4294901760
      %2717 = vmatpush1.msra.mxu0 %v2716
      %2718 = vmatprep.subr.mxu0 0.0
      %v2719 = vand.u32 %v2117, 4294901760
      %2720 = vmatpush1.msra.mxu0 %v2719
      %2721 = vmatprep.subr.mxu0 0.0
      %2722 = vmatpush1.msra.mxu0 0.0
      %2723 = vmatprep.subr.mxu0 0.0
      %2724 = vmatpush1.msra.mxu0 0.0
      %2725 = vmatprep.subr.mxu0 0.0
      %2726 = vmatpush1.msra.mxu0 0.0
      %2727 = vmatprep.subr.mxu0 0.0
      %2728 = vmatpush1.msra.mxu0 0.0
      %2729 = vmatprep.subr.mxu0 0.0
      %2730 = vmatpush1.msra.mxu0 0.0
      %2731 = vmatprep.subr.mxu0 0.0
      %2732 = vmatpush1.msra.mxu0 0.0
      %2733 = vmatprep.subr.mxu0 0.0
      %2734 = vmatpush1.msra.mxu0 0.0
      %2735 = vmatprep.subr.mxu0 0.0
      %2736 = vmatpush1.msra.mxu0 0.0
      %2737 = vmatprep.subr.mxu0 0.0
      %2738 = vmatpush1.msra.mxu0 0.0
      %2739 = vmatprep.subr.mxu0 0.0
      %2740 = vmatpush1.msra.mxu0 0.0
      %2741 = vmatprep.subr.mxu0 0.0
      %2742 = vmatpush1.msra.mxu0 0.0
      %2743 = vmatprep.subr.mxu0 0.0
      %2744 = vmatpush1.msra.mxu0 0.0
      %2745 = vmatprep.subr.mxu0 0.0
      %2746 = vmatpush1.msra.mxu0 0.0
      %2747 = vmatprep.subr.mxu0 0.0
      %2748 = vmatpush1.msra.mxu0 0.0
      %2749 = vmatprep.subr.mxu0 0.0
      %2750 = vmatpush1.msra.mxu0 0.0
      %2751 = vmatprep.subr.mxu0 0.0
      %2752 = vmatpush1.msra.mxu0 0.0
      %2753 = vmatprep.mubr.f32.mxu0 0.0
      %v2754 = vand.u32 %v2101, 4294901760
      %2755 = vmatmul.mubr.f32.gmra.mrb[0].mxu0 %v2754
      %v2756 = vpop.f32.mrb[0].mxu0
      %v2757 = vadd.f32 %v2670, %v2756
      %v2758 = vpop.f32.mrb[0].mxu0
      %2759 = vdwg.mxu0
      %v2760 = vmax.f32 %v2757, 0.0
      %v2761 = vld [vmem:[%s2 + $0x2a0] sm:$0xff]
      %v2762 = vld [vmem:[%s2 + $0x2a8] sm:$0xff]
      %v2763 = vld [vmem:[%s2 + $0x2b0] sm:$0xff]
      %v2764 = vld [vmem:[%s2 + $0x2b8] sm:$0xff]
      %v2765 = vld [vmem:[%s2 + $0x2c0] sm:$0xff]
      %v2766 = vld [vmem:[%s2 + $0x2c8] sm:$0xff]
      %v2767 = vld [vmem:[%s2 + $0x2d0] sm:$0xff]
      %v2768 = vld [vmem:[%s2 + $0x2d8] sm:$0xff]
      %v2769 = vld [vmem:[%s2 + $0x2e0] sm:$0xff]
      %v2770 = vld [vmem:[%s2 + $0x2e8] sm:$0xff]
      %v2771 = vld [vmem:[%s2 + $0x2f0] sm:$0xff]
      %v2772 = vld [vmem:[%s2 + $0x2f8] sm:$0xff]
      %v2773 = vld [vmem:[%s2 + $0x300] sm:$0xff]
      %v2774 = vld [vmem:[%s2 + $0x308] sm:$0xff]
      %v2775 = vld [vmem:[%s2 + $0x310] sm:$0xff]
      %v2776 = vld [vmem:[%s2 + $0x318] sm:$0xff]
      %v2777 = vld [vmem:[%s2 + $0x320] sm:$0x1]
      %2778 = vmatprep.subr.mxu0 0.0
      %v2779 = vand.u32 %v2761, 4294901760
      %2780 = vmatpush1.msra.mxu0 %v2779
      %2781 = vmatprep.subr.mxu0 0.0
      %v2782 = vand.u32 %v2762, 4294901760
      %2783 = vmatpush1.msra.mxu0 %v2782
      %2784 = vmatprep.subr.mxu0 0.0
      %v2785 = vand.u32 %v2763, 4294901760
      %2786 = vmatpush1.msra.mxu0 %v2785
      %2787 = vmatprep.subr.mxu0 0.0
      %v2788 = vand.u32 %v2764, 4294901760
      %2789 = vmatpush1.msra.mxu0 %v2788
      %2790 = vmatprep.subr.mxu0 0.0
      %v2791 = vand.u32 %v2765, 4294901760
      %2792 = vmatpush1.msra.mxu0 %v2791
      %2793 = vmatprep.subr.mxu0 0.0
      %v2794 = vand.u32 %v2766, 4294901760
      %2795 = vmatpush1.msra.mxu0 %v2794
      %2796 = vmatprep.subr.mxu0 0.0
      %v2797 = vand.u32 %v2767, 4294901760
      %2798 = vmatpush1.msra.mxu0 %v2797
      %2799 = vmatprep.subr.mxu0 0.0
      %v2800 = vand.u32 %v2768, 4294901760
      %2801 = vmatpush1.msra.mxu0 %v2800
      %2802 = vmatprep.subr.mxu0 0.0
      %v2803 = vand.u32 %v2769, 4294901760
      %2804 = vmatpush1.msra.mxu0 %v2803
      %2805 = vmatprep.subr.mxu0 0.0
      %v2806 = vand.u32 %v2770, 4294901760
      %2807 = vmatpush1.msra.mxu0 %v2806
      %2808 = vmatprep.subr.mxu0 0.0
      %v2809 = vand.u32 %v2771, 4294901760
      %2810 = vmatpush1.msra.mxu0 %v2809
      %2811 = vmatprep.subr.mxu0 0.0
      %v2812 = vand.u32 %v2772, 4294901760
      %2813 = vmatpush1.msra.mxu0 %v2812
      %2814 = vmatprep.subr.mxu0 0.0
      %v2815 = vand.u32 %v2773, 4294901760
      %2816 = vmatpush1.msra.mxu0 %v2815
      %2817 = vmatprep.subr.mxu0 0.0
      %v2818 = vand.u32 %v2774, 4294901760
      %2819 = vmatpush1.msra.mxu0 %v2818
      %2820 = vmatprep.subr.mxu0 0.0
      %v2821 = vand.u32 %v2775, 4294901760
      %2822 = vmatpush1.msra.mxu0 %v2821
      %2823 = vmatprep.subr.mxu0 0.0
      %v2824 = vand.u32 %v2776, 4294901760
      %2825 = vmatpush1.msra.mxu0 %v2824
      %2826 = vmatprep.subr.mxu0 0.0
      %2827 = vmatpush1.msra.mxu0 0.0
      %2828 = vmatprep.subr.mxu0 0.0
      %2829 = vmatpush1.msra.mxu0 0.0
      %2830 = vmatprep.subr.mxu0 0.0
      %2831 = vmatpush1.msra.mxu0 0.0
      %2832 = vmatprep.subr.mxu0 0.0
      %2833 = vmatpush1.msra.mxu0 0.0
      %2834 = vmatprep.subr.mxu0 0.0
      %2835 = vmatpush1.msra.mxu0 0.0
      %2836 = vmatprep.subr.mxu0 0.0
      %2837 = vmatpush1.msra.mxu0 0.0
      %2838 = vmatprep.subr.mxu0 0.0
      %2839 = vmatpush1.msra.mxu0 0.0
      %2840 = vmatprep.subr.mxu0 0.0
      %2841 = vmatpush1.msra.mxu0 0.0
      %2842 = vmatprep.subr.mxu0 0.0
      %2843 = vmatpush1.msra.mxu0 0.0
      %2844 = vmatprep.subr.mxu0 0.0
      %2845 = vmatpush1.msra.mxu0 0.0
      %2846 = vmatprep.subr.mxu0 0.0
      %2847 = vmatpush1.msra.mxu0 0.0
      %2848 = vmatprep.subr.mxu0 0.0
      %2849 = vmatpush1.msra.mxu0 0.0
      %2850 = vmatprep.subr.mxu0 0.0
      %2851 = vmatpush1.msra.mxu0 0.0
      %2852 = vmatprep.subr.mxu0 0.0
      %2853 = vmatpush1.msra.mxu0 0.0
      %2854 = vmatprep.subr.mxu0 0.0
      %2855 = vmatpush1.msra.mxu0 0.0
      %2856 = vmatprep.subr.mxu0 0.0
      %2857 = vmatpush1.msra.mxu0 0.0
      %2858 = vmatprep.mubr.f32.mxu0 0.0
      %v2859 = vand.u32 %v2760, 4294901760
      %v2860 = vsub.f32 %v2760, %v2859
      %v2861 = vand.u32 %v2860, 4294901760
      %v2862 = vsub.f32 %v2860, %v2861
      %v2863 = vand.u32 %v2862, 4294901760
      %2864 = vmatmul.mubr.f32.gmra.mrb[0].mxu0 %v2863
      %v2865 = vpop.f32.mrb[0].mxu0
      %v2866 = vadd.f32 %v2777, %v2865
      %v2867 = vpop.f32.mrb[0].mxu0
      %2868 = vdwg.mxu0
      %2869 = vmatprep.subr.mxu0 0.0
      %v2870 = vand.u32 %v2761, 4294901760
      %v2871 = vsub.f32 %v2761, %v2870
      %v2872 = vand.u32 %v2871, 4294901760
      %v2873 = vsub.f32 %v2871, %v2872
      %v2874 = vand.u32 %v2873, 4294901760
      %2875 = vmatpush1.msra.mxu0 %v2874
      %2876 = vmatprep.subr.mxu0 0.0
      %v2877 = vand.u32 %v2762, 4294901760
      %v2878 = vsub.f32 %v2762, %v2877
      %v2879 = vand.u32 %v2878, 4294901760
      %v2880 = vsub.f32 %v2878, %v2879
      %v2881 = vand.u32 %v2880, 4294901760
      %2882 = vmatpush1.msra.mxu0 %v2881
      %2883 = vmatprep.subr.mxu0 0.0
      %v2884 = vand.u32 %v2763, 4294901760
      %v2885 = vsub.f32 %v2763, %v2884
      %v2886 = vand.u32 %v2885, 4294901760
      %v2887 = vsub.f32 %v2885, %v2886
      %v2888 = vand.u32 %v2887, 4294901760
      %2889 = vmatpush1.msra.mxu0 %v2888
      %2890 = vmatprep.subr.mxu0 0.0
      %v2891 = vand.u32 %v2764, 4294901760
      %v2892 = vsub.f32 %v2764, %v2891
      %v2893 = vand.u32 %v2892, 4294901760
      %v2894 = vsub.f32 %v2892, %v2893
      %v2895 = vand.u32 %v2894, 4294901760
      %2896 = vmatpush1.msra.mxu0 %v2895
      %2897 = vmatprep.subr.mxu0 0.0
      %v2898 = vand.u32 %v2765, 4294901760
      %v2899 = vsub.f32 %v2765, %v2898
      %v2900 = vand.u32 %v2899, 4294901760
      %v2901 = vsub.f32 %v2899, %v2900
      %v2902 = vand.u32 %v2901, 4294901760
      %2903 = vmatpush1.msra.mxu0 %v2902
      %2904 = vmatprep.subr.mxu0 0.0
      %v2905 = vand.u32 %v2766, 4294901760
      %v2906 = vsub.f32 %v2766, %v2905
      %v2907 = vand.u32 %v2906, 4294901760
      %v2908 = vsub.f32 %v2906, %v2907
      %v2909 = vand.u32 %v2908, 4294901760
      %2910 = vmatpush1.msra.mxu0 %v2909
      %2911 = vmatprep.subr.mxu0 0.0
      %v2912 = vand.u32 %v2767, 4294901760
      %v2913 = vsub.f32 %v2767, %v2912
      %v2914 = vand.u32 %v2913, 4294901760
      %v2915 = vsub.f32 %v2913, %v2914
      %v2916 = vand.u32 %v2915, 4294901760
      %2917 = vmatpush1.msra.mxu0 %v2916
      %2918 = vmatprep.subr.mxu0 0.0
      %v2919 = vand.u32 %v2768, 4294901760
      %v2920 = vsub.f32 %v2768, %v2919
      %v2921 = vand.u32 %v2920, 4294901760
      %v2922 = vsub.f32 %v2920, %v2921
      %v2923 = vand.u32 %v2922, 4294901760
      %2924 = vmatpush1.msra.mxu0 %v2923
      %2925 = vmatprep.subr.mxu0 0.0
      %v2926 = vand.u32 %v2769, 4294901760
      %v2927 = vsub.f32 %v2769, %v2926
      %v2928 = vand.u32 %v2927, 4294901760
      %v2929 = vsub.f32 %v2927, %v2928
      %v2930 = vand.u32 %v2929, 4294901760
      %2931 = vmatpush1.msra.mxu0 %v2930
      %2932 = vmatprep.subr.mxu0 0.0
      %v2933 = vand.u32 %v2770, 4294901760
      %v2934 = vsub.f32 %v2770, %v2933
      %v2935 = vand.u32 %v2934, 4294901760
      %v2936 = vsub.f32 %v2934, %v2935
      %v2937 = vand.u32 %v2936, 4294901760
      %2938 = vmatpush1.msra.mxu0 %v2937
      %2939 = vmatprep.subr.mxu0 0.0
      %v2940 = vand.u32 %v2771, 4294901760
      %v2941 = vsub.f32 %v2771, %v2940
      %v2942 = vand.u32 %v2941, 4294901760
      %v2943 = vsub.f32 %v2941, %v2942
      %v2944 = vand.u32 %v2943, 4294901760
      %2945 = vmatpush1.msra.mxu0 %v2944
      %2946 = vmatprep.subr.mxu0 0.0
      %v2947 = vand.u32 %v2772, 4294901760
      %v2948 = vsub.f32 %v2772, %v2947
      %v2949 = vand.u32 %v2948, 4294901760
      %v2950 = vsub.f32 %v2948, %v2949
      %v2951 = vand.u32 %v2950, 4294901760
      %2952 = vmatpush1.msra.mxu0 %v2951
      %2953 = vmatprep.subr.mxu0 0.0
      %v2954 = vand.u32 %v2773, 4294901760
      %v2955 = vsub.f32 %v2773, %v2954
      %v2956 = vand.u32 %v2955, 4294901760
      %v2957 = vsub.f32 %v2955, %v2956
      %v2958 = vand.u32 %v2957, 4294901760
      %2959 = vmatpush1.msra.mxu0 %v2958
      %2960 = vmatprep.subr.mxu0 0.0
      %v2961 = vand.u32 %v2774, 4294901760
      %v2962 = vsub.f32 %v2774, %v2961
      %v2963 = vand.u32 %v2962, 4294901760
      %v2964 = vsub.f32 %v2962, %v2963
      %v2965 = vand.u32 %v2964, 4294901760
      %2966 = vmatpush1.msra.mxu0 %v2965
      %2967 = vmatprep.subr.mxu0 0.0
      %v2968 = vand.u32 %v2775, 4294901760
      %v2969 = vsub.f32 %v2775, %v2968
      %v2970 = vand.u32 %v2969, 4294901760
      %v2971 = vsub.f32 %v2969, %v2970
      %v2972 = vand.u32 %v2971, 4294901760
      %2973 = vmatpush1.msra.mxu0 %v2972
      %2974 = vmatprep.subr.mxu0 0.0
      %v2975 = vand.u32 %v2776, 4294901760
      %v2976 = vsub.f32 %v2776, %v2975
      %v2977 = vand.u32 %v2976, 4294901760
      %v2978 = vsub.f32 %v2976, %v2977
      %v2979 = vand.u32 %v2978, 4294901760
      %2980 = vmatpush1.msra.mxu0 %v2979
      %2981 = vmatprep.subr.mxu0 0.0
      %2982 = vmatpush1.msra.mxu0 0.0
      %2983 = vmatprep.subr.mxu0 0.0
      %2984 = vmatpush1.msra.mxu0 0.0
      %2985 = vmatprep.subr.mxu0 0.0
      %2986 = vmatpush1.msra.mxu0 0.0
      %2987 = vmatprep.subr.mxu0 0.0
      %2988 = vmatpush1.msra.mxu0 0.0
      %2989 = vmatprep.subr.mxu0 0.0
      %2990 = vmatpush1.msra.mxu0 0.0
      %2991 = vmatprep.subr.mxu0 0.0
      %2992 = vmatpush1.msra.mxu0 0.0
      %2993 = vmatprep.subr.mxu0 0.0
      %2994 = vmatpush1.msra.mxu0 0.0
      %2995 = vmatprep.subr.mxu0 0.0
      %2996 = vmatpush1.msra.mxu0 0.0
      %2997 = vmatprep.subr.mxu0 0.0
      %2998 = vmatpush1.msra.mxu0 0.0
      %2999 = vmatprep.subr.mxu0 0.0
      %3000 = vmatpush1.msra.mxu0 0.0
      %3001 = vmatprep.subr.mxu0 0.0
      %3002 = vmatpush1.msra.mxu0 0.0
      %3003 = vmatprep.subr.mxu0 0.0
      %3004 = vmatpush1.msra.mxu0 0.0
      %3005 = vmatprep.subr.mxu0 0.0
      %3006 = vmatpush1.msra.mxu0 0.0
      %3007 = vmatprep.subr.mxu0 0.0
      %3008 = vmatpush1.msra.mxu0 0.0
      %3009 = vmatprep.subr.mxu0 0.0
      %3010 = vmatpush1.msra.mxu0 0.0
      %3011 = vmatprep.subr.mxu0 0.0
      %3012 = vmatpush1.msra.mxu0 0.0
      %3013 = vmatprep.mubr.f32.mxu0 0.0
      %v3014 = vand.u32 %v2760, 4294901760
      %3015 = vmatmul.mubr.f32.gmra.mrb[0].mxu0 %v3014
      %v3016 = vpop.f32.mrb[0].mxu0
      %v3017 = vadd.f32 %v2866, %v3016
      %v3018 = vpop.f32.mrb[0].mxu0
      %3019 = vdwg.mxu0
      %3020 = vmatprep.subr.mxu0 0.0
      %v3021 = vand.u32 %v2761, 4294901760
      %v3022 = vsub.f32 %v2761, %v3021
      %3023 = vmatpush1.msra.mxu0 %v3022
      %3024 = vmatprep.subr.mxu0 0.0
      %v3025 = vand.u32 %v2762, 4294901760
      %v3026 = vsub.f32 %v2762, %v3025
      %3027 = vmatpush1.msra.mxu0 %v3026
      %3028 = vmatprep.subr.mxu0 0.0
      %v3029 = vand.u32 %v2763, 4294901760
      %v3030 = vsub.f32 %v2763, %v3029
      %3031 = vmatpush1.msra.mxu0 %v3030
      %3032 = vmatprep.subr.mxu0 0.0
      %v3033 = vand.u32 %v2764, 4294901760
      %v3034 = vsub.f32 %v2764, %v3033
      %3035 = vmatpush1.msra.mxu0 %v3034
      %3036 = vmatprep.subr.mxu0 0.0
      %v3037 = vand.u32 %v2765, 4294901760
      %v3038 = vsub.f32 %v2765, %v3037
      %3039 = vmatpush1.msra.mxu0 %v3038
      %3040 = vmatprep.subr.mxu0 0.0
      %v3041 = vand.u32 %v2766, 4294901760
      %v3042 = vsub.f32 %v2766, %v3041
      %3043 = vmatpush1.msra.mxu0 %v3042
      %3044 = vmatprep.subr.mxu0 0.0
      %v3045 = vand.u32 %v2767, 4294901760
      %v3046 = vsub.f32 %v2767, %v3045
      %3047 = vmatpush1.msra.mxu0 %v3046
      %3048 = vmatprep.subr.mxu0 0.0
      %v3049 = vand.u32 %v2768, 4294901760
      %v3050 = vsub.f32 %v2768, %v3049
      %3051 = vmatpush1.msra.mxu0 %v3050
      %3052 = vmatprep.subr.mxu0 0.0
      %v3053 = vand.u32 %v2769, 4294901760
      %v3054 = vsub.f32 %v2769, %v3053
      %3055 = vmatpush1.msra.mxu0 %v3054
      %3056 = vmatprep.subr.mxu0 0.0
      %v3057 = vand.u32 %v2770, 4294901760
      %v3058 = vsub.f32 %v2770, %v3057
      %3059 = vmatpush1.msra.mxu0 %v3058
      %3060 = vmatprep.subr.mxu0 0.0
      %v3061 = vand.u32 %v2771, 4294901760
      %v3062 = vsub.f32 %v2771, %v3061
      %3063 = vmatpush1.msra.mxu0 %v3062
      %3064 = vmatprep.subr.mxu0 0.0
      %v3065 = vand.u32 %v2772, 4294901760
      %v3066 = vsub.f32 %v2772, %v3065
      %3067 = vmatpush1.msra.mxu0 %v3066
      %3068 = vmatprep.subr.mxu0 0.0
      %v3069 = vand.u32 %v2773, 4294901760
      %v3070 = vsub.f32 %v2773, %v3069
      %3071 = vmatpush1.msra.mxu0 %v3070
      %3072 = vmatprep.subr.mxu0 0.0
      %v3073 = vand.u32 %v2774, 4294901760
      %v3074 = vsub.f32 %v2774, %v3073
      %3075 = vmatpush1.msra.mxu0 %v3074
      %3076 = vmatprep.subr.mxu0 0.0
      %v3077 = vand.u32 %v2775, 4294901760
      %v3078 = vsub.f32 %v2775, %v3077
      %3079 = vmatpush1.msra.mxu0 %v3078
      %3080 = vmatprep.subr.mxu0 0.0
      %v3081 = vand.u32 %v2776, 4294901760
      %v3082 = vsub.f32 %v2776, %v3081
      %3083 = vmatpush1.msra.mxu0 %v3082
      %3084 = vmatprep.subr.mxu0 0.0
      %3085 = vmatpush1.msra.mxu0 0.0
      %3086 = vmatprep.subr.mxu0 0.0
      %3087 = vmatpush1.msra.mxu0 0.0
      %3088 = vmatprep.subr.mxu0 0.0
      %3089 = vmatpush1.msra.mxu0 0.0
      %3090 = vmatprep.subr.mxu0 0.0
      %3091 = vmatpush1.msra.mxu0 0.0
      %3092 = vmatprep.subr.mxu0 0.0
      %3093 = vmatpush1.msra.mxu0 0.0
      %3094 = vmatprep.subr.mxu0 0.0
      %3095 = vmatpush1.msra.mxu0 0.0
      %3096 = vmatprep.subr.mxu0 0.0
      %3097 = vmatpush1.msra.mxu0 0.0
      %3098 = vmatprep.subr.mxu0 0.0
      %3099 = vmatpush1.msra.mxu0 0.0
      %3100 = vmatprep.subr.mxu0 0.0
      %3101 = vmatpush1.msra.mxu0 0.0
      %3102 = vmatprep.subr.mxu0 0.0
      %3103 = vmatpush1.msra.mxu0 0.0
      %3104 = vmatprep.subr.mxu0 0.0
      %3105 = vmatpush1.msra.mxu0 0.0
      %3106 = vmatprep.subr.mxu0 0.0
      %3107 = vmatpush1.msra.mxu0 0.0
      %3108 = vmatprep.subr.mxu0 0.0
      %3109 = vmatpush1.msra.mxu0 0.0
      %3110 = vmatprep.subr.mxu0 0.0
      %3111 = vmatpush1.msra.mxu0 0.0
      %3112 = vmatprep.subr.mxu0 0.0
      %3113 = vmatpush1.msra.mxu0 0.0
      %3114 = vmatprep.subr.mxu0 0.0
      %3115 = vmatpush1.msra.mxu0 0.0
      %3116 = vmatprep.mubr.f32.mxu0 0.0
      %v3117 = vand.u32 %v2760, 4294901760
      %v3118 = vsub.f32 %v2760, %v3117
      %3119 = vmatmul.mubr.f32.gmra.mrb[0].mxu0 %v3118
      %v3120 = vpop.f32.mrb[0].mxu0
      %v3121 = vadd.f32 %v3017, %v3120
      %v3122 = vpop.f32.mrb[0].mxu0
      %3123 = vdwg.mxu0
      %3124 = vmatprep.subr.mxu0 0.0
      %v3125 = vand.u32 %v2761, 4294901760
      %3126 = vmatpush1.msra.mxu0 %v3125
      %3127 = vmatprep.subr.mxu0 0.0
      %v3128 = vand.u32 %v2762, 4294901760
      %3129 = vmatpush1.msra.mxu0 %v3128
      %3130 = vmatprep.subr.mxu0 0.0
      %v3131 = vand.u32 %v2763, 4294901760
      %3132 = vmatpush1.msra.mxu0 %v3131
      %3133 = vmatprep.subr.mxu0 0.0
      %v3134 = vand.u32 %v2764, 4294901760
      %3135 = vmatpush1.msra.mxu0 %v3134
      %3136 = vmatprep.subr.mxu0 0.0
      %v3137 = vand.u32 %v2765, 4294901760
      %3138 = vmatpush1.msra.mxu0 %v3137
      %3139 = vmatprep.subr.mxu0 0.0
      %v3140 = vand.u32 %v2766, 4294901760
      %3141 = vmatpush1.msra.mxu0 %v3140
      %3142 = vmatprep.subr.mxu0 0.0
      %v3143 = vand.u32 %v2767, 4294901760
      %3144 = vmatpush1.msra.mxu0 %v3143
      %3145 = vmatprep.subr.mxu0 0.0
      %v3146 = vand.u32 %v2768, 4294901760
      %3147 = vmatpush1.msra.mxu0 %v3146
      %3148 = vmatprep.subr.mxu0 0.0
      %v3149 = vand.u32 %v2769, 4294901760
      %3150 = vmatpush1.msra.mxu0 %v3149
      %3151 = vmatprep.subr.mxu0 0.0
      %v3152 = vand.u32 %v2770, 4294901760
      %3153 = vmatpush1.msra.mxu0 %v3152
      %3154 = vmatprep.subr.mxu0 0.0
      %v3155 = vand.u32 %v2771, 4294901760
      %3156 = vmatpush1.msra.mxu0 %v3155
      %3157 = vmatprep.subr.mxu0 0.0
      %v3158 = vand.u32 %v2772, 4294901760
      %3159 = vmatpush1.msra.mxu0 %v3158
      %3160 = vmatprep.subr.mxu0 0.0
      %v3161 = vand.u32 %v2773, 4294901760
      %3162 = vmatpush1.msra.mxu0 %v3161
      %3163 = vmatprep.subr.mxu0 0.0
      %v3164 = vand.u32 %v2774, 4294901760
      %3165 = vmatpush1.msra.mxu0 %v3164
      %3166 = vmatprep.subr.mxu0 0.0
      %v3167 = vand.u32 %v2775, 4294901760
      %3168 = vmatpush1.msra.mxu0 %v3167
      %3169 = vmatprep.subr.mxu0 0.0
      %v3170 = vand.u32 %v2776, 4294901760
      %3171 = vmatpush1.msra.mxu0 %v3170
      %3172 = vmatprep.subr.mxu0 0.0
      %3173 = vmatpush1.msra.mxu0 0.0
      %3174 = vmatprep.subr.mxu0 0.0
      %3175 = vmatpush1.msra.mxu0 0.0
      %3176 = vmatprep.subr.mxu0 0.0
      %3177 = vmatpush1.msra.mxu0 0.0
      %3178 = vmatprep.subr.mxu0 0.0
      %3179 = vmatpush1.msra.mxu0 0.0
      %3180 = vmatprep.subr.mxu0 0.0
      %3181 = vmatpush1.msra.mxu0 0.0
      %3182 = vmatprep.subr.mxu0 0.0
      %3183 = vmatpush1.msra.mxu0 0.0
      %3184 = vmatprep.subr.mxu0 0.0
      %3185 = vmatpush1.msra.mxu0 0.0
      %3186 = vmatprep.subr.mxu0 0.0
      %3187 = vmatpush1.msra.mxu0 0.0
      %3188 = vmatprep.subr.mxu0 0.0
      %3189 = vmatpush1.msra.mxu0 0.0
      %3190 = vmatprep.subr.mxu0 0.0
      %3191 = vmatpush1.msra.mxu0 0.0
      %3192 = vmatprep.subr.mxu0 0.0
      %3193 = vmatpush1.msra.mxu0 0.0
      %3194 = vmatprep.subr.mxu0 0.0
      %3195 = vmatpush1.msra.mxu0 0.0
      %3196 = vmatprep.subr.mxu0 0.0
      %3197 = vmatpush1.msra.mxu0 0.0
      %3198 = vmatprep.subr.mxu0 0.0
      %3199 = vmatpush1.msra.mxu0 0.0
      %3200 = vmatprep.subr.mxu0 0.0
      %3201 = vmatpush1.msra.mxu0 0.0
      %3202 = vmatprep.subr.mxu0 0.0
      %3203 = vmatpush1.msra.mxu0 0.0
      %3204 = vmatprep.mubr.f32.mxu0 0.0
      %v3205 = vand.u32 %v2760, 4294901760
      %v3206 = vsub.f32 %v2760, %v3205
      %v3207 = vand.u32 %v3206, 4294901760
      %3208 = vmatmul.mubr.f32.gmra.mrb[0].mxu0 %v3207
      %v3209 = vpop.f32.mrb[0].mxu0
      %v3210 = vadd.f32 %v3121, %v3209
      %v3211 = vpop.f32.mrb[0].mxu0
      %3212 = vdwg.mxu0
      %3213 = vmatprep.subr.mxu0 0.0
      %v3214 = vand.u32 %v2761, 4294901760
      %v3215 = vsub.f32 %v2761, %v3214
      %v3216 = vand.u32 %v3215, 4294901760
      %3217 = vmatpush1.msra.mxu0 %v3216
      %3218 = vmatprep.subr.mxu0 0.0
      %v3219 = vand.u32 %v2762, 4294901760
      %v3220 = vsub.f32 %v2762, %v3219
      %v3221 = vand.u32 %v3220, 4294901760
      %3222 = vmatpush1.msra.mxu0 %v3221
      %3223 = vmatprep.subr.mxu0 0.0
      %v3224 = vand.u32 %v2763, 4294901760
      %v3225 = vsub.f32 %v2763, %v3224
      %v3226 = vand.u32 %v3225, 4294901760
      %3227 = vmatpush1.msra.mxu0 %v3226
      %3228 = vmatprep.subr.mxu0 0.0
      %v3229 = vand.u32 %v2764, 4294901760
      %v3230 = vsub.f32 %v2764, %v3229
      %v3231 = vand.u32 %v3230, 4294901760
      %3232 = vmatpush1.msra.mxu0 %v3231
      %3233 = vmatprep.subr.mxu0 0.0
      %v3234 = vand.u32 %v2765, 4294901760
      %v3235 = vsub.f32 %v2765, %v3234
      %v3236 = vand.u32 %v3235, 4294901760
      %3237 = vmatpush1.msra.mxu0 %v3236
      %3238 = vmatprep.subr.mxu0 0.0
      %v3239 = vand.u32 %v2766, 4294901760
      %v3240 = vsub.f32 %v2766, %v3239
      %v3241 = vand.u32 %v3240, 4294901760
      %3242 = vmatpush1.msra.mxu0 %v3241
      %3243 = vmatprep.subr.mxu0 0.0
      %v3244 = vand.u32 %v2767, 4294901760
      %v3245 = vsub.f32 %v2767, %v3244
      %v3246 = vand.u32 %v3245, 4294901760
      %3247 = vmatpush1.msra.mxu0 %v3246
      %3248 = vmatprep.subr.mxu0 0.0
      %v3249 = vand.u32 %v2768, 4294901760
      %v3250 = vsub.f32 %v2768, %v3249
      %v3251 = vand.u32 %v3250, 4294901760
      %3252 = vmatpush1.msra.mxu0 %v3251
      %3253 = vmatprep.subr.mxu0 0.0
      %v3254 = vand.u32 %v2769, 4294901760
      %v3255 = vsub.f32 %v2769, %v3254
      %v3256 = vand.u32 %v3255, 4294901760
      %3257 = vmatpush1.msra.mxu0 %v3256
      %3258 = vmatprep.subr.mxu0 0.0
      %v3259 = vand.u32 %v2770, 4294901760
      %v3260 = vsub.f32 %v2770, %v3259
      %v3261 = vand.u32 %v3260, 4294901760
      %3262 = vmatpush1.msra.mxu0 %v3261
      %3263 = vmatprep.subr.mxu0 0.0
      %v3264 = vand.u32 %v2771, 4294901760
      %v3265 = vsub.f32 %v2771, %v3264
      %v3266 = vand.u32 %v3265, 4294901760
      %3267 = vmatpush1.msra.mxu0 %v3266
      %3268 = vmatprep.subr.mxu0 0.0
      %v3269 = vand.u32 %v2772, 4294901760
      %v3270 = vsub.f32 %v2772, %v3269
      %v3271 = vand.u32 %v3270, 4294901760
      %3272 = vmatpush1.msra.mxu0 %v3271
      %3273 = vmatprep.subr.mxu0 0.0
      %v3274 = vand.u32 %v2773, 4294901760
      %v3275 = vsub.f32 %v2773, %v3274
      %v3276 = vand.u32 %v3275, 4294901760
      %3277 = vmatpush1.msra.mxu0 %v3276
      %3278 = vmatprep.subr.mxu0 0.0
      %v3279 = vand.u32 %v2774, 4294901760
      %v3280 = vsub.f32 %v2774, %v3279
      %v3281 = vand.u32 %v3280, 4294901760
      %3282 = vmatpush1.msra.mxu0 %v3281
      %3283 = vmatprep.subr.mxu0 0.0
      %v3284 = vand.u32 %v2775, 4294901760
      %v3285 = vsub.f32 %v2775, %v3284
      %v3286 = vand.u32 %v3285, 4294901760
      %3287 = vmatpush1.msra.mxu0 %v3286
      %3288 = vmatprep.subr.mxu0 0.0
      %v3289 = vand.u32 %v2776, 4294901760
      %v3290 = vsub.f32 %v2776, %v3289
      %v3291 = vand.u32 %v3290, 4294901760
      %3292 = vmatpush1.msra.mxu0 %v3291
      %3293 = vmatprep.subr.mxu0 0.0
      %3294 = vmatpush1.msra.mxu0 0.0
      %3295 = vmatprep.subr.mxu0 0.0
      %3296 = vmatpush1.msra.mxu0 0.0
      %3297 = vmatprep.subr.mxu0 0.0
      %3298 = vmatpush1.msra.mxu0 0.0
      %3299 = vmatprep.subr.mxu0 0.0
      %3300 = vmatpush1.msra.mxu0 0.0
      %3301 = vmatprep.subr.mxu0 0.0
      %3302 = vmatpush1.msra.mxu0 0.0
      %3303 = vmatprep.subr.mxu0 0.0
      %3304 = vmatpush1.msra.mxu0 0.0
      %3305 = vmatprep.subr.mxu0 0.0
      %3306 = vmatpush1.msra.mxu0 0.0
      %3307 = vmatprep.subr.mxu0 0.0
      %3308 = vmatpush1.msra.mxu0 0.0
      %3309 = vmatprep.subr.mxu0 0.0
      %3310 = vmatpush1.msra.mxu0 0.0
      %3311 = vmatprep.subr.mxu0 0.0
      %3312 = vmatpush1.msra.mxu0 0.0
      %3313 = vmatprep.subr.mxu0 0.0
      %3314 = vmatpush1.msra.mxu0 0.0
      %3315 = vmatprep.subr.mxu0 0.0
      %3316 = vmatpush1.msra.mxu0 0.0
      %3317 = vmatprep.subr.mxu0 0.0
      %3318 = vmatpush1.msra.mxu0 0.0
      %3319 = vmatprep.subr.mxu0 0.0
      %3320 = vmatpush1.msra.mxu0 0.0
      %3321 = vmatprep.subr.mxu0 0.0
      %3322 = vmatpush1.msra.mxu0 0.0
      %3323 = vmatprep.subr.mxu0 0.0
      %3324 = vmatpush1.msra.mxu0 0.0
      %3325 = vmatprep.mubr.f32.mxu0 0.0
      %v3326 = vand.u32 %v2760, 4294901760
      %3327 = vmatmul.mubr.f32.gmra.mrb[0].mxu0 %v3326
      %v3328 = vpop.f32.mrb[0].mxu0
      %v3329 = vadd.f32 %v3210, %v3328
      %v3330 = vpop.f32.mrb[0].mxu0
      %3331 = vdwg.mxu0
      %3332 = vmatprep.subr.mxu0 0.0
      %v3333 = vand.u32 %v2761, 4294901760
      %3334 = vmatpush1.msra.mxu0 %v3333
      %3335 = vmatprep.subr.mxu0 0.0
      %v3336 = vand.u32 %v2762, 4294901760
      %3337 = vmatpush1.msra.mxu0 %v3336
      %3338 = vmatprep.subr.mxu0 0.0
      %v3339 = vand.u32 %v2763, 4294901760
      %3340 = vmatpush1.msra.mxu0 %v3339
      %3341 = vmatprep.subr.mxu0 0.0
      %v3342 = vand.u32 %v2764, 4294901760
      %3343 = vmatpush1.msra.mxu0 %v3342
      %3344 = vmatprep.subr.mxu0 0.0
      %v3345 = vand.u32 %v2765, 4294901760
      %3346 = vmatpush1.msra.mxu0 %v3345
      %3347 = vmatprep.subr.mxu0 0.0
      %v3348 = vand.u32 %v2766, 4294901760
      %3349 = vmatpush1.msra.mxu0 %v3348
      %3350 = vmatprep.subr.mxu0 0.0
      %v3351 = vand.u32 %v2767, 4294901760
      %3352 = vmatpush1.msra.mxu0 %v3351
      %3353 = vmatprep.subr.mxu0 0.0
      %v3354 = vand.u32 %v2768, 4294901760
      %3355 = vmatpush1.msra.mxu0 %v3354
      %3356 = vmatprep.subr.mxu0 0.0
      %v3357 = vand.u32 %v2769, 4294901760
      %3358 = vmatpush1.msra.mxu0 %v3357
      %3359 = vmatprep.subr.mxu0 0.0
      %v3360 = vand.u32 %v2770, 4294901760
      %3361 = vmatpush1.msra.mxu0 %v3360
      %3362 = vmatprep.subr.mxu0 0.0
      %v3363 = vand.u32 %v2771, 4294901760
      %3364 = vmatpush1.msra.mxu0 %v3363
      %3365 = vmatprep.subr.mxu0 0.0
      %v3366 = vand.u32 %v2772, 4294901760
      %3367 = vmatpush1.msra.mxu0 %v3366
      %3368 = vmatprep.subr.mxu0 0.0
      %v3369 = vand.u32 %v2773, 4294901760
      %3370 = vmatpush1.msra.mxu0 %v3369
      %3371 = vmatprep.subr.mxu0 0.0
      %v3372 = vand.u32 %v2774, 4294901760
      %3373 = vmatpush1.msra.mxu0 %v3372
      %3374 = vmatprep.subr.mxu0 0.0
      %v3375 = vand.u32 %v2775, 4294901760
      %3376 = vmatpush1.msra.mxu0 %v3375
      %3377 = vmatprep.subr.mxu0 0.0
      %v3378 = vand.u32 %v2776, 4294901760
      %3379 = vmatpush1.msra.mxu0 %v3378
      %3380 = vmatprep.subr.mxu0 0.0
      %3381 = vmatpush1.msra.mxu0 0.0
      %3382 = vmatprep.subr.mxu0 0.0
      %3383 = vmatpush1.msra.mxu0 0.0
      %3384 = vmatprep.subr.mxu0 0.0
      %3385 = vmatpush1.msra.mxu0 0.0
      %3386 = vmatprep.subr.mxu0 0.0
      %3387 = vmatpush1.msra.mxu0 0.0
      %3388 = vmatprep.subr.mxu0 0.0
      %3389 = vmatpush1.msra.mxu0 0.0
      %3390 = vmatprep.subr.mxu0 0.0
      %3391 = vmatpush1.msra.mxu0 0.0
      %3392 = vmatprep.subr.mxu0 0.0
      %3393 = vmatpush1.msra.mxu0 0.0
      %3394 = vmatprep.subr.mxu0 0.0
      %3395 = vmatpush1.msra.mxu0 0.0
      %3396 = vmatprep.subr.mxu0 0.0
      %3397 = vmatpush1.msra.mxu0 0.0
      %3398 = vmatprep.subr.mxu0 0.0
      %3399 = vmatpush1.msra.mxu0 0.0
      %3400 = vmatprep.subr.mxu0 0.0
      %3401 = vmatpush1.msra.mxu0 0.0
      %3402 = vmatprep.subr.mxu0 0.0
      %3403 = vmatpush1.msra.mxu0 0.0
      %3404 = vmatprep.subr.mxu0 0.0
      %3405 = vmatpush1.msra.mxu0 0.0
      %3406 = vmatprep.subr.mxu0 0.0
      %3407 = vmatpush1.msra.mxu0 0.0
      %3408 = vmatprep.subr.mxu0 0.0
      %3409 = vmatpush1.msra.mxu0 0.0
      %3410 = vmatprep.subr.mxu0 0.0
      %3411 = vmatpush1.msra.mxu0 0.0
      %3412 = vmatprep.mubr.f32.mxu0 0.0
      %v3413 = vand.u32 %v2760, 4294901760
      %3414 = vmatmul.mubr.f32.gmra.mrb[0].mxu0 %v3413
      %v3415 = vpop.f32.mrb[0].mxu0
      %v3416 = vadd.f32 %v3329, %v3415
      %v3417 = vpop.f32.mrb[0].mxu0
      %3418 = vdwg.mxu0
      %vm3419 = vcmp.lt.s32.totalorder %v148, 4
      %v3420 = vsel %vm3419, %v3416, -1e+30
      %vm3421 = vcmask 1040384
      %v3422 = vsel %vm3421, %v3420, -inf
      %3423 = vmax.xlane.f32.xlu0 %v3422
      %v3424 = vpop.xlane.xlu0 %3423
      %v3425 = vsub.f32 %v3420, %v3424
      %v3426 = vmul.f32 %v3425, 1.442695
      %v3427 = vpow.pop %v3426
      %v3428 = vsel %vm3421, %v3427, 0.0
      %3429 = vadd.xlane.f32.xlu0 %v3428
      %v3430 = vpop.xlane.xlu0 %3429
      %v3431 = vlog2.pop %v3430
      %v3432 = vmul.f32 %v3431, 0.6931472
      %v3433 = vadd.f32 %v3424, %v3432
      %s3434 = sld [smem:[#allocation3 + %s20]]
      %v3435 = vstv %s3434
      %vm3436 = vcmp.eq.s32.totalorder %v148, %v3435
      %v3437 = vsel %vm3436, %v3416, 0.0
      %v3438 = vsel %vm3421, %v3437, 0.0
      %3439 = vadd.xlane.f32.xlu0 %v3438
      %v3440 = vpop.xlane.xlu0 %3439
      %v3441 = vsub.f32 %v3433, %v3440
      %vm3442 = vcmp.eq.s32.totalorder %v148, 4
      %v3443 = vsel %vm3442, %v3441, %v3416
      %3444 = vst [vmem:[%s146] sm:$0x1] %v3443
      %p3445 = scmp.lt.s32.totalorder %s20, 1
      %s3446 = scalar_select %p3445, %s20, 1
      %s3447 = scalar_lea.vmem %s3, %s3446
      // Predicated region
      $region29: #{cnn_forward.1} parent=27 // pred_check
        %p3448 = pneg %p85
      $region30: #{cnn_forward.1} parent=27 // pred_check_branch
        %3450 = sbr.rel (%p3448) target = $region32
      $region31: #{cnn_forward.1} parent=27 // pred_region
        _
      $region32: #{cnn_forward.1} parent=27 // pred_fallthru
        _
    $region28: #{cnn_forward.1} parent=5 // pred_fallthru
      _
    %p3451 = scmp.le.s32.totalorder 2, %s15
    // Predicated region
    $region33: #{cnn_forward.1} parent=5 // pred_check
      %p3452 = pneg %p3451
    $region34: #{cnn_forward.1} parent=5 // pred_check_branch
      %3454 = sbr.rel (%p3452) target = $region36
    $region35: #{cnn_forward.1} parent=5 // pred_region
      %s3455 = ssub.s32 %s15, 2
      // Predicated region
      $region37: #{cnn_forward.1} parent=35 // pred_check
        %p3456 = pneg %p91
      $region38: #{cnn_forward.1} parent=35 // pred_check_branch
        %3458 = sbr.rel (%p3456) target = $region40
      $region39: #{cnn_forward.1} parent=35 // pred_region
        %p3459 = scmp.lt.s32.totalorder %s21, 1
        %s3460 = scalar_select %p3459, %s21, 1
        %s3461 = scalar_lea.vmem %s3, %s3460
      $region40: #{cnn_forward.1} parent=35 // pred_fallthru
        _
    $region36: #{cnn_forward.1} parent=5 // pred_fallthru
      _
  $region6: #{cnn_forward.1} parent=0 // loop_footer
    %s19 = sadd.s32 1, %s15
  $region7: #{cnn_forward.1} parent=0 // loop_footer_branch
    %14 = sbr.rel target = $region3
  $region8: #{cnn_forward.1} parent=0 // loop_exit
    _

</llo_original>
